<compile_context>
chip_gen: v6e
topology: v6e:2x2x1
jax: 0.10.0
libtpu: 0.0.40
codegen_flags: <defaults>
</compile_context>

<pallas_src>
import functools
import math

import jax
import jax.numpy as jnp
from jax.experimental import pallas as pl
from jax.experimental.pallas import tpu as pltpu


# ----------------------------- Pallas kernel ---------------------------------


def _crf_kernel(i_blk_ref, j_blk_ref, valid_ref, a_ref, bT_ref,
                cat_i_ref, cat_j_ref, out_ref, *, K, max_pairs):
    """One upper-triangular (i-block, j-block) pair of the dense-CRF bilinear form.

    out_ref is the (tile, K) partial-sum slab for pixel block i of batch n; it stays
    resident in VMEM for the whole run of pairs sharing i on this core.
    """
    c = pl.program_id(0)           # core-split axis (v7x megacore)
    p = pl.program_id(2)           # pair axis within this split
    idx = c * max_pairs + p
    i_blk = i_blk_ref[idx]
    j_blk = j_blk_ref[idx]
    valid = valid_ref[idx] != 0

    # First (valid) pair of every i-block is its diagonal (i, i): zero the accumulator.
    @pl.when(valid & (i_blk == j_blk))
    def _():
        out_ref[...] = jnp.zeros_like(out_ref)

    @pl.when(valid)
    def _():
        # Gaussian bilateral tile via a single f32 MXU matmul on augmented features:
        #   a_i . b_j = f_i.f_j - 0.5||f_i||^2 - 0.5||f_j||^2 = -0.5 ||f_i - f_j||^2
        # (must stay f32; recovered by cancellation of large norm terms).
        arg = jnp.dot(a_ref[...], bT_ref[...], preferred_element_type=jnp.float32)
        w = jnp.exp(jnp.minimum(arg, 0.0))                       # (TI, TJ), EUP exp
        # TODO(synk): bf16 exp on v6e/v7x if profiling shows EUP-bound (keep f32 on v5e).

        # Both orientations fused into ONE bf16 MXU matmul: cat = [log1S | logS].
        t = jnp.dot(w.astype(jnp.bfloat16),
                    cat_j_ref[...].astype(jnp.bfloat16),
                    preferred_element_type=jnp.float32)          # (TI, 2K)

        cat_i = cat_i_ref[...]                                   # f32 epilogue operands
        log1S_i = cat_i[:, :K]
        logS_i = cat_i[:, K:]
        # Off-diagonal pairs also add the mirrored orientation (W is symmetric):
        #   C(j,i) = sum( log1S_i * (W @ logS_j) ).  `off` zeroes it on the diagonal.
        off = (i_blk != j_blk).astype(jnp.float32)
        out_ref[...] += logS_i * t[:, :K] + off * (log1S_i * t[:, K:])


# --------------------------- JAX glue (resize etc.) ---------------------------


def _nearest_resize_hw(x, out_h, out_w):
    """PyTorch F.interpolate(mode='nearest') over the last two dims."""
    in_h, in_w = x.shape[-2], x.shape[-1]
    hi = jnp.minimum(jnp.floor(jnp.arange(out_h) * (in_h / out_h)), in_h - 1).astype(jnp.int32)
    wi = jnp.minimum(jnp.floor(jnp.arange(out_w) * (in_w / out_w)), in_w - 1).astype(jnp.int32)
    x = jnp.take(x, hi, axis=-2)
    x = jnp.take(x, wi, axis=-1)
    return x


def _bilinear_resize_hw(x, out_h, out_w):
    """PyTorch F.interpolate(mode='bilinear', align_corners=False) over last two dims."""
    in_h, in_w = x.shape[-2], x.shape[-1]

    def idx_weights(out_size, in_size):
        scale = in_size / out_size
        src = jnp.maximum(scale * (jnp.arange(out_size, dtype=jnp.float32) + 0.5) - 0.5, 0.0)
        i0 = jnp.minimum(jnp.floor(src).astype(jnp.int32), in_size - 1)
        i1 = jnp.minimum(i0 + 1, in_size - 1)
        l1 = src - i0.astype(jnp.float32)
        return i0, i1, l1

    h0, h1, lh = idx_weights(out_h, in_h)
    w0, w1, lw = idx_weights(out_w, in_w)
    lh = lh.reshape((-1, 1))
    xh = jnp.take(x, h0, axis=-2) * (1.0 - lh) + jnp.take(x, h1, axis=-2) * lh
    out = jnp.take(xh, w0, axis=-1) * (1.0 - lw) + jnp.take(xh, w1, axis=-1) * lw
    return out


def _preprocess(images, logS, log1_S, ROIs, sigma_rgb, sigma_xy, scale_factor):
    """Scale, ROI-mask and flatten. Returns feat (N,P,F), logS_m (N,P,K), log1S_m (N,P,K)."""
    N, K, H, W = logS.shape
    C = images.shape[1]
    Hs = int(math.floor(H * scale_factor))
    Ws = int(math.floor(W * scale_factor))
    P = Hs * Ws
    sigma_xy_eff = sigma_xy * scale_factor

    img_s = _nearest_resize_hw(images.astype(jnp.float32), Hs, Ws)        # (N,C,Hs,Ws)
    logS_s = _bilinear_resize_hw(logS.astype(jnp.float32), Hs, Ws)        # (N,K,Hs,Ws)
    log1S_s = _bilinear_resize_hw(log1_S.astype(jnp.float32), Hs, Ws)     # (N,K,Hs,Ws)
    roi_s = _nearest_resize_hw(ROIs.astype(jnp.float32), Hs, Ws)          # (N,Hs,Ws)

    # where() instead of bare multiply so 0 * (-inf) cannot produce NaN in masked rows.
    roi_b = roi_s[:, None, :, :]
    logS_mk = jnp.where(roi_b > 0, logS_s * roi_b, 0.0)
    log1S_mk = jnp.where(roi_b > 0, log1S_s * roi_b, 0.0)
    logS_m = logS_mk.reshape(N, K, P).transpose(0, 2, 1)                  # (N,P,K) pixel-major
    log1S_m = log1S_mk.reshape(N, K, P).transpose(0, 2, 1)                # (N,P,K) pixel-major

    yy, xx = jnp.meshgrid(jnp.arange(Hs, dtype=jnp.float32),
                          jnp.arange(Ws, dtype=jnp.float32), indexing="ij")
    xy = jnp.stack([xx.reshape(-1), yy.reshape(-1)], axis=-1) / sigma_xy_eff   # (P,2)
    rgb = img_s.transpose(0, 2, 3, 1).reshape(N, P, C) / sigma_rgb             # (N,P,C)
    feat = jnp.concatenate([jnp.broadcast_to(xy[None], (N, P, 2)), rgb], axis=-1)
    return feat.astype(jnp.float32), logS_m.astype(jnp.float32), log1S_m.astype(jnp.float32)


def _augment_features(feat):
    """a_i=[f_i,1,-0.5||f_i||^2], b_j=[f_j,-0.5||f_j||^2,1], zero-padded to 8n columns."""
    N, P, F = feat.shape
    sq = -0.5 * jnp.sum(feat * feat, axis=-1, keepdims=True)      # (N,P,1)
    ones = jnp.ones((N, P, 1), jnp.float32)
    a = jnp.concatenate([feat, ones, sq], axis=-1)                # (N,P,F+2)
    b = jnp.concatenate([feat, sq, ones], axis=-1)                # (N,P,F+2)
    Fa = F + 2
    Fp = ((Fa + 7) // 8) * 8
    if Fp > Fa:
        a = jnp.pad(a, ((0, 0), (0, 0), (0, Fp - Fa)))
        b = jnp.pad(b, ((0, 0), (0, 0), (0, Fp - Fa)))
    return a, b


def dense_crf_loss(images, logS, log1_S, ROIs, *, weight, sigma_rgb, sigma_xy,
                   scale_factor, tile=512, vmem_limit_bytes=None):
    """Forward pass of DenseCRFLoss. `tile` is the pixel tile (multiple of 128; 256-1024)."""
    assert tile % 128 == 0
    N, K = logS.shape[0], logS.shape[1]
    feat, logS_m, log1S_m = _preprocess(images, logS, log1_S, ROIs,
                                        sigma_rgb, sigma_xy, scale_factor)
    a, b = _augment_features(feat)                                # (N,P,Fp)
    P = feat.shape[1]
    Pp = ((P + tile - 1) // tile) * tile
    pad = Pp - P
    # Both orientations' RHS in one array: cat = [log1S | logS] along the class axis.
    cat = jnp.concatenate([log1S_m, logS_m], axis=-1)             # (N,P,2K)
    if pad:
        # Padded pixels contribute 0: their masked logS / log1_S rows are zero.
        a = jnp.pad(a, ((0, 0), (0, pad), (0, 0)))
        b = jnp.pad(b, ((0, 0), (0, pad), (0, 0)))
        cat = jnp.pad(cat, ((0, 0), (0, pad), (0, 0)))
    bT = b.transpose(0, 2, 1)                                     # (N, Fp, Pp)
    Fp = a.shape[-1]

    # ---- triangular tile-pair enumeration, balanced over (up to) 2 core splits ----
    num_i = Pp // tile
    num_splits = min(2, num_i)          # v7x has 2 TCs; runs serially on v5e/v6e.
    loads = [0] * num_splits
    split_iblocks = [[] for _ in range(num_splits)]
    for i in range(num_i):              # greedy balance by row length (num_i - i)
        c = min(range(num_splits), key=lambda s: loads[s])
        split_iblocks[c].append(i)
        loads[c] += num_i - i
    split_pairs = [[(i, j) for i in blocks for j in range(i, num_i)]
                   for blocks in split_iblocks]
    max_pairs = max(len(ps) for ps in split_pairs)
    i_list, j_list, v_list = [], [], []
    for ps in split_pairs:
        pad_i = ps[-1][0]               # padding steps revisit this split's last i-block
        for q in range(max_pairs):
            if q < len(ps):
                i_list.append(ps[q][0]); j_list.append(ps[q][1]); v_list.append(1)
            else:
                i_list.append(pad_i); j_list.append(pad_i); v_list.append(0)
    i_blk = jnp.asarray(i_list, jnp.int32)
    j_blk = jnp.asarray(j_list, jnp.int32)
    valid = jnp.asarray(v_list, jnp.int32)

    def i_map(c, n, p, ib, jb, vd):
        return (n, ib[c * max_pairs + p], 0)

    def j_map_bT(c, n, p, ib, jb, vd):
        return (n, 0, jb[c * max_pairs + p])

    def j_map(c, n, p, ib, jb, vd):
        return (n, jb[c * max_pairs + p], 0)

    grid_spec = pltpu.PrefetchScalarGridSpec(
        num_scalar_prefetch=3,
        grid=(num_splits, N, max_pairs),
        in_specs=[
            pl.BlockSpec((None, tile, Fp), i_map),        # a            (i side)
            pl.BlockSpec((None, Fp, tile), j_map_bT),     # b^T          (j side)
            pl.BlockSpec((None, tile, 2 * K), i_map),     # [log1S|logS] (i side, f32 epilogue)
            pl.BlockSpec((None, tile, 2 * K), j_map),     # [log1S|logS] (j side, bf16 RHS)
        ],
        out_specs=pl.BlockSpec((None, tile, K), i_map),
    )

    if vmem_limit_bytes is None and tile >= 1024:
        # v5e's 16 MiB scoped-VMEM default is too small for tile>=1024; on v7x
        # (64 MiB physical per TC) consider lowering this when sweeping 1024.
        vmem_limit_bytes = 64 * 1024 * 1024

    partials = pl.pallas_call(
        functools.partial(_crf_kernel, K=K, max_pairs=max_pairs),
        out_shape=jax.ShapeDtypeStruct((N, Pp, K), jnp.float32),
        grid_spec=grid_spec,
        compiler_params=pltpu.CompilerParams(
            dimension_semantics=("parallel", "parallel", "arbitrary"),
            vmem_limit_bytes=vmem_limit_bytes),
    )(i_blk, j_blk, valid, a, bT, cat, cat)

    loss = jnp.sum(partials) * (weight / N)
    return loss.reshape(1)   # matches weight * torch.tensor([densecrf_loss])


# ------------------------------ reference (plain JAX) -------------------------


def _reference_loss(feat, logS_m, log1S_m, weight, N):
    diff = feat[:, :, None, :] - feat[:, None, :, :]              # (N,P,P,F)
    Wm = jnp.exp(-0.5 * jnp.sum(diff * diff, axis=-1))            # (N,P,P)
    loss = jnp.einsum("nik,nij,njk->", logS_m, Wm, log1S_m)
    return weight * loss / N


# ----------------------------------- main -------------------------------------


if __name__ == "__main__":
    key = jax.random.PRNGKey(0)
    k1, k2, k3 = jax.random.split(key, 3)

    # Small shapes; H=W=36 with scale 0.5 -> P=324 pixels, so tile=512 hits a single
    # block, tile=256 exercises off-diagonal pairs + a padded (no-op) core slot, and
    # tile=128 exercises three i-blocks split across both core halves.
    N, C, K, H, W = 2, 3, 4, 36, 36
    images = jax.random.uniform(k1, (N, C, H, W), jnp.float32, 0.0, 255.0)
    logits = jax.random.normal(k2, (N, K, H, W), jnp.float32)
    S = jax.nn.softmax(logits, axis=1)
    logS = jnp.log(S)
    log1_S = jnp.log1p(-S)
    ROIs = (jax.random.uniform(k3, (N, H, W)) > 0.3).astype(jnp.float32)

    # DenseCRFLoss(weight, sigma_rgb, sigma_xy, scale_factor) hyperparameters.
    weight, sigma_rgb, sigma_xy, scale_factor = 2e-9, 15.0, 100.0, 0.5

    # Plain-JAX exact dense bilateral-filter reference.
    feat, logS_m, log1S_m = _preprocess(images, logS, log1_S, ROIs,
                                        sigma_rgb, sigma_xy, scale_factor)
    ref = jax.block_until_ready(_reference_loss(feat, logS_m, log1S_m, weight, N))

    for tile in (512, 256, 128):
        out = dense_crf_loss(images, logS, log1_S, ROIs, weight=weight,
                             sigma_rgb=sigma_rgb, sigma_xy=sigma_xy,
                             scale_factor=scale_factor, tile=tile)
        out = jax.block_until_ready(out)
        rel_err = abs(float(out[0]) - float(ref)) / (abs(float(ref)) + 1e-30)
        # bf16 W-contraction (f32 accumulate) -> allow a few-1e-3 relative tolerance.
        assert rel_err < 5e-3, (tile, float(out[0]), float(ref), rel_err)

    print("KERNEL_OK")
</pallas_src>

<mosaic_0001>
module attributes {stable_mosaic.version = 11 : i64} {
  func.func @_crf_kernel(%arg0: i32, %arg1: i32, %arg2: i32, %arg3: memref<1xi32, #tpu.memory_space<smem>>, %arg4: memref<1xi32, #tpu.memory_space<smem>>, %arg5: memref<1xi32, #tpu.memory_space<smem>>, %arg6: memref<1x512x8xf32, #tpu.memory_space<vmem>>, %arg7: memref<1x8x512xf32, #tpu.memory_space<vmem>>, %arg8: memref<1x512x8xf32, #tpu.memory_space<vmem>>, %arg9: memref<1x512x8xf32, #tpu.memory_space<vmem>>, %arg10: memref<1x512x4xf32, #tpu.memory_space<vmem>>) attributes {dimension_semantics = [#tpu.dimension_semantics<parallel>, #tpu.dimension_semantics<parallel>, #tpu.dimension_semantics<arbitrary>], iteration_bounds = array<i64: 1, 2, 1>, scalar_prefetch = 3 : i64, scratch_operands = 0 : i64, tpu.core_type = #tpu.core_type<tc>, window_params = [{transform_indices = @transform_0, window_bounds = array<i64: 1, 512, 8>}, {transform_indices = @transform_1, window_bounds = array<i64: 1, 8, 512>}, {transform_indices = @transform_2, window_bounds = array<i64: 1, 512, 8>}, {transform_indices = @transform_3, window_bounds = array<i64: 1, 512, 8>}, {transform_indices = @transform_4, window_bounds = array<i64: 1, 512, 4>}]} {
    %c1_i32 = arith.constant 1 : i32
    %0 = arith.muli %arg0, %c1_i32 : i32
    %1 = arith.addi %0, %arg2 : i32
    %2 = arith.index_cast %1 : i32 to index
    %3 = memref.load %arg3[%2] : memref<1xi32, #tpu.memory_space<smem>>
    %4 = arith.index_cast %1 : i32 to index
    %5 = memref.load %arg4[%4] : memref<1xi32, #tpu.memory_space<smem>>
    %6 = arith.index_cast %1 : i32 to index
    %7 = memref.load %arg5[%6] : memref<1xi32, #tpu.memory_space<smem>>
    %c0_i32 = arith.constant 0 : i32
    %8 = arith.cmpi ne, %7, %c0_i32 : i32
    %9 = arith.cmpi eq, %3, %5 : i32
    %10 = arith.andi %8, %9 : i1
    %11 = arith.extui %10 : i1 to i32
    %c0_i32_0 = arith.constant 0 : i32
    %12 = arith.cmpi ne, %11, %c0_i32_0 : i32
    scf.if %12 {
      %cst = arith.constant 0.000000e+00 : f32
      %15 = vector.broadcast %cst : f32 to vector<512x4xf32>
      %c0 = arith.constant 0 : index
      %c0_2 = arith.constant 0 : index
      %c0_3 = arith.constant 0 : index
      %16 = vector.load %arg10[%c0, %c0_2, %c0_3] : memref<1x512x4xf32, #tpu.memory_space<vmem>>, vector<1x512x4xf32>
      %17 = vector.shape_cast %16 : vector<1x512x4xf32> to vector<512x4xf32>
      %18 = vector.shape_cast %15 : vector<512x4xf32> to vector<1x512x4xf32>
      tpu.vector_store %arg10[%c0, %c0_2, %c0_3], %18 {strides = array<i32>} : memref<1x512x4xf32, #tpu.memory_space<vmem>>, vector<1x512x4xf32>,
    } else {
    }
    %13 = arith.extui %8 : i1 to i32
    %c0_i32_1 = arith.constant 0 : i32
    %14 = arith.cmpi ne, %13, %c0_i32_1 : i32
    scf.if %14 {
      %c0 = arith.constant 0 : index
      %c0_2 = arith.constant 0 : index
      %c0_3 = arith.constant 0 : index
      %15 = vector.load %arg6[%c0, %c0_2, %c0_3] : memref<1x512x8xf32, #tpu.memory_space<vmem>>, vector<1x512x8xf32>
      %16 = vector.shape_cast %15 : vector<1x512x8xf32> to vector<512x8xf32>
      %c0_4 = arith.constant 0 : index
      %c0_5 = arith.constant 0 : index
      %c0_6 = arith.constant 0 : index
      %17 = vector.load %arg7[%c0_4, %c0_5, %c0_6] : memref<1x8x512xf32, #tpu.memory_space<vmem>>, vector<1x8x512xf32>
      %18 = vector.shape_cast %17 : vector<1x8x512xf32> to vector<8x512xf32>
      %cst = arith.constant dense<0.000000e+00> : vector<512x512xf32>
      %19 = tpu.matmul %16, %18, %cst {dimension_numbers = #tpu.dot_dimension_numbers<[1], [0], [0], [1], [0, 0, 1, 1], [], []>} : vector<512x8xf32>, vector<8x512xf32>, vector<512x512xf32> -> vector<512x512xf32>
      %cst_7 = arith.constant 0.000000e+00 : f32
      %20 = vector.broadcast %cst_7 : f32 to vector<512x512xf32>
      %21 = arith.minimumf %19, %20 : vector<512x512xf32>
      %22 = math.exp %21 : vector<512x512xf32>
      %23 = arith.truncf %22 : vector<512x512xf32> to vector<512x512xbf16>
      %c0_8 = arith.constant 0 : index
      %c0_9 = arith.constant 0 : index
      %c0_10 = arith.constant 0 : index
      %24 = vector.load %arg9[%c0_8, %c0_9, %c0_10] : memref<1x512x8xf32, #tpu.memory_space<vmem>>, vector<1x512x8xf32>
      %25 = vector.shape_cast %24 : vector<1x512x8xf32> to vector<512x8xf32>
      %26 = arith.truncf %25 : vector<512x8xf32> to vector<512x8xbf16>
      %cst_11 = arith.constant dense<0.000000e+00> : vector<512x8xf32>
      %27 = tpu.matmul %23, %26, %cst_11 {dimension_numbers = #tpu.dot_dimension_numbers<[1], [0], [0], [1], [0, 0, 1, 1], [], []>} : vector<512x512xbf16>, vector<512x8xbf16>, vector<512x8xf32> -> vector<512x8xf32>
      %c0_12 = arith.constant 0 : index
      %c0_13 = arith.constant 0 : index
      %c0_14 = arith.constant 0 : index
      %28 = vector.load %arg8[%c0_12, %c0_13, %c0_14] : memref<1x512x8xf32, #tpu.memory_space<vmem>>, vector<1x512x8xf32>
      %29 = vector.shape_cast %28 : vector<1x512x8xf32> to vector<512x8xf32>
      %30 = vector.extract_strided_slice %29 {offsets = [0, 0], sizes = [512, 4], strides = [1, 1]} : vector<512x8xf32> to vector<512x4xf32>
      %31 = vector.extract_strided_slice %29 {offsets = [0, 4], sizes = [512, 4], strides = [1, 1]} : vector<512x8xf32> to vector<512x4xf32>
      %32 = arith.cmpi ne, %3, %5 : i32
      %33 = arith.extui %32 : i1 to i32
      %34 = arith.sitofp %33 : i32 to f32
      %c0_15 = arith.constant 0 : index
      %c0_16 = arith.constant 0 : index
      %c0_17 = arith.constant 0 : index
      %35 = vector.load %arg10[%c0_15, %c0_16, %c0_17] : memref<1x512x4xf32, #tpu.memory_space<vmem>>, vector<1x512x4xf32>
      %36 = vector.shape_cast %35 : vector<1x512x4xf32> to vector<512x4xf32>
      %37 = vector.extract_strided_slice %27 {offsets = [0, 0], sizes = [512, 4], strides = [1, 1]} : vector<512x8xf32> to vector<512x4xf32>
      %38 = arith.mulf %31, %37 : vector<512x4xf32>
      %39 = vector.extract_strided_slice %27 {offsets = [0, 4], sizes = [512, 4], strides = [1, 1]} : vector<512x8xf32> to vector<512x4xf32>
      %40 = arith.mulf %30, %39 : vector<512x4xf32>
      %41 = vector.broadcast %34 : f32 to vector<512x4xf32>
      %42 = arith.mulf %41, %40 : vector<512x4xf32>
      %43 = arith.addf %38, %42 : vector<512x4xf32>
      %44 = arith.addf %36, %43 : vector<512x4xf32>
      %c0_18 = arith.constant 0 : index
      %c0_19 = arith.constant 0 : index
      %c0_20 = arith.constant 0 : index
      %45 = vector.load %arg10[%c0_18, %c0_19, %c0_20] : memref<1x512x4xf32, #tpu.memory_space<vmem>>, vector<1x512x4xf32>
      %46 = vector.shape_cast %45 : vector<1x512x4xf32> to vector<512x4xf32>
      %47 = vector.shape_cast %44 : vector<512x4xf32> to vector<1x512x4xf32>
      tpu.vector_store %arg10[%c0_18, %c0_19, %c0_20], %47 {strides = array<i32>} : memref<1x512x4xf32, #tpu.memory_space<vmem>>, vector<1x512x4xf32>,
    } else {
    }
    return
  }
  func.func @transform_0(%arg0: i32, %arg1: i32, %arg2: i32, %arg3: memref<1xi32, #tpu.memory_space<smem>>, %arg4: memref<1xi32, #tpu.memory_space<smem>>, %arg5: memref<1xi32, #tpu.memory_space<smem>>) -> (i32, i32, i32) {
    %c1_i32 = arith.constant 1 : i32
    %0 = arith.muli %arg0, %c1_i32 : i32
    %1 = arith.addi %0, %arg2 : i32
    %2 = arith.index_cast %1 : i32 to index
    %3 = memref.load %arg3[%2] : memref<1xi32, #tpu.memory_space<smem>>
    %c0_i32 = arith.constant 0 : i32
    %c0_i32_0 = arith.constant 0 : i32
    return %arg1, %3, %c0_i32 : i32, i32, i32
  }
  func.func @transform_1(%arg0: i32, %arg1: i32, %arg2: i32, %arg3: memref<1xi32, #tpu.memory_space<smem>>, %arg4: memref<1xi32, #tpu.memory_space<smem>>, %arg5: memref<1xi32, #tpu.memory_space<smem>>) -> (i32, i32, i32) {
    %c1_i32 = arith.constant 1 : i32
    %0 = arith.muli %arg0, %c1_i32 : i32
    %1 = arith.addi %0, %arg2 : i32
    %2 = arith.index_cast %1 : i32 to index
    %3 = memref.load %arg4[%2] : memref<1xi32, #tpu.memory_space<smem>>
    %c0_i32 = arith.constant 0 : i32
    %c0_i32_0 = arith.constant 0 : i32
    return %arg1, %c0_i32, %3 : i32, i32, i32
  }
  func.func @transform_2(%arg0: i32, %arg1: i32, %arg2: i32, %arg3: memref<1xi32, #tpu.memory_space<smem>>, %arg4: memref<1xi32, #tpu.memory_space<smem>>, %arg5: memref<1xi32, #tpu.memory_space<smem>>) -> (i32, i32, i32) {
    %c1_i32 = arith.constant 1 : i32
    %0 = arith.muli %arg0, %c1_i32 : i32
    %1 = arith.addi %0, %arg2 : i32
    %2 = arith.index_cast %1 : i32 to index
    %3 = memref.load %arg3[%2] : memref<1xi32, #tpu.memory_space<smem>>
    %c0_i32 = arith.constant 0 : i32
    %c0_i32_0 = arith.constant 0 : i32
    return %arg1, %3, %c0_i32 : i32, i32, i32
  }
  func.func @transform_3(%arg0: i32, %arg1: i32, %arg2: i32, %arg3: memref<1xi32, #tpu.memory_space<smem>>, %arg4: memref<1xi32, #tpu.memory_space<smem>>, %arg5: memref<1xi32, #tpu.memory_space<smem>>) -> (i32, i32, i32) {
    %c1_i32 = arith.constant 1 : i32
    %0 = arith.muli %arg0, %c1_i32 : i32
    %1 = arith.addi %0, %arg2 : i32
    %2 = arith.index_cast %1 : i32 to index
    %3 = memref.load %arg4[%2] : memref<1xi32, #tpu.memory_space<smem>>
    %c0_i32 = arith.constant 0 : i32
    %c0_i32_0 = arith.constant 0 : i32
    return %arg1, %3, %c0_i32 : i32, i32, i32
  }
  func.func @transform_4(%arg0: i32, %arg1: i32, %arg2: i32, %arg3: memref<1xi32, #tpu.memory_space<smem>>, %arg4: memref<1xi32, #tpu.memory_space<smem>>, %arg5: memref<1xi32, #tpu.memory_space<smem>>) -> (i32, i32, i32) {
    %c1_i32 = arith.constant 1 : i32
    %0 = arith.muli %arg0, %c1_i32 : i32
    %1 = arith.addi %0, %arg2 : i32
    %2 = arith.index_cast %1 : i32 to index
    %3 = memref.load %arg3[%2] : memref<1xi32, #tpu.memory_space<smem>>
    %c0_i32 = arith.constant 0 : i32
    %c0_i32_0 = arith.constant 0 : i32
    return %arg1, %3, %c0_i32 : i32, i32, i32
  }
}

</mosaic_0001>

<llo_original>
// kernel: tpu_custom_call.1
$region0: #{tpu_custom_call.1}
  #allocation0 [shape = 'u32[]', space=smem, size = 0x4, offset = 0x4, fixed_abs, tag = 'smem constant byte address 0x4 - core index']
  #allocation1 [shape = 'u32[144,128]{1,0:T(1,128)}', space=vmem, size = 0x12000, scoped, tag = 'internal scratch']
  #allocation2 [shape = 's32[1]{0}', space=sflag, size = 0x4, scoped, tag = 'scoped memory for tpu_custom_call.1']
  #allocation3 [shape = 's32[1]{0:T(128)S(6)}', space=smem, size = 0x200, scoped, tag = 'prefetched SMEM operand 0']
  #allocation4 [shape = 's32[1]{0:T(128)S(6)}', space=smem, size = 0x200, scoped, tag = 'prefetched SMEM operand 1']
  #allocation5 [shape = 's32[1]{0:T(128)S(6)}', space=smem, size = 0x200, scoped, tag = 'prefetched SMEM operand 2']
  %s0 = inlined_call_operand.<no memory space> [shape: s32[1], index: 0, kind: input, shape index: {}]
  %s1 = inlined_call_operand.<no memory space> [shape: s32[1], index: 1, kind: input, shape index: {}]
  %s2 = inlined_call_operand.<no memory space> [shape: s32[1], index: 2, kind: input, shape index: {}]
  %s3 = inlined_call_operand.vmem [shape: f32[2,512,8], index: 3, kind: input, shape index: {}]
  %s4 = inlined_call_operand.vmem [shape: f32[2,8,512], index: 4, kind: input, shape index: {}]
  %s5 = inlined_call_operand.vmem [shape: f32[2,512,8], index: 5, kind: input, shape index: {}]
  %s6 = inlined_call_operand.vmem [shape: f32[2,512,8], index: 6, kind: input, shape index: {}]
  %s7 = inlined_call_operand.vmem [shape: f32[2,512,4], index: 7, kind: output, shape index: {}]
  %s8 = sld [smem:[#allocation0]]
  $region57: #{tpu_custom_call.1} parent=0
    _
  %s10 = ssub.s32 1, %s8
  %s11 = scalar_select 0, %s10, %s8
  %12 = sst [smem:[#allocation3]] %s0
  %13 = sst [smem:[#allocation4]] %s1
  %14 = sst [smem:[#allocation5]] %s2
  loop: start=0, step=1, limit=4
  $region2: #{tpu_custom_call.1} parent=0 // loop_pre_header
    _
  $region3: #{tpu_custom_call.1} parent=0 // loop_header
    %s16 = sphi 0, %s20
    %p17 = scmp.ge.s32.totalorder %s16, 4
    %s23 = sphi 0, %s42
    %s24 = sphi 0, %s38
    %s25 = sphi 0, %s34
    %s26 = sphi 0, %s23
    %s27 = sphi 0, %s24
    %s28 = sphi 0, %s25
    %s29 = sphi 0, %s26
    %s30 = sphi 0, %s27
    %s31 = sphi 0, %s28
    %s51 = sphi 0, %s53
    %s54 = sphi 0, %s51
    %s55 = sphi 0, %s54
    %s71 = sphi 0, %s55
    %s83 = sphi 0, %s85
    %s86 = sphi 0, %s83
    %s87 = sphi 0, %s86
    %s103 = sphi 0, %s87
    %s115 = sphi 0, %s117
    %s118 = sphi 0, %s115
    %s119 = sphi 0, %s118
    %s135 = sphi 0, %s119
    %s147 = sphi 0, %s149
    %s150 = sphi 0, %s147
    %s151 = sphi 0, %s150
    %s167 = sphi 0, %s151
    %s179 = sphi 0, %s181
    %s182 = sphi 0, %s179
    %s183 = sphi 0, %s182
    %s199 = sphi 0, %s183
  $region4: #{tpu_custom_call.1} parent=0 // loop_header_branch
    %19 = sbr.rel (%p17) target = $region8
  $region5: #{tpu_custom_call.1} parent=0 // loop_body
    %s21 = ssub.s32 %s16, 1
    %s22 = ssub.s32 %s16, 2
    %s32 = sadd.s32 1, %s25
    %p33 = scmp.ge.s32.totalorder %s32, 1
    %s34 = scalar_select %p33, 0, %s32
    %s35 = sadd.s32 1, %s24
    %s36 = scalar_select %p33, %s35, %s24
    %p37 = scmp.ge.s32.totalorder %s36, 2
    %s38 = scalar_select %p37, 0, %s36
    %s39 = sadd.s32 1, %s23
    %s40 = scalar_select %p37, %s39, %s23
    %p41 = scmp.ge.s32.totalorder %s40, 1
    %s42 = scalar_select %p41, 0, %s40
    %s43 = sadd.s32 %s23, %s25
    %s44 = sld [smem:[#allocation3 + %s43]]
    %s45 = sadd.s32 %s42, %s34
    %s46 = sld [smem:[#allocation3 + %s45]]
    %s47 = ssub.s32 %s24, %s38
    %s48 = ssub.s32 %s44, %s46
    %s49 = sor.u32 %s47, %s48
    %p50 = scmp.eq.s32.totalorder %s49, 0
    %s52 = sadd.s32 %s51, 1
    %s53 = scalar_select %p50, %s51, %s52
    %p56 = pneg %p50
    %p57 = scmp.eq.s32.totalorder %s16, 1
    %p58 = por %p56, %p57
    %p59 = scmp.ne.s32.totalorder %s51, %s54
    %p60 = scmp.eq.s32.totalorder %s16, 0
    %p61 = por %p59, %p60
    %p62 = scmp.ne.s32.totalorder %s51, %s54
    %p63 = scmp.eq.s32.totalorder %s21, 1
    %p64 = por %p62, %p63
    %p65 = scmp.ne.s32.totalorder %s54, %s55
    %p66 = scmp.eq.s32.totalorder %s21, 0
    %p67 = por %p65, %p66
    %p68 = scmp.ne.s32.totalorder %s54, %s55
    %p69 = scmp.eq.s32.totalorder %s22, 1
    %p70 = por %p68, %p69
    %p72 = scmp.ne.s32.totalorder %s55, %s71
    %p73 = scmp.eq.s32.totalorder %s22, 0
    %p74 = por %p72, %p73
    %s75 = sadd.s32 %s23, %s25
    %s76 = sld [smem:[#allocation4 + %s75]]
    %s77 = sadd.s32 %s42, %s34
    %s78 = sld [smem:[#allocation4 + %s77]]
    %s79 = ssub.s32 %s24, %s38
    %s80 = ssub.s32 %s76, %s78
    %s81 = sor.u32 %s79, %s80
    %p82 = scmp.eq.s32.totalorder %s81, 0
    %s84 = sadd.s32 %s83, 1
    %s85 = scalar_select %p82, %s83, %s84
    %p88 = pneg %p82
    %p89 = scmp.eq.s32.totalorder %s16, 1
    %p90 = por %p88, %p89
    %p91 = scmp.ne.s32.totalorder %s83, %s86
    %p92 = scmp.eq.s32.totalorder %s16, 0
    %p93 = por %p91, %p92
    %p94 = scmp.ne.s32.totalorder %s83, %s86
    %p95 = scmp.eq.s32.totalorder %s21, 1
    %p96 = por %p94, %p95
    %p97 = scmp.ne.s32.totalorder %s86, %s87
    %p98 = scmp.eq.s32.totalorder %s21, 0
    %p99 = por %p97, %p98
    %p100 = scmp.ne.s32.totalorder %s86, %s87
    %p101 = scmp.eq.s32.totalorder %s22, 1
    %p102 = por %p100, %p101
    %p104 = scmp.ne.s32.totalorder %s87, %s103
    %p105 = scmp.eq.s32.totalorder %s22, 0
    %p106 = por %p104, %p105
    %s107 = sadd.s32 %s23, %s25
    %s108 = sld [smem:[#allocation3 + %s107]]
    %s109 = sadd.s32 %s42, %s34
    %s110 = sld [smem:[#allocation3 + %s109]]
    %s111 = ssub.s32 %s24, %s38
    %s112 = ssub.s32 %s108, %s110
    %s113 = sor.u32 %s111, %s112
    %p114 = scmp.eq.s32.totalorder %s113, 0
    %s116 = sadd.s32 %s115, 1
    %s117 = scalar_select %p114, %s115, %s116
    %p120 = pneg %p114
    %p121 = scmp.eq.s32.totalorder %s16, 1
    %p122 = por %p120, %p121
    %p123 = scmp.ne.s32.totalorder %s115, %s118
    %p124 = scmp.eq.s32.totalorder %s16, 0
    %p125 = por %p123, %p124
    %p126 = scmp.ne.s32.totalorder %s115, %s118
    %p127 = scmp.eq.s32.totalorder %s21, 1
    %p128 = por %p126, %p127
    %p129 = scmp.ne.s32.totalorder %s118, %s119
    %p130 = scmp.eq.s32.totalorder %s21, 0
    %p131 = por %p129, %p130
    %p132 = scmp.ne.s32.totalorder %s118, %s119
    %p133 = scmp.eq.s32.totalorder %s22, 1
    %p134 = por %p132, %p133
    %p136 = scmp.ne.s32.totalorder %s119, %s135
    %p137 = scmp.eq.s32.totalorder %s22, 0
    %p138 = por %p136, %p137
    %s139 = sadd.s32 %s23, %s25
    %s140 = sld [smem:[#allocation4 + %s139]]
    %s141 = sadd.s32 %s42, %s34
    %s142 = sld [smem:[#allocation4 + %s141]]
    %s143 = ssub.s32 %s24, %s38
    %s144 = ssub.s32 %s140, %s142
    %s145 = sor.u32 %s143, %s144
    %p146 = scmp.eq.s32.totalorder %s145, 0
    %s148 = sadd.s32 %s147, 1
    %s149 = scalar_select %p146, %s147, %s148
    %p152 = pneg %p146
    %p153 = scmp.eq.s32.totalorder %s16, 1
    %p154 = por %p152, %p153
    %p155 = scmp.ne.s32.totalorder %s147, %s150
    %p156 = scmp.eq.s32.totalorder %s16, 0
    %p157 = por %p155, %p156
    %p158 = scmp.ne.s32.totalorder %s147, %s150
    %p159 = scmp.eq.s32.totalorder %s21, 1
    %p160 = por %p158, %p159
    %p161 = scmp.ne.s32.totalorder %s150, %s151
    %p162 = scmp.eq.s32.totalorder %s21, 0
    %p163 = por %p161, %p162
    %p164 = scmp.ne.s32.totalorder %s150, %s151
    %p165 = scmp.eq.s32.totalorder %s22, 1
    %p166 = por %p164, %p165
    %p168 = scmp.ne.s32.totalorder %s151, %s167
    %p169 = scmp.eq.s32.totalorder %s22, 0
    %p170 = por %p168, %p169
    %s171 = sadd.s32 %s23, %s25
    %s172 = sld [smem:[#allocation3 + %s171]]
    %s173 = sadd.s32 %s42, %s34
    %s174 = sld [smem:[#allocation3 + %s173]]
    %s175 = ssub.s32 %s24, %s38
    %s176 = ssub.s32 %s172, %s174
    %s177 = sor.u32 %s175, %s176
    %p178 = scmp.eq.s32.totalorder %s177, 0
    %s180 = sadd.s32 %s179, 1
    %s181 = scalar_select %p178, %s179, %s180
    %p184 = pneg %p178
    %p185 = scmp.eq.s32.totalorder %s16, 1
    %p186 = por %p184, %p185
    %p187 = scmp.ne.s32.totalorder %s179, %s182
    %p188 = scmp.eq.s32.totalorder %s16, 0
    %p189 = por %p187, %p188
    %p190 = scmp.ne.s32.totalorder %s179, %s182
    %p191 = scmp.eq.s32.totalorder %s21, 1
    %p192 = por %p190, %p191
    %p193 = scmp.ne.s32.totalorder %s182, %s183
    %p194 = scmp.eq.s32.totalorder %s21, 0
    %p195 = por %p193, %p194
    %p196 = scmp.ne.s32.totalorder %s182, %s183
    %p197 = scmp.eq.s32.totalorder %s22, 1
    %p198 = por %p196, %p197
    %p200 = scmp.ne.s32.totalorder %s183, %s199
    %p201 = scmp.eq.s32.totalorder %s22, 0
    %p202 = por %p200, %p201
    %p203 = scmp.le.s32.totalorder 1, %s16
    %p204 = scmp.lt.s32.totalorder %s16, 3
    %p205 = pnand %p203, %p204
    %p206 = pneg %p205
    // Predicated region
    $region9: #{tpu_custom_call.1} parent=5 // pred_check
      _
    $region10: #{tpu_custom_call.1} parent=5 // pred_check_branch
      %208 = sbr.rel (%p205) target = $region12
    $region11: #{tpu_custom_call.1} parent=5 // pred_region
      %s209 = ssub.s32 %s16, 1
    $region12: #{tpu_custom_call.1} parent=5 // pred_fallthru
      _
    %p210 = scmp.lt.s32.totalorder %s16, 2
    // Predicated region
    $region13: #{tpu_custom_call.1} parent=5 // pred_check
      %p211 = pneg %p210
    $region14: #{tpu_custom_call.1} parent=5 // pred_check_branch
      %213 = sbr.rel (%p211) target = $region16
    $region15: #{tpu_custom_call.1} parent=5 // pred_region
      // Predicated region
      $region17: #{tpu_custom_call.1} parent=15 // pred_check
        %p214 = pneg %p61
      $region18: #{tpu_custom_call.1} parent=15 // pred_check_branch
        %216 = sbr.rel (%p214) target = $region20
      $region19: #{tpu_custom_call.1} parent=15 // pred_region
        %s217 = sadd.s32 %s23, %s25
        %s218 = sld [smem:[#allocation3 + %s217]]
        %s219 = smul.u32 64, %s218
        %p220 = scmp.lt.s32.totalorder %s24, 1
        %s221 = scalar_select %p220, %s24, 1
        %p222 = scmp.lt.s32.totalorder %s219, 63
        %s223 = scalar_select %p222, %s219, 63
        %s224 = smul.addr %s221, 64
        %s225 = sadd.s32 %s223, %s224
        %s226 = smul.addr %s225, 8
        %s227 = scalar_lea.vmem %s3, %s226
        %s228 = sadd.s32 %s23, %s25
        %s229 = sld [smem:[#allocation3 + %s228]]
        %s230 = smul.u32 64, %s229
      $region20: #{tpu_custom_call.1} parent=15 // pred_fallthru
        _
      // Predicated region
      $region21: #{tpu_custom_call.1} parent=15 // pred_check
        %p231 = pneg %p93
      $region22: #{tpu_custom_call.1} parent=15 // pred_check_branch
        %233 = sbr.rel (%p231) target = $region24
      $region23: #{tpu_custom_call.1} parent=15 // pred_region
        %s234 = sadd.s32 %s23, %s25
        %s235 = sld [smem:[#allocation4 + %s234]]
        %s236 = smul.u32 4, %s235
        %p237 = scmp.lt.s32.totalorder %s24, 1
        %s238 = scalar_select %p237, %s24, 1
        %p239 = scmp.lt.s32.totalorder %s236, 3
        %s240 = scalar_select %p239, %s236, 3
        %s241 = smul.addr %s238, 4
        %s242 = sadd.s32 %s240, %s241
        %s243 = smul.addr %s242, 8
        %s244 = scalar_lea.vmem %s4, %s243
        %s245 = sadd.s32 %s23, %s25
        %s246 = sld [smem:[#allocation4 + %s245]]
        %s247 = smul.u32 4, %s246
      $region24: #{tpu_custom_call.1} parent=15 // pred_fallthru
        _
      // Predicated region
      $region25: #{tpu_custom_call.1} parent=15 // pred_check
        %p248 = pneg %p125
      $region26: #{tpu_custom_call.1} parent=15 // pred_check_branch
        %250 = sbr.rel (%p248) target = $region28
      $region27: #{tpu_custom_call.1} parent=15 // pred_region
        %s251 = sadd.s32 %s23, %s25
        %s252 = sld [smem:[#allocation3 + %s251]]
        %s253 = smul.u32 64, %s252
        %p254 = scmp.lt.s32.totalorder %s24, 1
        %s255 = scalar_select %p254, %s24, 1
        %p256 = scmp.lt.s32.totalorder %s253, 63
        %s257 = scalar_select %p256, %s253, 63
        %s258 = smul.addr %s255, 64
        %s259 = sadd.s32 %s257, %s258
        %s260 = smul.addr %s259, 8
        %s261 = scalar_lea.vmem %s5, %s260
        %s262 = sadd.s32 %s23, %s25
        %s263 = sld [smem:[#allocation3 + %s262]]
        %s264 = smul.u32 64, %s263
      $region28: #{tpu_custom_call.1} parent=15 // pred_fallthru
        _
      // Predicated region
      $region29: #{tpu_custom_call.1} parent=15 // pred_check
        %p265 = pneg %p157
      $region30: #{tpu_custom_call.1} parent=15 // pred_check_branch
        %267 = sbr.rel (%p265) target = $region32
      $region31: #{tpu_custom_call.1} parent=15 // pred_region
        %s268 = sadd.s32 %s23, %s25
        %s269 = sld [smem:[#allocation4 + %s268]]
        %s270 = smul.u32 64, %s269
        %p271 = scmp.lt.s32.totalorder %s24, 1
        %s272 = scalar_select %p271, %s24, 1
        %p273 = scmp.lt.s32.totalorder %s270, 63
        %s274 = scalar_select %p273, %s270, 63
        %s275 = smul.addr %s272, 64
        %s276 = sadd.s32 %s274, %s275
        %s277 = smul.addr %s276, 8
        %s278 = scalar_lea.vmem %s6, %s277
        %s279 = sadd.s32 %s23, %s25
        %s280 = sld [smem:[#allocation4 + %s279]]
        %s281 = smul.u32 64, %s280
      $region32: #{tpu_custom_call.1} parent=15 // pred_fallthru
        _
    $region16: #{tpu_custom_call.1} parent=5 // pred_fallthru
      _
    %p282 = scmp.le.s32.totalorder 1, %s16
    %p283 = scmp.lt.s32.totalorder %s16, 3
    %p284 = pnand %p282, %p283
    %p285 = pneg %p284
    // Predicated region
    $region33: #{tpu_custom_call.1} parent=5 // pred_check
      _
    $region34: #{tpu_custom_call.1} parent=5 // pred_check_branch
      %287 = sbr.rel (%p284) target = $region36
    $region35: #{tpu_custom_call.1} parent=5 // pred_region
      %s288 = ssub.s32 %s16, 1
      %s289 = sadd.s32 %s26, %s28
      %s290 = sld [smem:[#allocation3 + %s289]]
      %s291 = smul.u32 64, %s290
      %p292 = scmp.lt.s32.totalorder %s27, 1
      %s293 = scalar_select %p292, %s27, 1
      %p294 = scmp.lt.s32.totalorder %s291, 63
      %s295 = scalar_select %p294, %s291, 63
      %s296 = smul.addr %s293, 64
      %s297 = sadd.s32 %s295, %s296
      %s298 = smul.addr %s297, 8
      %s299 = scalar_lea.vmem %s3, %s298
      %p300 = pneg %p67
      %p301 = pneg %p64
      %s302 = sadd.s32 %s26, %s28
      %s303 = sld [smem:[#allocation4 + %s302]]
      %s304 = smul.u32 4, %s303
      %p305 = scmp.lt.s32.totalorder %s27, 1
      %s306 = scalar_select %p305, %s27, 1
      %p307 = scmp.lt.s32.totalorder %s304, 3
      %s308 = scalar_select %p307, %s304, 3
      %s309 = smul.addr %s306, 4
      %s310 = sadd.s32 %s308, %s309
      %s311 = smul.addr %s310, 8
      %s312 = scalar_lea.vmem %s4, %s311
      %p313 = pneg %p99
      %p314 = pneg %p96
      %s315 = sadd.s32 %s26, %s28
      %s316 = sld [smem:[#allocation3 + %s315]]
      %s317 = smul.u32 64, %s316
      %p318 = scmp.lt.s32.totalorder %s27, 1
      %s319 = scalar_select %p318, %s27, 1
      %p320 = scmp.lt.s32.totalorder %s317, 63
      %s321 = scalar_select %p320, %s317, 63
      %s322 = smul.addr %s319, 64
      %s323 = sadd.s32 %s321, %s322
      %s324 = smul.addr %s323, 8
      %s325 = scalar_lea.vmem %s5, %s324
      %p326 = pneg %p131
      %p327 = pneg %p128
      %s328 = sadd.s32 %s26, %s28
      %s329 = sld [smem:[#allocation4 + %s328]]
      %s330 = smul.u32 64, %s329
      %p331 = scmp.lt.s32.totalorder %s27, 1
      %s332 = scalar_select %p331, %s27, 1
      %p333 = scmp.lt.s32.totalorder %s330, 63
      %s334 = scalar_select %p333, %s330, 63
      %s335 = smul.addr %s332, 64
      %s336 = sadd.s32 %s334, %s335
      %s337 = smul.addr %s336, 8
      %s338 = scalar_lea.vmem %s6, %s337
      %p339 = pneg %p163
      %p340 = pneg %p160
      %p341 = pneg %p195
      %p342 = pneg %p192
      %s343 = sadd.s32 %s26, %s28
      %s344 = sld [smem:[#allocation3 + %s343]]
      %s345 = smul.u32 64, %s344
      %p346 = scmp.lt.s32.totalorder %s27, 1
      %s347 = scalar_select %p346, %s27, 1
      %p348 = scmp.lt.s32.totalorder %s345, 63
      %s349 = scalar_select %p348, %s345, 63
      %s350 = smul.addr %s347, 64
      %s351 = sadd.s32 %s349, %s350
      %s352 = smul.addr %s351, 8
      %s353 = scalar_lea.vmem %s7, %s352
      %s354 = sadd.s32 %s26, %s28
      %s355 = sld [smem:[#allocation3 + %s354]]
      %s356 = smul.u32 64, %s355
      %p357 = scmp.lt.s32.totalorder %s27, 1
      %s358 = scalar_select %p357, %s27, 1
      %p359 = scmp.lt.s32.totalorder %s356, 63
      %s360 = scalar_select %p359, %s356, 63
      %s361 = smul.addr %s358, 64
      %s362 = sadd.s32 %s360, %s361
      %s363 = smul.addr %s362, 8
      %s364 = scalar_lea.vmem %s3, %s363
      %s365 = sadd.s32 %s26, %s28
      %s366 = sld [smem:[#allocation3 + %s365]]
      %s367 = smul.u32 64, %s366
      %s368 = sadd.s32 %s26, %s28
      %s369 = sld [smem:[#allocation4 + %s368]]
      %s370 = smul.u32 4, %s369
      %p371 = scmp.lt.s32.totalorder %s27, 1
      %s372 = scalar_select %p371, %s27, 1
      %p373 = scmp.lt.s32.totalorder %s370, 3
      %s374 = scalar_select %p373, %s370, 3
      %s375 = smul.addr %s372, 4
      %s376 = sadd.s32 %s374, %s375
      %s377 = smul.addr %s376, 8
      %s378 = scalar_lea.vmem %s4, %s377
      %s379 = sadd.s32 %s26, %s28
      %s380 = sld [smem:[#allocation4 + %s379]]
      %s381 = smul.u32 4, %s380
      %s382 = sadd.s32 %s26, %s28
      %s383 = sld [smem:[#allocation3 + %s382]]
      %s384 = smul.u32 64, %s383
      %p385 = scmp.lt.s32.totalorder %s27, 1
      %s386 = scalar_select %p385, %s27, 1
      %p387 = scmp.lt.s32.totalorder %s384, 63
      %s388 = scalar_select %p387, %s384, 63
      %s389 = smul.addr %s386, 64
      %s390 = sadd.s32 %s388, %s389
      %s391 = smul.addr %s390, 8
      %s392 = scalar_lea.vmem %s5, %s391
      %s393 = sadd.s32 %s26, %s28
      %s394 = sld [smem:[#allocation3 + %s393]]
      %s395 = smul.u32 64, %s394
      %s396 = sadd.s32 %s26, %s28
      %s397 = sld [smem:[#allocation4 + %s396]]
      %s398 = smul.u32 64, %s397
      %p399 = scmp.lt.s32.totalorder %s27, 1
      %s400 = scalar_select %p399, %s27, 1
      %p401 = scmp.lt.s32.totalorder %s398, 63
      %s402 = scalar_select %p401, %s398, 63
      %s403 = smul.addr %s400, 64
      %s404 = sadd.s32 %s402, %s403
      %s405 = smul.addr %s404, 8
      %s406 = scalar_lea.vmem %s6, %s405
      %s407 = sadd.s32 %s26, %s28
      %s408 = sld [smem:[#allocation4 + %s407]]
      %s409 = smul.u32 64, %s408
      %s410 = sadd.s32 %s26, %s28
      %s411 = sld [smem:[#allocation3 + %s410]]
      %s412 = smul.u32 64, %s411
      %p413 = scmp.lt.s32.totalorder %s27, 1
      %s414 = scalar_select %p413, %s27, 1
      %p415 = scmp.lt.s32.totalorder %s412, 63
      %s416 = scalar_select %p415, %s412, 63
      %s417 = smul.addr %s414, 64
      %s418 = sadd.s32 %s416, %s417
      %s419 = smul.addr %s418, 8
      %s420 = scalar_lea.vmem %s7, %s419
      %s421 = sadd.s32 %s26, %s28
      %s422 = sld [smem:[#allocation3 + %s421]]
      %s423 = smul.u32 64, %s422
      %s425 = sadd.s32 %s26, %s28
      %s426 = sld [smem:[#allocation3 + %s425]]
      %s427 = sld [smem:[#allocation4 + %s425]]
      %s428 = sld [smem:[#allocation5 + %s425]]
      %p429 = scmp.ne.s32.totalorder %s428, 0
      %p430 = scmp.eq.s32.totalorder %s426, %s427
      %p431 = pnand %p429, %p430
      %p432 = pneg %p431
      // Predicated region
      $region37: #{tpu_custom_call.1} parent=35 // pred_check
        _
      $region38: #{tpu_custom_call.1} parent=35 // pred_check_branch
        %434 = sbr.rel (%p431) target = $region40
      $region39: #{tpu_custom_call.1} parent=35 // pred_region
        %vm435 = vcmask 31744
        %436 = vst.msk [vmem:[%s420] sm:$0xff] %vm435, 0.0
        %437 = vst.msk [vmem:[%s420 + $0x8] sm:$0xff] %vm435, 0.0
        %438 = vst.msk [vmem:[%s420 + $0x10] sm:$0xff] %vm435, 0.0
        %439 = vst.msk [vmem:[%s420 + $0x18] sm:$0xff] %vm435, 0.0
        %440 = vst.msk [vmem:[%s420 + $0x20] sm:$0xff] %vm435, 0.0
        %441 = vst.msk [vmem:[%s420 + $0x28] sm:$0xff] %vm435, 0.0
        %442 = vst.msk [vmem:[%s420 + $0x30] sm:$0xff] %vm435, 0.0
        %443 = vst.msk [vmem:[%s420 + $0x38] sm:$0xff] %vm435, 0.0
        %444 = vst.msk [vmem:[%s420 + $0x40] sm:$0xff] %vm435, 0.0
        %445 = vst.msk [vmem:[%s420 + $0x48] sm:$0xff] %vm435, 0.0
        %446 = vst.msk [vmem:[%s420 + $0x50] sm:$0xff] %vm435, 0.0
        %447 = vst.msk [vmem:[%s420 + $0x58] sm:$0xff] %vm435, 0.0
        %448 = vst.msk [vmem:[%s420 + $0x60] sm:$0xff] %vm435, 0.0
        %449 = vst.msk [vmem:[%s420 + $0x68] sm:$0xff] %vm435, 0.0
        %450 = vst.msk [vmem:[%s420 + $0x70] sm:$0xff] %vm435, 0.0
        %451 = vst.msk [vmem:[%s420 + $0x78] sm:$0xff] %vm435, 0.0
        %452 = vst.msk [vmem:[%s420 + $0x80] sm:$0xff] %vm435, 0.0
        %453 = vst.msk [vmem:[%s420 + $0x88] sm:$0xff] %vm435, 0.0
        %454 = vst.msk [vmem:[%s420 + $0x90] sm:$0xff] %vm435, 0.0
        %455 = vst.msk [vmem:[%s420 + $0x98] sm:$0xff] %vm435, 0.0
        %456 = vst.msk [vmem:[%s420 + $0xa0] sm:$0xff] %vm435, 0.0
        %457 = vst.msk [vmem:[%s420 + $0xa8] sm:$0xff] %vm435, 0.0
        %458 = vst.msk [vmem:[%s420 + $0xb0] sm:$0xff] %vm435, 0.0
        %459 = vst.msk [vmem:[%s420 + $0xb8] sm:$0xff] %vm435, 0.0
        %460 = vst.msk [vmem:[%s420 + $0xc0] sm:$0xff] %vm435, 0.0
        %461 = vst.msk [vmem:[%s420 + $0xc8] sm:$0xff] %vm435, 0.0
        %462 = vst.msk [vmem:[%s420 + $0xd0] sm:$0xff] %vm435, 0.0
        %463 = vst.msk [vmem:[%s420 + $0xd8] sm:$0xff] %vm435, 0.0
        %464 = vst.msk [vmem:[%s420 + $0xe0] sm:$0xff] %vm435, 0.0
        %465 = vst.msk [vmem:[%s420 + $0xe8] sm:$0xff] %vm435, 0.0
        %466 = vst.msk [vmem:[%s420 + $0xf0] sm:$0xff] %vm435, 0.0
        %467 = vst.msk [vmem:[%s420 + $0xf8] sm:$0xff] %vm435, 0.0
        %468 = vst.msk [vmem:[%s420 + $0x100] sm:$0xff] %vm435, 0.0
        %469 = vst.msk [vmem:[%s420 + $0x108] sm:$0xff] %vm435, 0.0
        %470 = vst.msk [vmem:[%s420 + $0x110] sm:$0xff] %vm435, 0.0
        %471 = vst.msk [vmem:[%s420 + $0x118] sm:$0xff] %vm435, 0.0
        %472 = vst.msk [vmem:[%s420 + $0x120] sm:$0xff] %vm435, 0.0
        %473 = vst.msk [vmem:[%s420 + $0x128] sm:$0xff] %vm435, 0.0
        %474 = vst.msk [vmem:[%s420 + $0x130] sm:$0xff] %vm435, 0.0
        %475 = vst.msk [vmem:[%s420 + $0x138] sm:$0xff] %vm435, 0.0
        %476 = vst.msk [vmem:[%s420 + $0x140] sm:$0xff] %vm435, 0.0
        %477 = vst.msk [vmem:[%s420 + $0x148] sm:$0xff] %vm435, 0.0
        %478 = vst.msk [vmem:[%s420 + $0x150] sm:$0xff] %vm435, 0.0
        %479 = vst.msk [vmem:[%s420 + $0x158] sm:$0xff] %vm435, 0.0
        %480 = vst.msk [vmem:[%s420 + $0x160] sm:$0xff] %vm435, 0.0
        %481 = vst.msk [vmem:[%s420 + $0x168] sm:$0xff] %vm435, 0.0
        %482 = vst.msk [vmem:[%s420 + $0x170] sm:$0xff] %vm435, 0.0
        %483 = vst.msk [vmem:[%s420 + $0x178] sm:$0xff] %vm435, 0.0
        %484 = vst.msk [vmem:[%s420 + $0x180] sm:$0xff] %vm435, 0.0
        %485 = vst.msk [vmem:[%s420 + $0x188] sm:$0xff] %vm435, 0.0
        %486 = vst.msk [vmem:[%s420 + $0x190] sm:$0xff] %vm435, 0.0
        %487 = vst.msk [vmem:[%s420 + $0x198] sm:$0xff] %vm435, 0.0
        %488 = vst.msk [vmem:[%s420 + $0x1a0] sm:$0xff] %vm435, 0.0
        %489 = vst.msk [vmem:[%s420 + $0x1a8] sm:$0xff] %vm435, 0.0
        %490 = vst.msk [vmem:[%s420 + $0x1b0] sm:$0xff] %vm435, 0.0
        %491 = vst.msk [vmem:[%s420 + $0x1b8] sm:$0xff] %vm435, 0.0
        %492 = vst.msk [vmem:[%s420 + $0x1c0] sm:$0xff] %vm435, 0.0
        %493 = vst.msk [vmem:[%s420 + $0x1c8] sm:$0xff] %vm435, 0.0
        %494 = vst.msk [vmem:[%s420 + $0x1d0] sm:$0xff] %vm435, 0.0
        %495 = vst.msk [vmem:[%s420 + $0x1d8] sm:$0xff] %vm435, 0.0
        %496 = vst.msk [vmem:[%s420 + $0x1e0] sm:$0xff] %vm435, 0.0
        %497 = vst.msk [vmem:[%s420 + $0x1e8] sm:$0xff] %vm435, 0.0
        %498 = vst.msk [vmem:[%s420 + $0x1f0] sm:$0xff] %vm435, 0.0
        %499 = vst.msk [vmem:[%s420 + $0x1f8] sm:$0xff] %vm435, 0.0
      $region40: #{tpu_custom_call.1} parent=35 // pred_fallthru
        _
      // Predicated region
      $region41: #{tpu_custom_call.1} parent=35 // pred_check
        %p500 = pneg %p429
      $region42: #{tpu_custom_call.1} parent=35 // pred_check_branch
        %502 = sbr.rel (%p500) target = $region44
      $region43: #{tpu_custom_call.1} parent=35 // pred_region
        %v503 = vld [vmem:[%s364] sm:$0xff]
        %v504 = vld [vmem:[%s364 + $0x8] sm:$0xff]
        %v505 = vld [vmem:[%s364 + $0x10] sm:$0xff]
        %v506 = vld [vmem:[%s364 + $0x18] sm:$0xff]
        %v507 = vld [vmem:[%s364 + $0x20] sm:$0xff]
        %v508 = vld [vmem:[%s364 + $0x28] sm:$0xff]
        %v509 = vld [vmem:[%s364 + $0x30] sm:$0xff]
        %v510 = vld [vmem:[%s364 + $0x38] sm:$0xff]
        %v511 = vld [vmem:[%s364 + $0x40] sm:$0xff]
        %v512 = vld [vmem:[%s364 + $0x48] sm:$0xff]
        %v513 = vld [vmem:[%s364 + $0x50] sm:$0xff]
        %v514 = vld [vmem:[%s364 + $0x58] sm:$0xff]
        %v515 = vld [vmem:[%s364 + $0x60] sm:$0xff]
        %v516 = vld [vmem:[%s364 + $0x68] sm:$0xff]
        %v517 = vld [vmem:[%s364 + $0x70] sm:$0xff]
        %v518 = vld [vmem:[%s364 + $0x78] sm:$0xff]
        %v519 = vld [vmem:[%s364 + $0x80] sm:$0xff]
        %v520 = vld [vmem:[%s364 + $0x88] sm:$0xff]
        %v521 = vld [vmem:[%s364 + $0x90] sm:$0xff]
        %v522 = vld [vmem:[%s364 + $0x98] sm:$0xff]
        %v523 = vld [vmem:[%s364 + $0xa0] sm:$0xff]
        %v524 = vld [vmem:[%s364 + $0xa8] sm:$0xff]
        %v525 = vld [vmem:[%s364 + $0xb0] sm:$0xff]
        %v526 = vld [vmem:[%s364 + $0xb8] sm:$0xff]
        %v527 = vld [vmem:[%s364 + $0xc0] sm:$0xff]
        %v528 = vld [vmem:[%s364 + $0xc8] sm:$0xff]
        %v529 = vld [vmem:[%s364 + $0xd0] sm:$0xff]
        %v530 = vld [vmem:[%s364 + $0xd8] sm:$0xff]
        %v531 = vld [vmem:[%s364 + $0xe0] sm:$0xff]
        %v532 = vld [vmem:[%s364 + $0xe8] sm:$0xff]
        %v533 = vld [vmem:[%s364 + $0xf0] sm:$0xff]
        %v534 = vld [vmem:[%s364 + $0xf8] sm:$0xff]
        %v535 = vld [vmem:[%s364 + $0x100] sm:$0xff]
        %v536 = vld [vmem:[%s364 + $0x108] sm:$0xff]
        %v537 = vld [vmem:[%s364 + $0x110] sm:$0xff]
        %v538 = vld [vmem:[%s364 + $0x118] sm:$0xff]
        %v539 = vld [vmem:[%s364 + $0x120] sm:$0xff]
        %v540 = vld [vmem:[%s364 + $0x128] sm:$0xff]
        %v541 = vld [vmem:[%s364 + $0x130] sm:$0xff]
        %v542 = vld [vmem:[%s364 + $0x138] sm:$0xff]
        %v543 = vld [vmem:[%s364 + $0x140] sm:$0xff]
        %v544 = vld [vmem:[%s364 + $0x148] sm:$0xff]
        %v545 = vld [vmem:[%s364 + $0x150] sm:$0xff]
        %v546 = vld [vmem:[%s364 + $0x158] sm:$0xff]
        %v547 = vld [vmem:[%s364 + $0x160] sm:$0xff]
        %v548 = vld [vmem:[%s364 + $0x168] sm:$0xff]
        %v549 = vld [vmem:[%s364 + $0x170] sm:$0xff]
        %v550 = vld [vmem:[%s364 + $0x178] sm:$0xff]
        %v551 = vld [vmem:[%s364 + $0x180] sm:$0xff]
        %v552 = vld [vmem:[%s364 + $0x188] sm:$0xff]
        %v553 = vld [vmem:[%s364 + $0x190] sm:$0xff]
        %v554 = vld [vmem:[%s364 + $0x198] sm:$0xff]
        %v555 = vld [vmem:[%s364 + $0x1a0] sm:$0xff]
        %v556 = vld [vmem:[%s364 + $0x1a8] sm:$0xff]
        %v557 = vld [vmem:[%s364 + $0x1b0] sm:$0xff]
        %v558 = vld [vmem:[%s364 + $0x1b8] sm:$0xff]
        %v559 = vld [vmem:[%s364 + $0x1c0] sm:$0xff]
        %v560 = vld [vmem:[%s364 + $0x1c8] sm:$0xff]
        %v561 = vld [vmem:[%s364 + $0x1d0] sm:$0xff]
        %v562 = vld [vmem:[%s364 + $0x1d8] sm:$0xff]
        %v563 = vld [vmem:[%s364 + $0x1e0] sm:$0xff]
        %v564 = vld [vmem:[%s364 + $0x1e8] sm:$0xff]
        %v565 = vld [vmem:[%s364 + $0x1f0] sm:$0xff]
        %v566 = vld [vmem:[%s364 + $0x1f8] sm:$0xff]
        %v567 = vld [vmem:[%s378] sm:$0xff]
        %v568 = vld [vmem:[%s378 + $0x8] sm:$0xff]
        %v569 = vld [vmem:[%s378 + $0x10] sm:$0xff]
        %v570 = vld [vmem:[%s378 + $0x18] sm:$0xff]
        %vm571 = vcmask 64512
        %v573 = vsel %vm571, %v503, 0
        %v576 = vsel %vm571, %v504, 0
        %v579 = vsel %vm571, %v505, 0
        %v582 = vsel %vm571, %v506, 0
        %v585 = vsel %vm571, %v507, 0
        %v588 = vsel %vm571, %v508, 0
        %v591 = vsel %vm571, %v509, 0
        %v594 = vsel %vm571, %v510, 0
        %v597 = vsel %vm571, %v511, 0
        %v600 = vsel %vm571, %v512, 0
        %v603 = vsel %vm571, %v513, 0
        %v606 = vsel %vm571, %v514, 0
        %v609 = vsel %vm571, %v515, 0
        %v612 = vsel %vm571, %v516, 0
        %v615 = vsel %vm571, %v517, 0
        %v618 = vsel %vm571, %v518, 0
        %v621 = vsel %vm571, %v519, 0
        %v624 = vsel %vm571, %v520, 0
        %v627 = vsel %vm571, %v521, 0
        %v630 = vsel %vm571, %v522, 0
        %v633 = vsel %vm571, %v523, 0
        %v636 = vsel %vm571, %v524, 0
        %v639 = vsel %vm571, %v525, 0
        %v642 = vsel %vm571, %v526, 0
        %v645 = vsel %vm571, %v527, 0
        %v648 = vsel %vm571, %v528, 0
        %v651 = vsel %vm571, %v529, 0
        %v654 = vsel %vm571, %v530, 0
        %v657 = vsel %vm571, %v531, 0
        %v660 = vsel %vm571, %v532, 0
        %v663 = vsel %vm571, %v533, 0
        %v666 = vsel %vm571, %v534, 0
        %v669 = vsel %vm571, %v535, 0
        %v672 = vsel %vm571, %v536, 0
        %v675 = vsel %vm571, %v537, 0
        %v678 = vsel %vm571, %v538, 0
        %v681 = vsel %vm571, %v539, 0
        %v684 = vsel %vm571, %v540, 0
        %v687 = vsel %vm571, %v541, 0
        %v690 = vsel %vm571, %v542, 0
        %v693 = vsel %vm571, %v543, 0
        %v696 = vsel %vm571, %v544, 0
        %v699 = vsel %vm571, %v545, 0
        %v702 = vsel %vm571, %v546, 0
        %v705 = vsel %vm571, %v547, 0
        %v708 = vsel %vm571, %v548, 0
        %v711 = vsel %vm571, %v549, 0
        %v714 = vsel %vm571, %v550, 0
        %v717 = vsel %vm571, %v551, 0
        %v720 = vsel %vm571, %v552, 0
        %v723 = vsel %vm571, %v553, 0
        %v726 = vsel %vm571, %v554, 0
        %v729 = vsel %vm571, %v555, 0
        %v732 = vsel %vm571, %v556, 0
        %v735 = vsel %vm571, %v557, 0
        %v738 = vsel %vm571, %v558, 0
        %v741 = vsel %vm571, %v559, 0
        %v744 = vsel %vm571, %v560, 0
        %v747 = vsel %vm571, %v561, 0
        %v750 = vsel %vm571, %v562, 0
        %v753 = vsel %vm571, %v563, 0
        %v756 = vsel %vm571, %v564, 0
        %v759 = vsel %vm571, %v565, 0
        %v762 = vsel %vm571, %v566, 0
        %764 = vmatprep.subr.mxu0 0.0
        %765 = vmatpush1.msra.mxu0 0.0
        %766 = vmatprep.subr.mxu0 0.0
        %767 = vmatpush1.msra.mxu0 0.0
        %768 = vmatprep.subr.mxu0 0.0
        %769 = vmatpush1.msra.mxu0 0.0
        %770 = vmatprep.subr.mxu0 0.0
        %771 = vmatpush1.msra.mxu0 0.0
        %772 = vmatprep.subr.mxu0 0.0
        %773 = vmatpush1.msra.mxu0 0.0
        %774 = vmatprep.subr.mxu0 0.0
        %775 = vmatpush1.msra.mxu0 0.0
        %776 = vmatprep.subr.mxu0 0.0
        %777 = vmatpush1.msra.mxu0 0.0
        %778 = vmatprep.subr.mxu0 0.0
        %779 = vmatpush1.msra.mxu0 0.0
        %780 = vmatprep.subr.mxu0 0.0
        %781 = vmatpush1.msra.mxu0 0.0
        %782 = vmatprep.subr.mxu0 0.0
        %783 = vmatpush1.msra.mxu0 0.0
        %784 = vmatprep.subr.mxu0 0.0
        %785 = vmatpush1.msra.mxu0 0.0
        %786 = vmatprep.subr.mxu0 0.0
        %787 = vmatpush1.msra.mxu0 0.0
        %788 = vmatprep.subr.mxu0 0.0
        %789 = vmatpush1.msra.mxu0 0.0
        %790 = vmatprep.subr.mxu0 0.0
        %791 = vmatpush1.msra.mxu0 0.0
        %792 = vmatprep.subr.mxu0 0.0
        %793 = vmatpush1.msra.mxu0 0.0
        %794 = vmatprep.subr.mxu0 %v568
        %795 = vmatpush1.msra.mxu0 %v567
        %796 = vmatprep.subr.mxu0 0.0
        %797 = vmatpush2.msra.mxu0 0.0
        %798 = vmatprep.subr.mxu0 0.0
        %799 = vmatpush2.msra.mxu0 0.0
        %800 = vmatprep.subr.mxu0 0.0
        %801 = vmatpush2.msra.mxu0 0.0
        %802 = vmatprep.subr.mxu0 0.0
        %803 = vmatpush2.msra.mxu0 0.0
        %804 = vmatprep.subr.mxu0 0.0
        %805 = vmatpush2.msra.mxu0 0.0
        %806 = vmatprep.subr.mxu0 0.0
        %807 = vmatpush2.msra.mxu0 0.0
        %808 = vmatprep.subr.mxu0 0.0
        %809 = vmatpush2.msra.mxu0 0.0
        %810 = vmatprep.subr.mxu0 0.0
        %811 = vmatpush2.msra.mxu0 0.0
        %812 = vmatprep.subr.mxu0 0.0
        %813 = vmatpush2.msra.mxu0 0.0
        %814 = vmatprep.subr.mxu0 0.0
        %815 = vmatpush2.msra.mxu0 0.0
        %816 = vmatprep.subr.mxu0 0.0
        %817 = vmatpush2.msra.mxu0 0.0
        %818 = vmatprep.subr.mxu0 0.0
        %819 = vmatpush2.msra.mxu0 0.0
        %820 = vmatprep.subr.mxu0 0.0
        %821 = vmatpush2.msra.mxu0 0.0
        %822 = vmatprep.subr.mxu0 0.0
        %823 = vmatpush2.msra.mxu0 0.0
        %824 = vmatprep.subr.mxu0 0.0
        %825 = vmatpush2.msra.mxu0 0.0
        %826 = vmatprep.subr.mxu0 0.0
        %827 = vmatpush2.msra.mxu0 0.0
        %828 = vmatprep.mubr.f32.mxu0 0.0
        %829 = vmatmul.mubr.f32.gmra.mxu0 %v573
        %v830 = vpop.f32.mrf.mxu0
        %v831 = vadd.f32 0.0, %v830
        %v832 = vpop.f32.mrf.mxu0
        %v833 = vadd.f32 0.0, %v832
        %834 = vmatprep.mubr.f32.mxu0 0.0
        %835 = vmatmul.mubr.f32.gmra.mxu0 %v576
        %v836 = vpop.f32.mrf.mxu0
        %v837 = vadd.f32 0.0, %v836
        %v838 = vpop.f32.mrf.mxu0
        %v839 = vadd.f32 0.0, %v838
        %840 = vmatprep.mubr.f32.mxu0 0.0
        %841 = vmatmul.mubr.f32.gmra.mxu0 %v579
        %v842 = vpop.f32.mrf.mxu0
        %v843 = vadd.f32 0.0, %v842
        %v844 = vpop.f32.mrf.mxu0
        %v845 = vadd.f32 0.0, %v844
        %846 = vmatprep.mubr.f32.mxu0 0.0
        %847 = vmatmul.mubr.f32.gmra.mxu0 %v582
        %v848 = vpop.f32.mrf.mxu0
        %v849 = vadd.f32 0.0, %v848
        %v850 = vpop.f32.mrf.mxu0
        %v851 = vadd.f32 0.0, %v850
        %852 = vmatprep.mubr.f32.mxu0 0.0
        %853 = vmatmul.mubr.f32.gmra.mxu0 %v585
        %v854 = vpop.f32.mrf.mxu0
        %v855 = vadd.f32 0.0, %v854
        %v856 = vpop.f32.mrf.mxu0
        %v857 = vadd.f32 0.0, %v856
        %858 = vmatprep.mubr.f32.mxu0 0.0
        %859 = vmatmul.mubr.f32.gmra.mxu0 %v588
        %v860 = vpop.f32.mrf.mxu0
        %v861 = vadd.f32 0.0, %v860
        %v862 = vpop.f32.mrf.mxu0
        %v863 = vadd.f32 0.0, %v862
        %864 = vmatprep.mubr.f32.mxu0 0.0
        %865 = vmatmul.mubr.f32.gmra.mxu0 %v591
        %v866 = vpop.f32.mrf.mxu0
        %v867 = vadd.f32 0.0, %v866
        %v868 = vpop.f32.mrf.mxu0
        %v869 = vadd.f32 0.0, %v868
        %870 = vmatprep.mubr.f32.mxu0 0.0
        %871 = vmatmul.mubr.f32.gmra.mxu0 %v594
        %v872 = vpop.f32.mrf.mxu0
        %v873 = vadd.f32 0.0, %v872
        %v874 = vpop.f32.mrf.mxu0
        %v875 = vadd.f32 0.0, %v874
        %876 = vmatprep.mubr.f32.mxu0 0.0
        %877 = vmatmul.mubr.f32.gmra.mxu0 %v597
        %v878 = vpop.f32.mrf.mxu0
        %v879 = vadd.f32 0.0, %v878
        %v880 = vpop.f32.mrf.mxu0
        %v881 = vadd.f32 0.0, %v880
        %882 = vmatprep.mubr.f32.mxu0 0.0
        %883 = vmatmul.mubr.f32.gmra.mxu0 %v600
        %v884 = vpop.f32.mrf.mxu0
        %v885 = vadd.f32 0.0, %v884
        %v886 = vpop.f32.mrf.mxu0
        %v887 = vadd.f32 0.0, %v886
        %888 = vmatprep.mubr.f32.mxu0 0.0
        %889 = vmatmul.mubr.f32.gmra.mxu0 %v603
        %v890 = vpop.f32.mrf.mxu0
        %v891 = vadd.f32 0.0, %v890
        %v892 = vpop.f32.mrf.mxu0
        %v893 = vadd.f32 0.0, %v892
        %894 = vmatprep.mubr.f32.mxu0 0.0
        %895 = vmatmul.mubr.f32.gmra.mxu0 %v606
        %v896 = vpop.f32.mrf.mxu0
        %v897 = vadd.f32 0.0, %v896
        %v898 = vpop.f32.mrf.mxu0
        %v899 = vadd.f32 0.0, %v898
        %900 = vmatprep.mubr.f32.mxu0 0.0
        %901 = vmatmul.mubr.f32.gmra.mxu0 %v609
        %v902 = vpop.f32.mrf.mxu0
        %v903 = vadd.f32 0.0, %v902
        %v904 = vpop.f32.mrf.mxu0
        %v905 = vadd.f32 0.0, %v904
        %906 = vmatprep.mubr.f32.mxu0 0.0
        %907 = vmatmul.mubr.f32.gmra.mxu0 %v612
        %v908 = vpop.f32.mrf.mxu0
        %v909 = vadd.f32 0.0, %v908
        %v910 = vpop.f32.mrf.mxu0
        %v911 = vadd.f32 0.0, %v910
        %912 = vmatprep.mubr.f32.mxu0 0.0
        %913 = vmatmul.mubr.f32.gmra.mxu0 %v615
        %v914 = vpop.f32.mrf.mxu0
        %v915 = vadd.f32 0.0, %v914
        %v916 = vpop.f32.mrf.mxu0
        %v917 = vadd.f32 0.0, %v916
        %918 = vmatprep.mubr.f32.mxu0 0.0
        %919 = vmatmul.mubr.f32.gmra.mxu0 %v618
        %v920 = vpop.f32.mrf.mxu0
        %v921 = vadd.f32 0.0, %v920
        %v922 = vpop.f32.mrf.mxu0
        %v923 = vadd.f32 0.0, %v922
        %924 = vmatprep.mubr.f32.mxu0 0.0
        %925 = vmatmul.mubr.f32.gmra.mxu0 %v621
        %v926 = vpop.f32.mrf.mxu0
        %v927 = vadd.f32 0.0, %v926
        %v928 = vpop.f32.mrf.mxu0
        %v929 = vadd.f32 0.0, %v928
        %930 = vmatprep.mubr.f32.mxu0 0.0
        %931 = vmatmul.mubr.f32.gmra.mxu0 %v624
        %v932 = vpop.f32.mrf.mxu0
        %v933 = vadd.f32 0.0, %v932
        %v934 = vpop.f32.mrf.mxu0
        %v935 = vadd.f32 0.0, %v934
        %936 = vmatprep.mubr.f32.mxu0 0.0
        %937 = vmatmul.mubr.f32.gmra.mxu0 %v627
        %v938 = vpop.f32.mrf.mxu0
        %v939 = vadd.f32 0.0, %v938
        %v940 = vpop.f32.mrf.mxu0
        %v941 = vadd.f32 0.0, %v940
        %942 = vmatprep.mubr.f32.mxu0 0.0
        %943 = vmatmul.mubr.f32.gmra.mxu0 %v630
        %v944 = vpop.f32.mrf.mxu0
        %v945 = vadd.f32 0.0, %v944
        %v946 = vpop.f32.mrf.mxu0
        %v947 = vadd.f32 0.0, %v946
        %948 = vmatprep.mubr.f32.mxu0 0.0
        %949 = vmatmul.mubr.f32.gmra.mxu0 %v633
        %v950 = vpop.f32.mrf.mxu0
        %v951 = vadd.f32 0.0, %v950
        %v952 = vpop.f32.mrf.mxu0
        %v953 = vadd.f32 0.0, %v952
        %954 = vmatprep.mubr.f32.mxu0 0.0
        %955 = vmatmul.mubr.f32.gmra.mxu0 %v636
        %v956 = vpop.f32.mrf.mxu0
        %v957 = vadd.f32 0.0, %v956
        %v958 = vpop.f32.mrf.mxu0
        %v959 = vadd.f32 0.0, %v958
        %960 = vmatprep.mubr.f32.mxu0 0.0
        %961 = vmatmul.mubr.f32.gmra.mxu0 %v639
        %v962 = vpop.f32.mrf.mxu0
        %v963 = vadd.f32 0.0, %v962
        %v964 = vpop.f32.mrf.mxu0
        %v965 = vadd.f32 0.0, %v964
        %966 = vmatprep.mubr.f32.mxu0 0.0
        %967 = vmatmul.mubr.f32.gmra.mxu0 %v642
        %v968 = vpop.f32.mrf.mxu0
        %v969 = vadd.f32 0.0, %v968
        %v970 = vpop.f32.mrf.mxu0
        %v971 = vadd.f32 0.0, %v970
        %972 = vmatprep.mubr.f32.mxu0 0.0
        %973 = vmatmul.mubr.f32.gmra.mxu0 %v645
        %v974 = vpop.f32.mrf.mxu0
        %v975 = vadd.f32 0.0, %v974
        %v976 = vpop.f32.mrf.mxu0
        %v977 = vadd.f32 0.0, %v976
        %978 = vmatprep.mubr.f32.mxu0 0.0
        %979 = vmatmul.mubr.f32.gmra.mxu0 %v648
        %v980 = vpop.f32.mrf.mxu0
        %v981 = vadd.f32 0.0, %v980
        %v982 = vpop.f32.mrf.mxu0
        %v983 = vadd.f32 0.0, %v982
        %984 = vmatprep.mubr.f32.mxu0 0.0
        %985 = vmatmul.mubr.f32.gmra.mxu0 %v651
        %v986 = vpop.f32.mrf.mxu0
        %v987 = vadd.f32 0.0, %v986
        %v988 = vpop.f32.mrf.mxu0
        %v989 = vadd.f32 0.0, %v988
        %990 = vmatprep.mubr.f32.mxu0 0.0
        %991 = vmatmul.mubr.f32.gmra.mxu0 %v654
        %v992 = vpop.f32.mrf.mxu0
        %v993 = vadd.f32 0.0, %v992
        %v994 = vpop.f32.mrf.mxu0
        %v995 = vadd.f32 0.0, %v994
        %996 = vmatprep.mubr.f32.mxu0 0.0
        %997 = vmatmul.mubr.f32.gmra.mxu0 %v657
        %v998 = vpop.f32.mrf.mxu0
        %v999 = vadd.f32 0.0, %v998
        %v1000 = vpop.f32.mrf.mxu0
        %v1001 = vadd.f32 0.0, %v1000
        %1002 = vmatprep.mubr.f32.mxu0 0.0
        %1003 = vmatmul.mubr.f32.gmra.mxu0 %v660
        %v1004 = vpop.f32.mrf.mxu0
        %v1005 = vadd.f32 0.0, %v1004
        %v1006 = vpop.f32.mrf.mxu0
        %v1007 = vadd.f32 0.0, %v1006
        %1008 = vmatprep.mubr.f32.mxu0 0.0
        %1009 = vmatmul.mubr.f32.gmra.mxu0 %v663
        %v1010 = vpop.f32.mrf.mxu0
        %v1011 = vadd.f32 0.0, %v1010
        %v1012 = vpop.f32.mrf.mxu0
        %v1013 = vadd.f32 0.0, %v1012
        %1014 = vmatprep.mubr.f32.mxu0 0.0
        %1015 = vmatmul.mubr.f32.gmra.mxu0 %v666
        %v1016 = vpop.f32.mrf.mxu0
        %v1017 = vadd.f32 0.0, %v1016
        %v1018 = vpop.f32.mrf.mxu0
        %v1019 = vadd.f32 0.0, %v1018
        %1020 = vmatprep.mubr.f32.mxu0 0.0
        %1021 = vmatmul.mubr.f32.gmra.mxu0 %v669
        %v1022 = vpop.f32.mrf.mxu0
        %v1023 = vadd.f32 0.0, %v1022
        %v1024 = vpop.f32.mrf.mxu0
        %v1025 = vadd.f32 0.0, %v1024
        %1026 = vmatprep.mubr.f32.mxu0 0.0
        %1027 = vmatmul.mubr.f32.gmra.mxu0 %v672
        %v1028 = vpop.f32.mrf.mxu0
        %v1029 = vadd.f32 0.0, %v1028
        %v1030 = vpop.f32.mrf.mxu0
        %v1031 = vadd.f32 0.0, %v1030
        %1032 = vmatprep.mubr.f32.mxu0 0.0
        %1033 = vmatmul.mubr.f32.gmra.mxu0 %v675
        %v1034 = vpop.f32.mrf.mxu0
        %v1035 = vadd.f32 0.0, %v1034
        %v1036 = vpop.f32.mrf.mxu0
        %v1037 = vadd.f32 0.0, %v1036
        %1038 = vmatprep.mubr.f32.mxu0 0.0
        %1039 = vmatmul.mubr.f32.gmra.mxu0 %v678
        %v1040 = vpop.f32.mrf.mxu0
        %v1041 = vadd.f32 0.0, %v1040
        %v1042 = vpop.f32.mrf.mxu0
        %v1043 = vadd.f32 0.0, %v1042
        %1044 = vmatprep.mubr.f32.mxu0 0.0
        %1045 = vmatmul.mubr.f32.gmra.mxu0 %v681
        %v1046 = vpop.f32.mrf.mxu0
        %v1047 = vadd.f32 0.0, %v1046
        %v1048 = vpop.f32.mrf.mxu0
        %v1049 = vadd.f32 0.0, %v1048
        %1050 = vmatprep.mubr.f32.mxu0 0.0
        %1051 = vmatmul.mubr.f32.gmra.mxu0 %v684
        %v1052 = vpop.f32.mrf.mxu0
        %v1053 = vadd.f32 0.0, %v1052
        %v1054 = vpop.f32.mrf.mxu0
        %v1055 = vadd.f32 0.0, %v1054
        %1056 = vmatprep.mubr.f32.mxu0 0.0
        %1057 = vmatmul.mubr.f32.gmra.mxu0 %v687
        %v1058 = vpop.f32.mrf.mxu0
        %v1059 = vadd.f32 0.0, %v1058
        %v1060 = vpop.f32.mrf.mxu0
        %v1061 = vadd.f32 0.0, %v1060
        %1062 = vmatprep.mubr.f32.mxu0 0.0
        %1063 = vmatmul.mubr.f32.gmra.mxu0 %v690
        %v1064 = vpop.f32.mrf.mxu0
        %v1065 = vadd.f32 0.0, %v1064
        %v1066 = vpop.f32.mrf.mxu0
        %v1067 = vadd.f32 0.0, %v1066
        %1068 = vmatprep.mubr.f32.mxu0 0.0
        %1069 = vmatmul.mubr.f32.gmra.mxu0 %v693
        %v1070 = vpop.f32.mrf.mxu0
        %v1071 = vadd.f32 0.0, %v1070
        %v1072 = vpop.f32.mrf.mxu0
        %v1073 = vadd.f32 0.0, %v1072
        %1074 = vmatprep.mubr.f32.mxu0 0.0
        %1075 = vmatmul.mubr.f32.gmra.mxu0 %v696
        %v1076 = vpop.f32.mrf.mxu0
        %v1077 = vadd.f32 0.0, %v1076
        %v1078 = vpop.f32.mrf.mxu0
        %v1079 = vadd.f32 0.0, %v1078
        %1080 = vmatprep.mubr.f32.mxu0 0.0
        %1081 = vmatmul.mubr.f32.gmra.mxu0 %v699
        %v1082 = vpop.f32.mrf.mxu0
        %v1083 = vadd.f32 0.0, %v1082
        %v1084 = vpop.f32.mrf.mxu0
        %v1085 = vadd.f32 0.0, %v1084
        %1086 = vmatprep.mubr.f32.mxu0 0.0
        %1087 = vmatmul.mubr.f32.gmra.mxu0 %v702
        %v1088 = vpop.f32.mrf.mxu0
        %v1089 = vadd.f32 0.0, %v1088
        %v1090 = vpop.f32.mrf.mxu0
        %v1091 = vadd.f32 0.0, %v1090
        %1092 = vmatprep.mubr.f32.mxu0 0.0
        %1093 = vmatmul.mubr.f32.gmra.mxu0 %v705
        %v1094 = vpop.f32.mrf.mxu0
        %v1095 = vadd.f32 0.0, %v1094
        %v1096 = vpop.f32.mrf.mxu0
        %v1097 = vadd.f32 0.0, %v1096
        %1098 = vmatprep.mubr.f32.mxu0 0.0
        %1099 = vmatmul.mubr.f32.gmra.mxu0 %v708
        %v1100 = vpop.f32.mrf.mxu0
        %v1101 = vadd.f32 0.0, %v1100
        %v1102 = vpop.f32.mrf.mxu0
        %v1103 = vadd.f32 0.0, %v1102
        %1104 = vmatprep.mubr.f32.mxu0 0.0
        %1105 = vmatmul.mubr.f32.gmra.mxu0 %v711
        %v1106 = vpop.f32.mrf.mxu0
        %v1107 = vadd.f32 0.0, %v1106
        %v1108 = vpop.f32.mrf.mxu0
        %v1109 = vadd.f32 0.0, %v1108
        %1110 = vmatprep.mubr.f32.mxu0 0.0
        %1111 = vmatmul.mubr.f32.gmra.mxu0 %v714
        %v1112 = vpop.f32.mrf.mxu0
        %v1113 = vadd.f32 0.0, %v1112
        %v1114 = vpop.f32.mrf.mxu0
        %v1115 = vadd.f32 0.0, %v1114
        %1116 = vmatprep.mubr.f32.mxu0 0.0
        %1117 = vmatmul.mubr.f32.gmra.mxu0 %v717
        %v1118 = vpop.f32.mrf.mxu0
        %v1119 = vadd.f32 0.0, %v1118
        %v1120 = vpop.f32.mrf.mxu0
        %v1121 = vadd.f32 0.0, %v1120
        %1122 = vmatprep.mubr.f32.mxu0 0.0
        %1123 = vmatmul.mubr.f32.gmra.mxu0 %v720
        %v1124 = vpop.f32.mrf.mxu0
        %v1125 = vadd.f32 0.0, %v1124
        %v1126 = vpop.f32.mrf.mxu0
        %v1127 = vadd.f32 0.0, %v1126
        %1128 = vmatprep.mubr.f32.mxu0 0.0
        %1129 = vmatmul.mubr.f32.gmra.mxu0 %v723
        %v1130 = vpop.f32.mrf.mxu0
        %v1131 = vadd.f32 0.0, %v1130
        %v1132 = vpop.f32.mrf.mxu0
        %v1133 = vadd.f32 0.0, %v1132
        %1134 = vmatprep.mubr.f32.mxu0 0.0
        %1135 = vmatmul.mubr.f32.gmra.mxu0 %v726
        %v1136 = vpop.f32.mrf.mxu0
        %v1137 = vadd.f32 0.0, %v1136
        %v1138 = vpop.f32.mrf.mxu0
        %v1139 = vadd.f32 0.0, %v1138
        %1140 = vmatprep.mubr.f32.mxu0 0.0
        %1141 = vmatmul.mubr.f32.gmra.mxu0 %v729
        %v1142 = vpop.f32.mrf.mxu0
        %v1143 = vadd.f32 0.0, %v1142
        %v1144 = vpop.f32.mrf.mxu0
        %v1145 = vadd.f32 0.0, %v1144
        %1146 = vmatprep.mubr.f32.mxu0 0.0
        %1147 = vmatmul.mubr.f32.gmra.mxu0 %v732
        %v1148 = vpop.f32.mrf.mxu0
        %v1149 = vadd.f32 0.0, %v1148
        %v1150 = vpop.f32.mrf.mxu0
        %v1151 = vadd.f32 0.0, %v1150
        %1152 = vmatprep.mubr.f32.mxu0 0.0
        %1153 = vmatmul.mubr.f32.gmra.mxu0 %v735
        %v1154 = vpop.f32.mrf.mxu0
        %v1155 = vadd.f32 0.0, %v1154
        %v1156 = vpop.f32.mrf.mxu0
        %v1157 = vadd.f32 0.0, %v1156
        %1158 = vmatprep.mubr.f32.mxu0 0.0
        %1159 = vmatmul.mubr.f32.gmra.mxu0 %v738
        %v1160 = vpop.f32.mrf.mxu0
        %v1161 = vadd.f32 0.0, %v1160
        %v1162 = vpop.f32.mrf.mxu0
        %v1163 = vadd.f32 0.0, %v1162
        %1164 = vmatprep.mubr.f32.mxu0 0.0
        %1165 = vmatmul.mubr.f32.gmra.mxu0 %v741
        %v1166 = vpop.f32.mrf.mxu0
        %v1167 = vadd.f32 0.0, %v1166
        %v1168 = vpop.f32.mrf.mxu0
        %v1169 = vadd.f32 0.0, %v1168
        %1170 = vmatprep.mubr.f32.mxu0 0.0
        %1171 = vmatmul.mubr.f32.gmra.mxu0 %v744
        %v1172 = vpop.f32.mrf.mxu0
        %v1173 = vadd.f32 0.0, %v1172
        %v1174 = vpop.f32.mrf.mxu0
        %v1175 = vadd.f32 0.0, %v1174
        %1176 = vmatprep.mubr.f32.mxu0 0.0
        %1177 = vmatmul.mubr.f32.gmra.mxu0 %v747
        %v1178 = vpop.f32.mrf.mxu0
        %v1179 = vadd.f32 0.0, %v1178
        %v1180 = vpop.f32.mrf.mxu0
        %v1181 = vadd.f32 0.0, %v1180
        %1182 = vmatprep.mubr.f32.mxu0 0.0
        %1183 = vmatmul.mubr.f32.gmra.mxu0 %v750
        %v1184 = vpop.f32.mrf.mxu0
        %v1185 = vadd.f32 0.0, %v1184
        %v1186 = vpop.f32.mrf.mxu0
        %v1187 = vadd.f32 0.0, %v1186
        %1188 = vmatprep.mubr.f32.mxu0 0.0
        %1189 = vmatmul.mubr.f32.gmra.mxu0 %v753
        %v1190 = vpop.f32.mrf.mxu0
        %v1191 = vadd.f32 0.0, %v1190
        %v1192 = vpop.f32.mrf.mxu0
        %v1193 = vadd.f32 0.0, %v1192
        %1194 = vmatprep.mubr.f32.mxu0 0.0
        %1195 = vmatmul.mubr.f32.gmra.mxu0 %v756
        %v1196 = vpop.f32.mrf.mxu0
        %v1197 = vadd.f32 0.0, %v1196
        %v1198 = vpop.f32.mrf.mxu0
        %v1199 = vadd.f32 0.0, %v1198
        %1200 = vmatprep.mubr.f32.mxu0 0.0
        %1201 = vmatmul.mubr.f32.gmra.mxu0 %v759
        %v1202 = vpop.f32.mrf.mxu0
        %v1203 = vadd.f32 0.0, %v1202
        %v1204 = vpop.f32.mrf.mxu0
        %v1205 = vadd.f32 0.0, %v1204
        %1206 = vmatprep.mubr.f32.mxu0 0.0
        %1207 = vmatmul.mubr.f32.gmra.mxu0 %v762
        %v1208 = vpop.f32.mrf.mxu0
        %v1209 = vadd.f32 0.0, %v1208
        %v1210 = vpop.f32.mrf.mxu0
        %v1211 = vadd.f32 0.0, %v1210
        %1212 = vdwg.mxu0
        %1213 = vmatprep.subr.mxu0 0.0
        %1214 = vmatpush1.msra.mxu0 0.0
        %1215 = vmatprep.subr.mxu0 0.0
        %1216 = vmatpush1.msra.mxu0 0.0
        %1217 = vmatprep.subr.mxu0 0.0
        %1218 = vmatpush1.msra.mxu0 0.0
        %1219 = vmatprep.subr.mxu0 0.0
        %1220 = vmatpush1.msra.mxu0 0.0
        %1221 = vmatprep.subr.mxu0 0.0
        %1222 = vmatpush1.msra.mxu0 0.0
        %1223 = vmatprep.subr.mxu0 0.0
        %1224 = vmatpush1.msra.mxu0 0.0
        %1225 = vmatprep.subr.mxu0 0.0
        %1226 = vmatpush1.msra.mxu0 0.0
        %1227 = vmatprep.subr.mxu0 0.0
        %1228 = vmatpush1.msra.mxu0 0.0
        %1229 = vmatprep.subr.mxu0 0.0
        %1230 = vmatpush1.msra.mxu0 0.0
        %1231 = vmatprep.subr.mxu0 0.0
        %1232 = vmatpush1.msra.mxu0 0.0
        %1233 = vmatprep.subr.mxu0 0.0
        %1234 = vmatpush1.msra.mxu0 0.0
        %1235 = vmatprep.subr.mxu0 0.0
        %1236 = vmatpush1.msra.mxu0 0.0
        %1237 = vmatprep.subr.mxu0 0.0
        %1238 = vmatpush1.msra.mxu0 0.0
        %1239 = vmatprep.subr.mxu0 0.0
        %1240 = vmatpush1.msra.mxu0 0.0
        %1241 = vmatprep.subr.mxu0 0.0
        %1242 = vmatpush1.msra.mxu0 0.0
        %1243 = vmatprep.subr.mxu0 %v570
        %1244 = vmatpush1.msra.mxu0 %v569
        %1245 = vmatprep.subr.mxu0 0.0
        %1246 = vmatpush2.msra.mxu0 0.0
        %1247 = vmatprep.subr.mxu0 0.0
        %1248 = vmatpush2.msra.mxu0 0.0
        %1249 = vmatprep.subr.mxu0 0.0
        %1250 = vmatpush2.msra.mxu0 0.0
        %1251 = vmatprep.subr.mxu0 0.0
        %1252 = vmatpush2.msra.mxu0 0.0
        %1253 = vmatprep.subr.mxu0 0.0
        %1254 = vmatpush2.msra.mxu0 0.0
        %1255 = vmatprep.subr.mxu0 0.0
        %1256 = vmatpush2.msra.mxu0 0.0
        %1257 = vmatprep.subr.mxu0 0.0
        %1258 = vmatpush2.msra.mxu0 0.0
        %1259 = vmatprep.subr.mxu0 0.0
        %1260 = vmatpush2.msra.mxu0 0.0
        %1261 = vmatprep.subr.mxu0 0.0
        %1262 = vmatpush2.msra.mxu0 0.0
        %1263 = vmatprep.subr.mxu0 0.0
        %1264 = vmatpush2.msra.mxu0 0.0
        %1265 = vmatprep.subr.mxu0 0.0
        %1266 = vmatpush2.msra.mxu0 0.0
        %1267 = vmatprep.subr.mxu0 0.0
        %1268 = vmatpush2.msra.mxu0 0.0
        %1269 = vmatprep.subr.mxu0 0.0
        %1270 = vmatpush2.msra.mxu0 0.0
        %1271 = vmatprep.subr.mxu0 0.0
        %1272 = vmatpush2.msra.mxu0 0.0
        %1273 = vmatprep.subr.mxu0 0.0
        %1274 = vmatpush2.msra.mxu0 0.0
        %1275 = vmatprep.subr.mxu0 0.0
        %1276 = vmatpush2.msra.mxu0 0.0
        %1277 = vmatprep.mubr.f32.mxu0 0.0
        %1278 = vmatmul.mubr.f32.gmra.mxu0 %v573
        %v1279 = vpop.f32.mrf.mxu0
        %v1280 = vadd.f32 0.0, %v1279
        %v1281 = vpop.f32.mrf.mxu0
        %v1282 = vadd.f32 0.0, %v1281
        %1283 = vmatprep.mubr.f32.mxu0 0.0
        %1284 = vmatmul.mubr.f32.gmra.mxu0 %v576
        %v1285 = vpop.f32.mrf.mxu0
        %v1286 = vadd.f32 0.0, %v1285
        %v1287 = vpop.f32.mrf.mxu0
        %v1288 = vadd.f32 0.0, %v1287
        %1289 = vmatprep.mubr.f32.mxu0 0.0
        %1290 = vmatmul.mubr.f32.gmra.mxu0 %v579
        %v1291 = vpop.f32.mrf.mxu0
        %v1292 = vadd.f32 0.0, %v1291
        %v1293 = vpop.f32.mrf.mxu0
        %v1294 = vadd.f32 0.0, %v1293
        %1295 = vmatprep.mubr.f32.mxu0 0.0
        %1296 = vmatmul.mubr.f32.gmra.mxu0 %v582
        %v1297 = vpop.f32.mrf.mxu0
        %v1298 = vadd.f32 0.0, %v1297
        %v1299 = vpop.f32.mrf.mxu0
        %v1300 = vadd.f32 0.0, %v1299
        %1301 = vmatprep.mubr.f32.mxu0 0.0
        %1302 = vmatmul.mubr.f32.gmra.mxu0 %v585
        %v1303 = vpop.f32.mrf.mxu0
        %v1304 = vadd.f32 0.0, %v1303
        %v1305 = vpop.f32.mrf.mxu0
        %v1306 = vadd.f32 0.0, %v1305
        %1307 = vmatprep.mubr.f32.mxu0 0.0
        %1308 = vmatmul.mubr.f32.gmra.mxu0 %v588
        %v1309 = vpop.f32.mrf.mxu0
        %v1310 = vadd.f32 0.0, %v1309
        %v1311 = vpop.f32.mrf.mxu0
        %v1312 = vadd.f32 0.0, %v1311
        %1313 = vmatprep.mubr.f32.mxu0 0.0
        %1314 = vmatmul.mubr.f32.gmra.mxu0 %v591
        %v1315 = vpop.f32.mrf.mxu0
        %v1316 = vadd.f32 0.0, %v1315
        %v1317 = vpop.f32.mrf.mxu0
        %v1318 = vadd.f32 0.0, %v1317
        %1319 = vmatprep.mubr.f32.mxu0 0.0
        %1320 = vmatmul.mubr.f32.gmra.mxu0 %v594
        %v1321 = vpop.f32.mrf.mxu0
        %v1322 = vadd.f32 0.0, %v1321
        %v1323 = vpop.f32.mrf.mxu0
        %v1324 = vadd.f32 0.0, %v1323
        %1325 = vmatprep.mubr.f32.mxu0 0.0
        %1326 = vmatmul.mubr.f32.gmra.mxu0 %v597
        %v1327 = vpop.f32.mrf.mxu0
        %v1328 = vadd.f32 0.0, %v1327
        %v1329 = vpop.f32.mrf.mxu0
        %v1330 = vadd.f32 0.0, %v1329
        %1331 = vmatprep.mubr.f32.mxu0 0.0
        %1332 = vmatmul.mubr.f32.gmra.mxu0 %v600
        %v1333 = vpop.f32.mrf.mxu0
        %v1334 = vadd.f32 0.0, %v1333
        %v1335 = vpop.f32.mrf.mxu0
        %v1336 = vadd.f32 0.0, %v1335
        %1337 = vmatprep.mubr.f32.mxu0 0.0
        %1338 = vmatmul.mubr.f32.gmra.mxu0 %v603
        %v1339 = vpop.f32.mrf.mxu0
        %v1340 = vadd.f32 0.0, %v1339
        %v1341 = vpop.f32.mrf.mxu0
        %v1342 = vadd.f32 0.0, %v1341
        %1343 = vmatprep.mubr.f32.mxu0 0.0
        %1344 = vmatmul.mubr.f32.gmra.mxu0 %v606
        %v1345 = vpop.f32.mrf.mxu0
        %v1346 = vadd.f32 0.0, %v1345
        %v1347 = vpop.f32.mrf.mxu0
        %v1348 = vadd.f32 0.0, %v1347
        %1349 = vmatprep.mubr.f32.mxu0 0.0
        %1350 = vmatmul.mubr.f32.gmra.mxu0 %v609
        %v1351 = vpop.f32.mrf.mxu0
        %v1352 = vadd.f32 0.0, %v1351
        %v1353 = vpop.f32.mrf.mxu0
        %v1354 = vadd.f32 0.0, %v1353
        %1355 = vmatprep.mubr.f32.mxu0 0.0
        %1356 = vmatmul.mubr.f32.gmra.mxu0 %v612
        %v1357 = vpop.f32.mrf.mxu0
        %v1358 = vadd.f32 0.0, %v1357
        %v1359 = vpop.f32.mrf.mxu0
        %v1360 = vadd.f32 0.0, %v1359
        %1361 = vmatprep.mubr.f32.mxu0 0.0
        %1362 = vmatmul.mubr.f32.gmra.mxu0 %v615
        %v1363 = vpop.f32.mrf.mxu0
        %v1364 = vadd.f32 0.0, %v1363
        %v1365 = vpop.f32.mrf.mxu0
        %v1366 = vadd.f32 0.0, %v1365
        %1367 = vmatprep.mubr.f32.mxu0 0.0
        %1368 = vmatmul.mubr.f32.gmra.mxu0 %v618
        %v1369 = vpop.f32.mrf.mxu0
        %v1370 = vadd.f32 0.0, %v1369
        %v1371 = vpop.f32.mrf.mxu0
        %v1372 = vadd.f32 0.0, %v1371
        %1373 = vmatprep.mubr.f32.mxu0 0.0
        %1374 = vmatmul.mubr.f32.gmra.mxu0 %v621
        %v1375 = vpop.f32.mrf.mxu0
        %v1376 = vadd.f32 0.0, %v1375
        %v1377 = vpop.f32.mrf.mxu0
        %v1378 = vadd.f32 0.0, %v1377
        %1379 = vmatprep.mubr.f32.mxu0 0.0
        %1380 = vmatmul.mubr.f32.gmra.mxu0 %v624
        %v1381 = vpop.f32.mrf.mxu0
        %v1382 = vadd.f32 0.0, %v1381
        %v1383 = vpop.f32.mrf.mxu0
        %v1384 = vadd.f32 0.0, %v1383
        %1385 = vmatprep.mubr.f32.mxu0 0.0
        %1386 = vmatmul.mubr.f32.gmra.mxu0 %v627
        %v1387 = vpop.f32.mrf.mxu0
        %v1388 = vadd.f32 0.0, %v1387
        %v1389 = vpop.f32.mrf.mxu0
        %v1390 = vadd.f32 0.0, %v1389
        %1391 = vmatprep.mubr.f32.mxu0 0.0
        %1392 = vmatmul.mubr.f32.gmra.mxu0 %v630
        %v1393 = vpop.f32.mrf.mxu0
        %v1394 = vadd.f32 0.0, %v1393
        %v1395 = vpop.f32.mrf.mxu0
        %v1396 = vadd.f32 0.0, %v1395
        %1397 = vmatprep.mubr.f32.mxu0 0.0
        %1398 = vmatmul.mubr.f32.gmra.mxu0 %v633
        %v1399 = vpop.f32.mrf.mxu0
        %v1400 = vadd.f32 0.0, %v1399
        %v1401 = vpop.f32.mrf.mxu0
        %v1402 = vadd.f32 0.0, %v1401
        %1403 = vmatprep.mubr.f32.mxu0 0.0
        %1404 = vmatmul.mubr.f32.gmra.mxu0 %v636
        %v1405 = vpop.f32.mrf.mxu0
        %v1406 = vadd.f32 0.0, %v1405
        %v1407 = vpop.f32.mrf.mxu0
        %v1408 = vadd.f32 0.0, %v1407
        %1409 = vmatprep.mubr.f32.mxu0 0.0
        %1410 = vmatmul.mubr.f32.gmra.mxu0 %v639
        %v1411 = vpop.f32.mrf.mxu0
        %v1412 = vadd.f32 0.0, %v1411
        %v1413 = vpop.f32.mrf.mxu0
        %v1414 = vadd.f32 0.0, %v1413
        %1415 = vmatprep.mubr.f32.mxu0 0.0
        %1416 = vmatmul.mubr.f32.gmra.mxu0 %v642
        %v1417 = vpop.f32.mrf.mxu0
        %v1418 = vadd.f32 0.0, %v1417
        %v1419 = vpop.f32.mrf.mxu0
        %v1420 = vadd.f32 0.0, %v1419
        %1421 = vmatprep.mubr.f32.mxu0 0.0
        %1422 = vmatmul.mubr.f32.gmra.mxu0 %v645
        %v1423 = vpop.f32.mrf.mxu0
        %v1424 = vadd.f32 0.0, %v1423
        %v1425 = vpop.f32.mrf.mxu0
        %v1426 = vadd.f32 0.0, %v1425
        %1427 = vmatprep.mubr.f32.mxu0 0.0
        %1428 = vmatmul.mubr.f32.gmra.mxu0 %v648
        %v1429 = vpop.f32.mrf.mxu0
        %v1430 = vadd.f32 0.0, %v1429
        %v1431 = vpop.f32.mrf.mxu0
        %v1432 = vadd.f32 0.0, %v1431
        %1433 = vmatprep.mubr.f32.mxu0 0.0
        %1434 = vmatmul.mubr.f32.gmra.mxu0 %v651
        %v1435 = vpop.f32.mrf.mxu0
        %v1436 = vadd.f32 0.0, %v1435
        %v1437 = vpop.f32.mrf.mxu0
        %v1438 = vadd.f32 0.0, %v1437
        %1439 = vmatprep.mubr.f32.mxu0 0.0
        %1440 = vmatmul.mubr.f32.gmra.mxu0 %v654
        %v1441 = vpop.f32.mrf.mxu0
        %v1442 = vadd.f32 0.0, %v1441
        %v1443 = vpop.f32.mrf.mxu0
        %v1444 = vadd.f32 0.0, %v1443
        %1445 = vmatprep.mubr.f32.mxu0 0.0
        %1446 = vmatmul.mubr.f32.gmra.mxu0 %v657
        %v1447 = vpop.f32.mrf.mxu0
        %v1448 = vadd.f32 0.0, %v1447
        %v1449 = vpop.f32.mrf.mxu0
        %v1450 = vadd.f32 0.0, %v1449
        %1451 = vmatprep.mubr.f32.mxu0 0.0
        %1452 = vmatmul.mubr.f32.gmra.mxu0 %v660
        %v1453 = vpop.f32.mrf.mxu0
        %v1454 = vadd.f32 0.0, %v1453
        %v1455 = vpop.f32.mrf.mxu0
        %v1456 = vadd.f32 0.0, %v1455
        %1457 = vmatprep.mubr.f32.mxu0 0.0
        %1458 = vmatmul.mubr.f32.gmra.mxu0 %v663
        %v1459 = vpop.f32.mrf.mxu0
        %v1460 = vadd.f32 0.0, %v1459
        %v1461 = vpop.f32.mrf.mxu0
        %v1462 = vadd.f32 0.0, %v1461
        %1463 = vmatprep.mubr.f32.mxu0 0.0
        %1464 = vmatmul.mubr.f32.gmra.mxu0 %v666
        %v1465 = vpop.f32.mrf.mxu0
        %v1466 = vadd.f32 0.0, %v1465
        %v1467 = vpop.f32.mrf.mxu0
        %v1468 = vadd.f32 0.0, %v1467
        %1469 = vmatprep.mubr.f32.mxu0 0.0
        %1470 = vmatmul.mubr.f32.gmra.mxu0 %v669
        %v1471 = vpop.f32.mrf.mxu0
        %v1472 = vadd.f32 0.0, %v1471
        %v1473 = vpop.f32.mrf.mxu0
        %v1474 = vadd.f32 0.0, %v1473
        %1475 = vmatprep.mubr.f32.mxu0 0.0
        %1476 = vmatmul.mubr.f32.gmra.mxu0 %v672
        %v1477 = vpop.f32.mrf.mxu0
        %v1478 = vadd.f32 0.0, %v1477
        %v1479 = vpop.f32.mrf.mxu0
        %v1480 = vadd.f32 0.0, %v1479
        %1481 = vmatprep.mubr.f32.mxu0 0.0
        %1482 = vmatmul.mubr.f32.gmra.mxu0 %v675
        %v1483 = vpop.f32.mrf.mxu0
        %v1484 = vadd.f32 0.0, %v1483
        %v1485 = vpop.f32.mrf.mxu0
        %v1486 = vadd.f32 0.0, %v1485
        %1487 = vmatprep.mubr.f32.mxu0 0.0
        %1488 = vmatmul.mubr.f32.gmra.mxu0 %v678
        %v1489 = vpop.f32.mrf.mxu0
        %v1490 = vadd.f32 0.0, %v1489
        %v1491 = vpop.f32.mrf.mxu0
        %v1492 = vadd.f32 0.0, %v1491
        %1493 = vmatprep.mubr.f32.mxu0 0.0
        %1494 = vmatmul.mubr.f32.gmra.mxu0 %v681
        %v1495 = vpop.f32.mrf.mxu0
        %v1496 = vadd.f32 0.0, %v1495
        %v1497 = vpop.f32.mrf.mxu0
        %v1498 = vadd.f32 0.0, %v1497
        %1499 = vmatprep.mubr.f32.mxu0 0.0
        %1500 = vmatmul.mubr.f32.gmra.mxu0 %v684
        %v1501 = vpop.f32.mrf.mxu0
        %v1502 = vadd.f32 0.0, %v1501
        %v1503 = vpop.f32.mrf.mxu0
        %v1504 = vadd.f32 0.0, %v1503
        %1505 = vmatprep.mubr.f32.mxu0 0.0
        %1506 = vmatmul.mubr.f32.gmra.mxu0 %v687
        %v1507 = vpop.f32.mrf.mxu0
        %v1508 = vadd.f32 0.0, %v1507
        %v1509 = vpop.f32.mrf.mxu0
        %v1510 = vadd.f32 0.0, %v1509
        %1511 = vmatprep.mubr.f32.mxu0 0.0
        %1512 = vmatmul.mubr.f32.gmra.mxu0 %v690
        %v1513 = vpop.f32.mrf.mxu0
        %v1514 = vadd.f32 0.0, %v1513
        %v1515 = vpop.f32.mrf.mxu0
        %v1516 = vadd.f32 0.0, %v1515
        %1517 = vmatprep.mubr.f32.mxu0 0.0
        %1518 = vmatmul.mubr.f32.gmra.mxu0 %v693
        %v1519 = vpop.f32.mrf.mxu0
        %v1520 = vadd.f32 0.0, %v1519
        %v1521 = vpop.f32.mrf.mxu0
        %v1522 = vadd.f32 0.0, %v1521
        %1523 = vmatprep.mubr.f32.mxu0 0.0
        %1524 = vmatmul.mubr.f32.gmra.mxu0 %v696
        %v1525 = vpop.f32.mrf.mxu0
        %v1526 = vadd.f32 0.0, %v1525
        %v1527 = vpop.f32.mrf.mxu0
        %v1528 = vadd.f32 0.0, %v1527
        %1529 = vmatprep.mubr.f32.mxu0 0.0
        %1530 = vmatmul.mubr.f32.gmra.mxu0 %v699
        %v1531 = vpop.f32.mrf.mxu0
        %v1532 = vadd.f32 0.0, %v1531
        %v1533 = vpop.f32.mrf.mxu0
        %v1534 = vadd.f32 0.0, %v1533
        %1535 = vmatprep.mubr.f32.mxu0 0.0
        %1536 = vmatmul.mubr.f32.gmra.mxu0 %v702
        %v1537 = vpop.f32.mrf.mxu0
        %v1538 = vadd.f32 0.0, %v1537
        %v1539 = vpop.f32.mrf.mxu0
        %v1540 = vadd.f32 0.0, %v1539
        %1541 = vmatprep.mubr.f32.mxu0 0.0
        %1542 = vmatmul.mubr.f32.gmra.mxu0 %v705
        %v1543 = vpop.f32.mrf.mxu0
        %v1544 = vadd.f32 0.0, %v1543
        %v1545 = vpop.f32.mrf.mxu0
        %v1546 = vadd.f32 0.0, %v1545
        %1547 = vmatprep.mubr.f32.mxu0 0.0
        %1548 = vmatmul.mubr.f32.gmra.mxu0 %v708
        %v1549 = vpop.f32.mrf.mxu0
        %v1550 = vadd.f32 0.0, %v1549
        %v1551 = vpop.f32.mrf.mxu0
        %v1552 = vadd.f32 0.0, %v1551
        %1553 = vmatprep.mubr.f32.mxu0 0.0
        %1554 = vmatmul.mubr.f32.gmra.mxu0 %v711
        %v1555 = vpop.f32.mrf.mxu0
        %v1556 = vadd.f32 0.0, %v1555
        %v1557 = vpop.f32.mrf.mxu0
        %v1558 = vadd.f32 0.0, %v1557
        %1559 = vmatprep.mubr.f32.mxu0 0.0
        %1560 = vmatmul.mubr.f32.gmra.mxu0 %v714
        %v1561 = vpop.f32.mrf.mxu0
        %v1562 = vadd.f32 0.0, %v1561
        %v1563 = vpop.f32.mrf.mxu0
        %v1564 = vadd.f32 0.0, %v1563
        %1565 = vmatprep.mubr.f32.mxu0 0.0
        %1566 = vmatmul.mubr.f32.gmra.mxu0 %v717
        %v1567 = vpop.f32.mrf.mxu0
        %v1568 = vadd.f32 0.0, %v1567
        %v1569 = vpop.f32.mrf.mxu0
        %v1570 = vadd.f32 0.0, %v1569
        %1571 = vmatprep.mubr.f32.mxu0 0.0
        %1572 = vmatmul.mubr.f32.gmra.mxu0 %v720
        %v1573 = vpop.f32.mrf.mxu0
        %v1574 = vadd.f32 0.0, %v1573
        %v1575 = vpop.f32.mrf.mxu0
        %v1576 = vadd.f32 0.0, %v1575
        %1577 = vmatprep.mubr.f32.mxu0 0.0
        %1578 = vmatmul.mubr.f32.gmra.mxu0 %v723
        %v1579 = vpop.f32.mrf.mxu0
        %v1580 = vadd.f32 0.0, %v1579
        %v1581 = vpop.f32.mrf.mxu0
        %v1582 = vadd.f32 0.0, %v1581
        %1583 = vmatprep.mubr.f32.mxu0 0.0
        %1584 = vmatmul.mubr.f32.gmra.mxu0 %v726
        %v1585 = vpop.f32.mrf.mxu0
        %v1586 = vadd.f32 0.0, %v1585
        %v1587 = vpop.f32.mrf.mxu0
        %v1588 = vadd.f32 0.0, %v1587
        %1589 = vmatprep.mubr.f32.mxu0 0.0
        %1590 = vmatmul.mubr.f32.gmra.mxu0 %v729
        %v1591 = vpop.f32.mrf.mxu0
        %v1592 = vadd.f32 0.0, %v1591
        %v1593 = vpop.f32.mrf.mxu0
        %v1594 = vadd.f32 0.0, %v1593
        %1595 = vmatprep.mubr.f32.mxu0 0.0
        %1596 = vmatmul.mubr.f32.gmra.mxu0 %v732
        %v1597 = vpop.f32.mrf.mxu0
        %v1598 = vadd.f32 0.0, %v1597
        %v1599 = vpop.f32.mrf.mxu0
        %v1600 = vadd.f32 0.0, %v1599
        %1601 = vmatprep.mubr.f32.mxu0 0.0
        %1602 = vmatmul.mubr.f32.gmra.mxu0 %v735
        %v1603 = vpop.f32.mrf.mxu0
        %v1604 = vadd.f32 0.0, %v1603
        %v1605 = vpop.f32.mrf.mxu0
        %v1606 = vadd.f32 0.0, %v1605
        %1607 = vmatprep.mubr.f32.mxu0 0.0
        %1608 = vmatmul.mubr.f32.gmra.mxu0 %v738
        %v1609 = vpop.f32.mrf.mxu0
        %v1610 = vadd.f32 0.0, %v1609
        %v1611 = vpop.f32.mrf.mxu0
        %v1612 = vadd.f32 0.0, %v1611
        %1613 = vmatprep.mubr.f32.mxu0 0.0
        %1614 = vmatmul.mubr.f32.gmra.mxu0 %v741
        %v1615 = vpop.f32.mrf.mxu0
        %v1616 = vadd.f32 0.0, %v1615
        %v1617 = vpop.f32.mrf.mxu0
        %v1618 = vadd.f32 0.0, %v1617
        %1619 = vmatprep.mubr.f32.mxu0 0.0
        %1620 = vmatmul.mubr.f32.gmra.mxu0 %v744
        %v1621 = vpop.f32.mrf.mxu0
        %v1622 = vadd.f32 0.0, %v1621
        %v1623 = vpop.f32.mrf.mxu0
        %v1624 = vadd.f32 0.0, %v1623
        %1625 = vmatprep.mubr.f32.mxu0 0.0
        %1626 = vmatmul.mubr.f32.gmra.mxu0 %v747
        %v1627 = vpop.f32.mrf.mxu0
        %v1628 = vadd.f32 0.0, %v1627
        %v1629 = vpop.f32.mrf.mxu0
        %v1630 = vadd.f32 0.0, %v1629
        %1631 = vmatprep.mubr.f32.mxu0 0.0
        %1632 = vmatmul.mubr.f32.gmra.mxu0 %v750
        %v1633 = vpop.f32.mrf.mxu0
        %v1634 = vadd.f32 0.0, %v1633
        %v1635 = vpop.f32.mrf.mxu0
        %v1636 = vadd.f32 0.0, %v1635
        %1637 = vmatprep.mubr.f32.mxu0 0.0
        %1638 = vmatmul.mubr.f32.gmra.mxu0 %v753
        %v1639 = vpop.f32.mrf.mxu0
        %v1640 = vadd.f32 0.0, %v1639
        %v1641 = vpop.f32.mrf.mxu0
        %v1642 = vadd.f32 0.0, %v1641
        %1643 = vmatprep.mubr.f32.mxu0 0.0
        %1644 = vmatmul.mubr.f32.gmra.mxu0 %v756
        %v1645 = vpop.f32.mrf.mxu0
        %v1646 = vadd.f32 0.0, %v1645
        %v1647 = vpop.f32.mrf.mxu0
        %v1648 = vadd.f32 0.0, %v1647
        %1649 = vmatprep.mubr.f32.mxu0 0.0
        %1650 = vmatmul.mubr.f32.gmra.mxu0 %v759
        %v1651 = vpop.f32.mrf.mxu0
        %v1652 = vadd.f32 0.0, %v1651
        %v1653 = vpop.f32.mrf.mxu0
        %v1654 = vadd.f32 0.0, %v1653
        %1655 = vmatprep.mubr.f32.mxu0 0.0
        %1656 = vmatmul.mubr.f32.gmra.mxu0 %v762
        %v1657 = vpop.f32.mrf.mxu0
        %v1658 = vadd.f32 0.0, %v1657
        %v1659 = vpop.f32.mrf.mxu0
        %v1660 = vadd.f32 0.0, %v1659
        %1661 = vdwg.mxu0
        %v1662 = vmin.f32 %v831, 0.0
        %v1663 = vmin.f32 %v833, 0.0
        %v1664 = vmin.f32 %v1280, 0.0
        %v1665 = vmin.f32 %v1282, 0.0
        %v1666 = vmin.f32 %v837, 0.0
        %v1667 = vmin.f32 %v839, 0.0
        %v1668 = vmin.f32 %v1286, 0.0
        %v1669 = vmin.f32 %v1288, 0.0
        %v1670 = vmin.f32 %v843, 0.0
        %v1671 = vmin.f32 %v845, 0.0
        %v1672 = vmin.f32 %v1292, 0.0
        %v1673 = vmin.f32 %v1294, 0.0
        %v1674 = vmin.f32 %v849, 0.0
        %v1675 = vmin.f32 %v851, 0.0
        %v1676 = vmin.f32 %v1298, 0.0
        %v1677 = vmin.f32 %v1300, 0.0
        %v1678 = vmin.f32 %v855, 0.0
        %v1679 = vmin.f32 %v857, 0.0
        %v1680 = vmin.f32 %v1304, 0.0
        %v1681 = vmin.f32 %v1306, 0.0
        %v1682 = vmin.f32 %v861, 0.0
        %v1683 = vmin.f32 %v863, 0.0
        %v1684 = vmin.f32 %v1310, 0.0
        %v1685 = vmin.f32 %v1312, 0.0
        %v1686 = vmin.f32 %v867, 0.0
        %v1687 = vmin.f32 %v869, 0.0
        %v1688 = vmin.f32 %v1316, 0.0
        %v1689 = vmin.f32 %v1318, 0.0
        %v1690 = vmin.f32 %v873, 0.0
        %v1691 = vmin.f32 %v875, 0.0
        %v1692 = vmin.f32 %v1322, 0.0
        %v1693 = vmin.f32 %v1324, 0.0
        %v1694 = vmin.f32 %v879, 0.0
        %v1695 = vmin.f32 %v881, 0.0
        %v1696 = vmin.f32 %v1328, 0.0
        %v1697 = vmin.f32 %v1330, 0.0
        %v1698 = vmin.f32 %v885, 0.0
        %v1699 = vmin.f32 %v887, 0.0
        %v1700 = vmin.f32 %v1334, 0.0
        %v1701 = vmin.f32 %v1336, 0.0
        %v1702 = vmin.f32 %v891, 0.0
        %v1703 = vmin.f32 %v893, 0.0
        %v1704 = vmin.f32 %v1340, 0.0
        %v1705 = vmin.f32 %v1342, 0.0
        %v1706 = vmin.f32 %v897, 0.0
        %v1707 = vmin.f32 %v899, 0.0
        %v1708 = vmin.f32 %v1346, 0.0
        %v1709 = vmin.f32 %v1348, 0.0
        %v1710 = vmin.f32 %v903, 0.0
        %v1711 = vmin.f32 %v905, 0.0
        %v1712 = vmin.f32 %v1352, 0.0
        %v1713 = vmin.f32 %v1354, 0.0
        %v1714 = vmin.f32 %v909, 0.0
        %v1715 = vmin.f32 %v911, 0.0
        %v1716 = vmin.f32 %v1358, 0.0
        %v1717 = vmin.f32 %v1360, 0.0
        %v1718 = vmin.f32 %v915, 0.0
        %v1719 = vmin.f32 %v917, 0.0
        %v1720 = vmin.f32 %v1364, 0.0
        %v1721 = vmin.f32 %v1366, 0.0
        %v1722 = vmin.f32 %v921, 0.0
        %v1723 = vmin.f32 %v923, 0.0
        %v1724 = vmin.f32 %v1370, 0.0
        %v1725 = vmin.f32 %v1372, 0.0
        %v1726 = vmin.f32 %v927, 0.0
        %v1727 = vmin.f32 %v929, 0.0
        %v1728 = vmin.f32 %v1376, 0.0
        %v1729 = vmin.f32 %v1378, 0.0
        %v1730 = vmin.f32 %v933, 0.0
        %v1731 = vmin.f32 %v935, 0.0
        %v1732 = vmin.f32 %v1382, 0.0
        %v1733 = vmin.f32 %v1384, 0.0
        %v1734 = vmin.f32 %v939, 0.0
        %v1735 = vmin.f32 %v941, 0.0
        %v1736 = vmin.f32 %v1388, 0.0
        %v1737 = vmin.f32 %v1390, 0.0
        %v1738 = vmin.f32 %v945, 0.0
        %v1739 = vmin.f32 %v947, 0.0
        %v1740 = vmin.f32 %v1394, 0.0
        %v1741 = vmin.f32 %v1396, 0.0
        %v1742 = vmin.f32 %v951, 0.0
        %v1743 = vmin.f32 %v953, 0.0
        %v1744 = vmin.f32 %v1400, 0.0
        %v1745 = vmin.f32 %v1402, 0.0
        %v1746 = vmin.f32 %v957, 0.0
        %v1747 = vmin.f32 %v959, 0.0
        %v1748 = vmin.f32 %v1406, 0.0
        %v1749 = vmin.f32 %v1408, 0.0
        %v1750 = vmin.f32 %v963, 0.0
        %v1751 = vmin.f32 %v965, 0.0
        %v1752 = vmin.f32 %v1412, 0.0
        %v1753 = vmin.f32 %v1414, 0.0
        %v1754 = vmin.f32 %v969, 0.0
        %v1755 = vmin.f32 %v971, 0.0
        %v1756 = vmin.f32 %v1418, 0.0
        %v1757 = vmin.f32 %v1420, 0.0
        %v1758 = vmin.f32 %v975, 0.0
        %v1759 = vmin.f32 %v977, 0.0
        %v1760 = vmin.f32 %v1424, 0.0
        %v1761 = vmin.f32 %v1426, 0.0
        %v1762 = vmin.f32 %v981, 0.0
        %v1763 = vmin.f32 %v983, 0.0
        %v1764 = vmin.f32 %v1430, 0.0
        %v1765 = vmin.f32 %v1432, 0.0
        %v1766 = vmin.f32 %v987, 0.0
        %v1767 = vmin.f32 %v989, 0.0
        %v1768 = vmin.f32 %v1436, 0.0
        %v1769 = vmin.f32 %v1438, 0.0
        %v1770 = vmin.f32 %v993, 0.0
        %v1771 = vmin.f32 %v995, 0.0
        %v1772 = vmin.f32 %v1442, 0.0
        %v1773 = vmin.f32 %v1444, 0.0
        %v1774 = vmin.f32 %v999, 0.0
        %v1775 = vmin.f32 %v1001, 0.0
        %v1776 = vmin.f32 %v1448, 0.0
        %v1777 = vmin.f32 %v1450, 0.0
        %v1778 = vmin.f32 %v1005, 0.0
        %v1779 = vmin.f32 %v1007, 0.0
        %v1780 = vmin.f32 %v1454, 0.0
        %v1781 = vmin.f32 %v1456, 0.0
        %v1782 = vmin.f32 %v1011, 0.0
        %v1783 = vmin.f32 %v1013, 0.0
        %v1784 = vmin.f32 %v1460, 0.0
        %v1785 = vmin.f32 %v1462, 0.0
        %v1786 = vmin.f32 %v1017, 0.0
        %v1787 = vmin.f32 %v1019, 0.0
        %v1788 = vmin.f32 %v1466, 0.0
        %v1789 = vmin.f32 %v1468, 0.0
        %v1790 = vmin.f32 %v1023, 0.0
        %v1791 = vmin.f32 %v1025, 0.0
        %v1792 = vmin.f32 %v1472, 0.0
        %v1793 = vmin.f32 %v1474, 0.0
        %v1794 = vmin.f32 %v1029, 0.0
        %v1795 = vmin.f32 %v1031, 0.0
        %v1796 = vmin.f32 %v1478, 0.0
        %v1797 = vmin.f32 %v1480, 0.0
        %v1798 = vmin.f32 %v1035, 0.0
        %v1799 = vmin.f32 %v1037, 0.0
        %v1800 = vmin.f32 %v1484, 0.0
        %v1801 = vmin.f32 %v1486, 0.0
        %v1802 = vmin.f32 %v1041, 0.0
        %v1803 = vmin.f32 %v1043, 0.0
        %v1804 = vmin.f32 %v1490, 0.0
        %v1805 = vmin.f32 %v1492, 0.0
        %v1806 = vmin.f32 %v1047, 0.0
        %v1807 = vmin.f32 %v1049, 0.0
        %v1808 = vmin.f32 %v1496, 0.0
        %v1809 = vmin.f32 %v1498, 0.0
        %v1810 = vmin.f32 %v1053, 0.0
        %v1811 = vmin.f32 %v1055, 0.0
        %v1812 = vmin.f32 %v1502, 0.0
        %v1813 = vmin.f32 %v1504, 0.0
        %v1814 = vmin.f32 %v1059, 0.0
        %v1815 = vmin.f32 %v1061, 0.0
        %v1816 = vmin.f32 %v1508, 0.0
        %v1817 = vmin.f32 %v1510, 0.0
        %v1818 = vmin.f32 %v1065, 0.0
        %v1819 = vmin.f32 %v1067, 0.0
        %v1820 = vmin.f32 %v1514, 0.0
        %v1821 = vmin.f32 %v1516, 0.0
        %v1822 = vmin.f32 %v1071, 0.0
        %v1823 = vmin.f32 %v1073, 0.0
        %v1824 = vmin.f32 %v1520, 0.0
        %v1825 = vmin.f32 %v1522, 0.0
        %v1826 = vmin.f32 %v1077, 0.0
        %v1827 = vmin.f32 %v1079, 0.0
        %v1828 = vmin.f32 %v1526, 0.0
        %v1829 = vmin.f32 %v1528, 0.0
        %v1830 = vmin.f32 %v1083, 0.0
        %v1831 = vmin.f32 %v1085, 0.0
        %v1832 = vmin.f32 %v1532, 0.0
        %v1833 = vmin.f32 %v1534, 0.0
        %v1834 = vmin.f32 %v1089, 0.0
        %v1835 = vmin.f32 %v1091, 0.0
        %v1836 = vmin.f32 %v1538, 0.0
        %v1837 = vmin.f32 %v1540, 0.0
        %v1838 = vmin.f32 %v1095, 0.0
        %v1839 = vmin.f32 %v1097, 0.0
        %v1840 = vmin.f32 %v1544, 0.0
        %v1841 = vmin.f32 %v1546, 0.0
        %v1842 = vmin.f32 %v1101, 0.0
        %v1843 = vmin.f32 %v1103, 0.0
        %v1844 = vmin.f32 %v1550, 0.0
        %v1845 = vmin.f32 %v1552, 0.0
        %v1846 = vmin.f32 %v1107, 0.0
        %v1847 = vmin.f32 %v1109, 0.0
        %v1848 = vmin.f32 %v1556, 0.0
        %v1849 = vmin.f32 %v1558, 0.0
        %v1850 = vmin.f32 %v1113, 0.0
        %v1851 = vmin.f32 %v1115, 0.0
        %v1852 = vmin.f32 %v1562, 0.0
        %v1853 = vmin.f32 %v1564, 0.0
        %v1854 = vmin.f32 %v1119, 0.0
        %v1855 = vmin.f32 %v1121, 0.0
        %v1856 = vmin.f32 %v1568, 0.0
        %v1857 = vmin.f32 %v1570, 0.0
        %v1858 = vmin.f32 %v1125, 0.0
        %v1859 = vmin.f32 %v1127, 0.0
        %v1860 = vmin.f32 %v1574, 0.0
        %v1861 = vmin.f32 %v1576, 0.0
        %v1862 = vmin.f32 %v1131, 0.0
        %v1863 = vmin.f32 %v1133, 0.0
        %v1864 = vmin.f32 %v1580, 0.0
        %v1865 = vmin.f32 %v1582, 0.0
        %v1866 = vmin.f32 %v1137, 0.0
        %v1867 = vmin.f32 %v1139, 0.0
        %v1868 = vmin.f32 %v1586, 0.0
        %v1869 = vmin.f32 %v1588, 0.0
        %v1870 = vmin.f32 %v1143, 0.0
        %v1871 = vmin.f32 %v1145, 0.0
        %v1872 = vmin.f32 %v1592, 0.0
        %v1873 = vmin.f32 %v1594, 0.0
        %v1874 = vmin.f32 %v1149, 0.0
        %v1875 = vmin.f32 %v1151, 0.0
        %v1876 = vmin.f32 %v1598, 0.0
        %v1877 = vmin.f32 %v1600, 0.0
        %v1878 = vmin.f32 %v1155, 0.0
        %v1879 = vmin.f32 %v1157, 0.0
        %v1880 = vmin.f32 %v1604, 0.0
        %v1881 = vmin.f32 %v1606, 0.0
        %v1882 = vmin.f32 %v1161, 0.0
        %v1883 = vmin.f32 %v1163, 0.0
        %v1884 = vmin.f32 %v1610, 0.0
        %v1885 = vmin.f32 %v1612, 0.0
        %v1886 = vmin.f32 %v1167, 0.0
        %v1887 = vmin.f32 %v1169, 0.0
        %v1888 = vmin.f32 %v1616, 0.0
        %v1889 = vmin.f32 %v1618, 0.0
        %v1890 = vmin.f32 %v1173, 0.0
        %v1891 = vmin.f32 %v1175, 0.0
        %v1892 = vmin.f32 %v1622, 0.0
        %v1893 = vmin.f32 %v1624, 0.0
        %v1894 = vmin.f32 %v1179, 0.0
        %v1895 = vmin.f32 %v1181, 0.0
        %v1896 = vmin.f32 %v1628, 0.0
        %v1897 = vmin.f32 %v1630, 0.0
        %v1898 = vmin.f32 %v1185, 0.0
        %v1899 = vmin.f32 %v1187, 0.0
        %v1900 = vmin.f32 %v1634, 0.0
        %v1901 = vmin.f32 %v1636, 0.0
        %v1902 = vmin.f32 %v1191, 0.0
        %v1903 = vmin.f32 %v1193, 0.0
        %v1904 = vmin.f32 %v1640, 0.0
        %v1905 = vmin.f32 %v1642, 0.0
        %v1906 = vmin.f32 %v1197, 0.0
        %v1907 = vmin.f32 %v1199, 0.0
        %v1908 = vmin.f32 %v1646, 0.0
        %v1909 = vmin.f32 %v1648, 0.0
        %v1910 = vmin.f32 %v1203, 0.0
        %v1911 = vmin.f32 %v1205, 0.0
        %v1912 = vmin.f32 %v1652, 0.0
        %v1913 = vmin.f32 %v1654, 0.0
        %v1914 = vmin.f32 %v1209, 0.0
        %v1915 = vmin.f32 %v1211, 0.0
        %v1916 = vmin.f32 %v1658, 0.0
        %v1917 = vmin.f32 %v1660, 0.0
        %v1918 = vmul.f32 %v1662, 1.442695
        %v1919 = vpow.pop %v1918
        %v1920 = vmul.f32 %v1663, 1.442695
        %v1921 = vpow.pop %v1920
        %v1922 = vmul.f32 %v1664, 1.442695
        %v1923 = vpow.pop %v1922
        %v1924 = vmul.f32 %v1665, 1.442695
        %v1925 = vpow.pop %v1924
        %v1926 = vmul.f32 %v1666, 1.442695
        %v1927 = vpow.pop %v1926
        %v1928 = vmul.f32 %v1667, 1.442695
        %v1929 = vpow.pop %v1928
        %v1930 = vmul.f32 %v1668, 1.442695
        %v1931 = vpow.pop %v1930
        %v1932 = vmul.f32 %v1669, 1.442695
        %v1933 = vpow.pop %v1932
        %v1934 = vmul.f32 %v1670, 1.442695
        %v1935 = vpow.pop %v1934
        %v1936 = vmul.f32 %v1671, 1.442695
        %v1937 = vpow.pop %v1936
        %v1938 = vmul.f32 %v1672, 1.442695
        %v1939 = vpow.pop %v1938
        %v1940 = vmul.f32 %v1673, 1.442695
        %v1941 = vpow.pop %v1940
        %v1942 = vmul.f32 %v1674, 1.442695
        %v1943 = vpow.pop %v1942
        %v1944 = vmul.f32 %v1675, 1.442695
        %v1945 = vpow.pop %v1944
        %v1946 = vmul.f32 %v1676, 1.442695
        %v1947 = vpow.pop %v1946
        %v1948 = vmul.f32 %v1677, 1.442695
        %v1949 = vpow.pop %v1948
        %v1950 = vmul.f32 %v1678, 1.442695
        %v1951 = vpow.pop %v1950
        %v1952 = vmul.f32 %v1679, 1.442695
        %v1953 = vpow.pop %v1952
        %v1954 = vmul.f32 %v1680, 1.442695
        %v1955 = vpow.pop %v1954
        %v1956 = vmul.f32 %v1681, 1.442695
        %v1957 = vpow.pop %v1956
        %v1958 = vmul.f32 %v1682, 1.442695
        %v1959 = vpow.pop %v1958
        %v1960 = vmul.f32 %v1683, 1.442695
        %v1961 = vpow.pop %v1960
        %v1962 = vmul.f32 %v1684, 1.442695
        %v1963 = vpow.pop %v1962
        %v1964 = vmul.f32 %v1685, 1.442695
        %v1965 = vpow.pop %v1964
        %v1966 = vmul.f32 %v1686, 1.442695
        %v1967 = vpow.pop %v1966
        %v1968 = vmul.f32 %v1687, 1.442695
        %v1969 = vpow.pop %v1968
        %v1970 = vmul.f32 %v1688, 1.442695
        %v1971 = vpow.pop %v1970
        %v1972 = vmul.f32 %v1689, 1.442695
        %v1973 = vpow.pop %v1972
        %v1974 = vmul.f32 %v1690, 1.442695
        %v1975 = vpow.pop %v1974
        %v1976 = vmul.f32 %v1691, 1.442695
        %v1977 = vpow.pop %v1976
        %v1978 = vmul.f32 %v1692, 1.442695
        %v1979 = vpow.pop %v1978
        %v1980 = vmul.f32 %v1693, 1.442695
        %v1981 = vpow.pop %v1980
        %v1982 = vmul.f32 %v1694, 1.442695
        %v1983 = vpow.pop %v1982
        %v1984 = vmul.f32 %v1695, 1.442695
        %v1985 = vpow.pop %v1984
        %v1986 = vmul.f32 %v1696, 1.442695
        %v1987 = vpow.pop %v1986
        %v1988 = vmul.f32 %v1697, 1.442695
        %v1989 = vpow.pop %v1988
        %v1990 = vmul.f32 %v1698, 1.442695
        %v1991 = vpow.pop %v1990
        %v1992 = vmul.f32 %v1699, 1.442695
        %v1993 = vpow.pop %v1992
        %v1994 = vmul.f32 %v1700, 1.442695
        %v1995 = vpow.pop %v1994
        %v1996 = vmul.f32 %v1701, 1.442695
        %v1997 = vpow.pop %v1996
        %v1998 = vmul.f32 %v1702, 1.442695
        %v1999 = vpow.pop %v1998
        %v2000 = vmul.f32 %v1703, 1.442695
        %v2001 = vpow.pop %v2000
        %v2002 = vmul.f32 %v1704, 1.442695
        %v2003 = vpow.pop %v2002
        %v2004 = vmul.f32 %v1705, 1.442695
        %v2005 = vpow.pop %v2004
        %v2006 = vmul.f32 %v1706, 1.442695
        %v2007 = vpow.pop %v2006
        %v2008 = vmul.f32 %v1707, 1.442695
        %v2009 = vpow.pop %v2008
        %v2010 = vmul.f32 %v1708, 1.442695
        %v2011 = vpow.pop %v2010
        %v2012 = vmul.f32 %v1709, 1.442695
        %v2013 = vpow.pop %v2012
        %v2014 = vmul.f32 %v1710, 1.442695
        %v2015 = vpow.pop %v2014
        %v2016 = vmul.f32 %v1711, 1.442695
        %v2017 = vpow.pop %v2016
        %v2018 = vmul.f32 %v1712, 1.442695
        %v2019 = vpow.pop %v2018
        %v2020 = vmul.f32 %v1713, 1.442695
        %v2021 = vpow.pop %v2020
        %v2022 = vmul.f32 %v1714, 1.442695
        %v2023 = vpow.pop %v2022
        %v2024 = vmul.f32 %v1715, 1.442695
        %v2025 = vpow.pop %v2024
        %v2026 = vmul.f32 %v1716, 1.442695
        %v2027 = vpow.pop %v2026
        %v2028 = vmul.f32 %v1717, 1.442695
        %v2029 = vpow.pop %v2028
        %v2030 = vmul.f32 %v1718, 1.442695
        %v2031 = vpow.pop %v2030
        %v2032 = vmul.f32 %v1719, 1.442695
        %v2033 = vpow.pop %v2032
        %v2034 = vmul.f32 %v1720, 1.442695
        %v2035 = vpow.pop %v2034
        %v2036 = vmul.f32 %v1721, 1.442695
        %v2037 = vpow.pop %v2036
        %v2038 = vmul.f32 %v1722, 1.442695
        %v2039 = vpow.pop %v2038
        %v2040 = vmul.f32 %v1723, 1.442695
        %v2041 = vpow.pop %v2040
        %v2042 = vmul.f32 %v1724, 1.442695
        %v2043 = vpow.pop %v2042
        %v2044 = vmul.f32 %v1725, 1.442695
        %v2045 = vpow.pop %v2044
        %v2046 = vmul.f32 %v1726, 1.442695
        %v2047 = vpow.pop %v2046
        %v2048 = vmul.f32 %v1727, 1.442695
        %v2049 = vpow.pop %v2048
        %v2050 = vmul.f32 %v1728, 1.442695
        %v2051 = vpow.pop %v2050
        %v2052 = vmul.f32 %v1729, 1.442695
        %v2053 = vpow.pop %v2052
        %v2054 = vmul.f32 %v1730, 1.442695
        %v2055 = vpow.pop %v2054
        %v2056 = vmul.f32 %v1731, 1.442695
        %v2057 = vpow.pop %v2056
        %v2058 = vmul.f32 %v1732, 1.442695
        %v2059 = vpow.pop %v2058
        %v2060 = vmul.f32 %v1733, 1.442695
        %v2061 = vpow.pop %v2060
        %v2062 = vmul.f32 %v1734, 1.442695
        %v2063 = vpow.pop %v2062
        %v2064 = vmul.f32 %v1735, 1.442695
        %v2065 = vpow.pop %v2064
        %v2066 = vmul.f32 %v1736, 1.442695
        %v2067 = vpow.pop %v2066
        %v2068 = vmul.f32 %v1737, 1.442695
        %v2069 = vpow.pop %v2068
        %v2070 = vmul.f32 %v1738, 1.442695
        %v2071 = vpow.pop %v2070
        %v2072 = vmul.f32 %v1739, 1.442695
        %v2073 = vpow.pop %v2072
        %v2074 = vmul.f32 %v1740, 1.442695
        %v2075 = vpow.pop %v2074
        %v2076 = vmul.f32 %v1741, 1.442695
        %v2077 = vpow.pop %v2076
        %v2078 = vmul.f32 %v1742, 1.442695
        %v2079 = vpow.pop %v2078
        %v2080 = vmul.f32 %v1743, 1.442695
        %v2081 = vpow.pop %v2080
        %v2082 = vmul.f32 %v1744, 1.442695
        %v2083 = vpow.pop %v2082
        %v2084 = vmul.f32 %v1745, 1.442695
        %v2085 = vpow.pop %v2084
        %v2086 = vmul.f32 %v1746, 1.442695
        %v2087 = vpow.pop %v2086
        %v2088 = vmul.f32 %v1747, 1.442695
        %v2089 = vpow.pop %v2088
        %v2090 = vmul.f32 %v1748, 1.442695
        %v2091 = vpow.pop %v2090
        %v2092 = vmul.f32 %v1749, 1.442695
        %v2093 = vpow.pop %v2092
        %v2094 = vmul.f32 %v1750, 1.442695
        %v2095 = vpow.pop %v2094
        %v2096 = vmul.f32 %v1751, 1.442695
        %v2097 = vpow.pop %v2096
        %v2098 = vmul.f32 %v1752, 1.442695
        %v2099 = vpow.pop %v2098
        %v2100 = vmul.f32 %v1753, 1.442695
        %v2101 = vpow.pop %v2100
        %v2102 = vmul.f32 %v1754, 1.442695
        %v2103 = vpow.pop %v2102
        %v2104 = vmul.f32 %v1755, 1.442695
        %v2105 = vpow.pop %v2104
        %v2106 = vmul.f32 %v1756, 1.442695
        %v2107 = vpow.pop %v2106
        %v2108 = vmul.f32 %v1757, 1.442695
        %v2109 = vpow.pop %v2108
        %v2110 = vmul.f32 %v1758, 1.442695
        %v2111 = vpow.pop %v2110
        %v2112 = vmul.f32 %v1759, 1.442695
        %v2113 = vpow.pop %v2112
        %v2114 = vmul.f32 %v1760, 1.442695
        %v2115 = vpow.pop %v2114
        %v2116 = vmul.f32 %v1761, 1.442695
        %v2117 = vpow.pop %v2116
        %v2118 = vmul.f32 %v1762, 1.442695
        %v2119 = vpow.pop %v2118
        %v2120 = vmul.f32 %v1763, 1.442695
        %v2121 = vpow.pop %v2120
        %v2122 = vmul.f32 %v1764, 1.442695
        %v2123 = vpow.pop %v2122
        %v2124 = vmul.f32 %v1765, 1.442695
        %v2125 = vpow.pop %v2124
        %v2126 = vmul.f32 %v1766, 1.442695
        %v2127 = vpow.pop %v2126
        %v2128 = vmul.f32 %v1767, 1.442695
        %v2129 = vpow.pop %v2128
        %v2130 = vmul.f32 %v1768, 1.442695
        %v2131 = vpow.pop %v2130
        %v2132 = vmul.f32 %v1769, 1.442695
        %v2133 = vpow.pop %v2132
        %v2134 = vmul.f32 %v1770, 1.442695
        %v2135 = vpow.pop %v2134
        %v2136 = vmul.f32 %v1771, 1.442695
        %v2137 = vpow.pop %v2136
        %v2138 = vmul.f32 %v1772, 1.442695
        %v2139 = vpow.pop %v2138
        %v2140 = vmul.f32 %v1773, 1.442695
        %v2141 = vpow.pop %v2140
        %v2142 = vmul.f32 %v1774, 1.442695
        %v2143 = vpow.pop %v2142
        %v2144 = vmul.f32 %v1775, 1.442695
        %v2145 = vpow.pop %v2144
        %v2146 = vmul.f32 %v1776, 1.442695
        %v2147 = vpow.pop %v2146
        %v2148 = vmul.f32 %v1777, 1.442695
        %v2149 = vpow.pop %v2148
        %v2150 = vmul.f32 %v1778, 1.442695
        %v2151 = vpow.pop %v2150
        %v2152 = vmul.f32 %v1779, 1.442695
        %v2153 = vpow.pop %v2152
        %v2154 = vmul.f32 %v1780, 1.442695
        %v2155 = vpow.pop %v2154
        %v2156 = vmul.f32 %v1781, 1.442695
        %v2157 = vpow.pop %v2156
        %v2158 = vmul.f32 %v1782, 1.442695
        %v2159 = vpow.pop %v2158
        %v2160 = vmul.f32 %v1783, 1.442695
        %v2161 = vpow.pop %v2160
        %v2162 = vmul.f32 %v1784, 1.442695
        %v2163 = vpow.pop %v2162
        %v2164 = vmul.f32 %v1785, 1.442695
        %v2165 = vpow.pop %v2164
        %v2166 = vmul.f32 %v1786, 1.442695
        %v2167 = vpow.pop %v2166
        %v2168 = vmul.f32 %v1787, 1.442695
        %v2169 = vpow.pop %v2168
        %v2170 = vmul.f32 %v1788, 1.442695
        %v2171 = vpow.pop %v2170
        %v2172 = vmul.f32 %v1789, 1.442695
        %v2173 = vpow.pop %v2172
        %v2174 = vmul.f32 %v1790, 1.442695
        %v2175 = vpow.pop %v2174
        %v2176 = vmul.f32 %v1791, 1.442695
        %v2177 = vpow.pop %v2176
        %v2178 = vmul.f32 %v1792, 1.442695
        %v2179 = vpow.pop %v2178
        %v2180 = vmul.f32 %v1793, 1.442695
        %v2181 = vpow.pop %v2180
        %v2182 = vmul.f32 %v1794, 1.442695
        %v2183 = vpow.pop %v2182
        %v2184 = vmul.f32 %v1795, 1.442695
        %v2185 = vpow.pop %v2184
        %v2186 = vmul.f32 %v1796, 1.442695
        %v2187 = vpow.pop %v2186
        %v2188 = vmul.f32 %v1797, 1.442695
        %v2189 = vpow.pop %v2188
        %v2190 = vmul.f32 %v1798, 1.442695
        %v2191 = vpow.pop %v2190
        %v2192 = vmul.f32 %v1799, 1.442695
        %v2193 = vpow.pop %v2192
        %v2194 = vmul.f32 %v1800, 1.442695
        %v2195 = vpow.pop %v2194
        %v2196 = vmul.f32 %v1801, 1.442695
        %v2197 = vpow.pop %v2196
        %v2198 = vmul.f32 %v1802, 1.442695
        %v2199 = vpow.pop %v2198
        %v2200 = vmul.f32 %v1803, 1.442695
        %v2201 = vpow.pop %v2200
        %v2202 = vmul.f32 %v1804, 1.442695
        %v2203 = vpow.pop %v2202
        %v2204 = vmul.f32 %v1805, 1.442695
        %v2205 = vpow.pop %v2204
        %v2206 = vmul.f32 %v1806, 1.442695
        %v2207 = vpow.pop %v2206
        %v2208 = vmul.f32 %v1807, 1.442695
        %v2209 = vpow.pop %v2208
        %v2210 = vmul.f32 %v1808, 1.442695
        %v2211 = vpow.pop %v2210
        %v2212 = vmul.f32 %v1809, 1.442695
        %v2213 = vpow.pop %v2212
        %v2214 = vmul.f32 %v1810, 1.442695
        %v2215 = vpow.pop %v2214
        %v2216 = vmul.f32 %v1811, 1.442695
        %v2217 = vpow.pop %v2216
        %v2218 = vmul.f32 %v1812, 1.442695
        %v2219 = vpow.pop %v2218
        %v2220 = vmul.f32 %v1813, 1.442695
        %v2221 = vpow.pop %v2220
        %v2222 = vmul.f32 %v1814, 1.442695
        %v2223 = vpow.pop %v2222
        %v2224 = vmul.f32 %v1815, 1.442695
        %v2225 = vpow.pop %v2224
        %v2226 = vmul.f32 %v1816, 1.442695
        %v2227 = vpow.pop %v2226
        %v2228 = vmul.f32 %v1817, 1.442695
        %v2229 = vpow.pop %v2228
        %v2230 = vmul.f32 %v1818, 1.442695
        %v2231 = vpow.pop %v2230
        %v2232 = vmul.f32 %v1819, 1.442695
        %v2233 = vpow.pop %v2232
        %v2234 = vmul.f32 %v1820, 1.442695
        %v2235 = vpow.pop %v2234
        %v2236 = vmul.f32 %v1821, 1.442695
        %v2237 = vpow.pop %v2236
        %v2238 = vmul.f32 %v1822, 1.442695
        %v2239 = vpow.pop %v2238
        %v2240 = vmul.f32 %v1823, 1.442695
        %v2241 = vpow.pop %v2240
        %v2242 = vmul.f32 %v1824, 1.442695
        %v2243 = vpow.pop %v2242
        %v2244 = vmul.f32 %v1825, 1.442695
        %v2245 = vpow.pop %v2244
        %v2246 = vmul.f32 %v1826, 1.442695
        %v2247 = vpow.pop %v2246
        %v2248 = vmul.f32 %v1827, 1.442695
        %v2249 = vpow.pop %v2248
        %v2250 = vmul.f32 %v1828, 1.442695
        %v2251 = vpow.pop %v2250
        %v2252 = vmul.f32 %v1829, 1.442695
        %v2253 = vpow.pop %v2252
        %v2254 = vmul.f32 %v1830, 1.442695
        %v2255 = vpow.pop %v2254
        %v2256 = vmul.f32 %v1831, 1.442695
        %v2257 = vpow.pop %v2256
        %v2258 = vmul.f32 %v1832, 1.442695
        %v2259 = vpow.pop %v2258
        %v2260 = vmul.f32 %v1833, 1.442695
        %v2261 = vpow.pop %v2260
        %v2262 = vmul.f32 %v1834, 1.442695
        %v2263 = vpow.pop %v2262
        %v2264 = vmul.f32 %v1835, 1.442695
        %v2265 = vpow.pop %v2264
        %v2266 = vmul.f32 %v1836, 1.442695
        %v2267 = vpow.pop %v2266
        %v2268 = vmul.f32 %v1837, 1.442695
        %v2269 = vpow.pop %v2268
        %v2270 = vmul.f32 %v1838, 1.442695
        %v2271 = vpow.pop %v2270
        %v2272 = vmul.f32 %v1839, 1.442695
        %v2273 = vpow.pop %v2272
        %v2274 = vmul.f32 %v1840, 1.442695
        %v2275 = vpow.pop %v2274
        %v2276 = vmul.f32 %v1841, 1.442695
        %v2277 = vpow.pop %v2276
        %v2278 = vmul.f32 %v1842, 1.442695
        %v2279 = vpow.pop %v2278
        %v2280 = vmul.f32 %v1843, 1.442695
        %v2281 = vpow.pop %v2280
        %v2282 = vmul.f32 %v1844, 1.442695
        %v2283 = vpow.pop %v2282
        %v2284 = vmul.f32 %v1845, 1.442695
        %v2285 = vpow.pop %v2284
        %v2286 = vmul.f32 %v1846, 1.442695
        %v2287 = vpow.pop %v2286
        %v2288 = vmul.f32 %v1847, 1.442695
        %v2289 = vpow.pop %v2288
        %v2290 = vmul.f32 %v1848, 1.442695
        %v2291 = vpow.pop %v2290
        %v2292 = vmul.f32 %v1849, 1.442695
        %v2293 = vpow.pop %v2292
        %v2294 = vmul.f32 %v1850, 1.442695
        %v2295 = vpow.pop %v2294
        %v2296 = vmul.f32 %v1851, 1.442695
        %v2297 = vpow.pop %v2296
        %v2298 = vmul.f32 %v1852, 1.442695
        %v2299 = vpow.pop %v2298
        %v2300 = vmul.f32 %v1853, 1.442695
        %v2301 = vpow.pop %v2300
        %v2302 = vmul.f32 %v1854, 1.442695
        %v2303 = vpow.pop %v2302
        %v2304 = vmul.f32 %v1855, 1.442695
        %v2305 = vpow.pop %v2304
        %v2306 = vmul.f32 %v1856, 1.442695
        %v2307 = vpow.pop %v2306
        %v2308 = vmul.f32 %v1857, 1.442695
        %v2309 = vpow.pop %v2308
        %v2310 = vmul.f32 %v1858, 1.442695
        %v2311 = vpow.pop %v2310
        %v2312 = vmul.f32 %v1859, 1.442695
        %v2313 = vpow.pop %v2312
        %v2314 = vmul.f32 %v1860, 1.442695
        %v2315 = vpow.pop %v2314
        %v2316 = vmul.f32 %v1861, 1.442695
        %v2317 = vpow.pop %v2316
        %v2318 = vmul.f32 %v1862, 1.442695
        %v2319 = vpow.pop %v2318
        %v2320 = vmul.f32 %v1863, 1.442695
        %v2321 = vpow.pop %v2320
        %v2322 = vmul.f32 %v1864, 1.442695
        %v2323 = vpow.pop %v2322
        %v2324 = vmul.f32 %v1865, 1.442695
        %v2325 = vpow.pop %v2324
        %v2326 = vmul.f32 %v1866, 1.442695
        %v2327 = vpow.pop %v2326
        %v2328 = vmul.f32 %v1867, 1.442695
        %v2329 = vpow.pop %v2328
        %v2330 = vmul.f32 %v1868, 1.442695
        %v2331 = vpow.pop %v2330
        %v2332 = vmul.f32 %v1869, 1.442695
        %v2333 = vpow.pop %v2332
        %v2334 = vmul.f32 %v1870, 1.442695
        %v2335 = vpow.pop %v2334
        %v2336 = vmul.f32 %v1871, 1.442695
        %v2337 = vpow.pop %v2336
        %v2338 = vmul.f32 %v1872, 1.442695
        %v2339 = vpow.pop %v2338
        %v2340 = vmul.f32 %v1873, 1.442695
        %v2341 = vpow.pop %v2340
        %v2342 = vmul.f32 %v1874, 1.442695
        %v2343 = vpow.pop %v2342
        %v2344 = vmul.f32 %v1875, 1.442695
        %v2345 = vpow.pop %v2344
        %v2346 = vmul.f32 %v1876, 1.442695
        %v2347 = vpow.pop %v2346
        %v2348 = vmul.f32 %v1877, 1.442695
        %v2349 = vpow.pop %v2348
        %v2350 = vmul.f32 %v1878, 1.442695
        %v2351 = vpow.pop %v2350
        %v2352 = vmul.f32 %v1879, 1.442695
        %v2353 = vpow.pop %v2352
        %v2354 = vmul.f32 %v1880, 1.442695
        %v2355 = vpow.pop %v2354
        %v2356 = vmul.f32 %v1881, 1.442695
        %v2357 = vpow.pop %v2356
        %v2358 = vmul.f32 %v1882, 1.442695
        %v2359 = vpow.pop %v2358
        %v2360 = vmul.f32 %v1883, 1.442695
        %v2361 = vpow.pop %v2360
        %v2362 = vmul.f32 %v1884, 1.442695
        %v2363 = vpow.pop %v2362
        %v2364 = vmul.f32 %v1885, 1.442695
        %v2365 = vpow.pop %v2364
        %v2366 = vmul.f32 %v1886, 1.442695
        %v2367 = vpow.pop %v2366
        %v2368 = vmul.f32 %v1887, 1.442695
        %v2369 = vpow.pop %v2368
        %v2370 = vmul.f32 %v1888, 1.442695
        %v2371 = vpow.pop %v2370
        %v2372 = vmul.f32 %v1889, 1.442695
        %v2373 = vpow.pop %v2372
        %v2374 = vmul.f32 %v1890, 1.442695
        %v2375 = vpow.pop %v2374
        %v2376 = vmul.f32 %v1891, 1.442695
        %v2377 = vpow.pop %v2376
        %v2378 = vmul.f32 %v1892, 1.442695
        %v2379 = vpow.pop %v2378
        %v2380 = vmul.f32 %v1893, 1.442695
        %v2381 = vpow.pop %v2380
        %v2382 = vmul.f32 %v1894, 1.442695
        %v2383 = vpow.pop %v2382
        %v2384 = vmul.f32 %v1895, 1.442695
        %v2385 = vpow.pop %v2384
        %v2386 = vmul.f32 %v1896, 1.442695
        %v2387 = vpow.pop %v2386
        %v2388 = vmul.f32 %v1897, 1.442695
        %v2389 = vpow.pop %v2388
        %v2390 = vmul.f32 %v1898, 1.442695
        %v2391 = vpow.pop %v2390
        %v2392 = vmul.f32 %v1899, 1.442695
        %v2393 = vpow.pop %v2392
        %v2394 = vmul.f32 %v1900, 1.442695
        %v2395 = vpow.pop %v2394
        %v2396 = vmul.f32 %v1901, 1.442695
        %v2397 = vpow.pop %v2396
        %v2398 = vmul.f32 %v1902, 1.442695
        %v2399 = vpow.pop %v2398
        %v2400 = vmul.f32 %v1903, 1.442695
        %v2401 = vpow.pop %v2400
        %v2402 = vmul.f32 %v1904, 1.442695
        %v2403 = vpow.pop %v2402
        %v2404 = vmul.f32 %v1905, 1.442695
        %v2405 = vpow.pop %v2404
        %v2406 = vmul.f32 %v1906, 1.442695
        %v2407 = vpow.pop %v2406
        %v2408 = vmul.f32 %v1907, 1.442695
        %v2409 = vpow.pop %v2408
        %v2410 = vmul.f32 %v1908, 1.442695
        %v2411 = vpow.pop %v2410
        %v2412 = vmul.f32 %v1909, 1.442695
        %v2413 = vpow.pop %v2412
        %v2414 = vmul.f32 %v1910, 1.442695
        %v2415 = vpow.pop %v2414
        %v2416 = vmul.f32 %v1911, 1.442695
        %v2417 = vpow.pop %v2416
        %v2418 = vmul.f32 %v1912, 1.442695
        %v2419 = vpow.pop %v2418
        %v2420 = vmul.f32 %v1913, 1.442695
        %v2421 = vpow.pop %v2420
        %v2422 = vmul.f32 %v1914, 1.442695
        %v2423 = vpow.pop %v2422
        %v2424 = vmul.f32 %v1915, 1.442695
        %v2425 = vpow.pop %v2424
        %v2426 = vmul.f32 %v1916, 1.442695
        %v2427 = vpow.pop %v2426
        %v2428 = vmul.f32 %v1917, 1.442695
        %v2429 = vpow.pop %v2428
        %v2430 = vpack.c.bf16 %v1927, %v1919
        %v2431 = vpack.c.bf16 %v1929, %v1921
        %v2432 = vpack.c.bf16 %v1931, %v1923
        %v2433 = vpack.c.bf16 %v1933, %v1925
        %v2434 = vpack.c.bf16 %v1943, %v1935
        %v2435 = vpack.c.bf16 %v1945, %v1937
        %v2436 = vpack.c.bf16 %v1947, %v1939
        %v2437 = vpack.c.bf16 %v1949, %v1941
        %v2438 = vpack.c.bf16 %v1959, %v1951
        %v2439 = vpack.c.bf16 %v1961, %v1953
        %v2440 = vpack.c.bf16 %v1963, %v1955
        %v2441 = vpack.c.bf16 %v1965, %v1957
        %v2442 = vpack.c.bf16 %v1975, %v1967
        %v2443 = vpack.c.bf16 %v1977, %v1969
        %v2444 = vpack.c.bf16 %v1979, %v1971
        %v2445 = vpack.c.bf16 %v1981, %v1973
        %v2446 = vpack.c.bf16 %v1991, %v1983
        %v2447 = vpack.c.bf16 %v1993, %v1985
        %v2448 = vpack.c.bf16 %v1995, %v1987
        %v2449 = vpack.c.bf16 %v1997, %v1989
        %v2450 = vpack.c.bf16 %v2007, %v1999
        %v2451 = vpack.c.bf16 %v2009, %v2001
        %v2452 = vpack.c.bf16 %v2011, %v2003
        %v2453 = vpack.c.bf16 %v2013, %v2005
        %v2454 = vpack.c.bf16 %v2023, %v2015
        %v2455 = vpack.c.bf16 %v2025, %v2017
        %v2456 = vpack.c.bf16 %v2027, %v2019
        %v2457 = vpack.c.bf16 %v2029, %v2021
        %v2458 = vpack.c.bf16 %v2039, %v2031
        %v2459 = vpack.c.bf16 %v2041, %v2033
        %v2460 = vpack.c.bf16 %v2043, %v2035
        %v2461 = vpack.c.bf16 %v2045, %v2037
        %v2462 = vpack.c.bf16 %v2055, %v2047
        %v2463 = vpack.c.bf16 %v2057, %v2049
        %v2464 = vpack.c.bf16 %v2059, %v2051
        %v2465 = vpack.c.bf16 %v2061, %v2053
        %v2466 = vpack.c.bf16 %v2071, %v2063
        %v2467 = vpack.c.bf16 %v2073, %v2065
        %v2468 = vpack.c.bf16 %v2075, %v2067
        %v2469 = vpack.c.bf16 %v2077, %v2069
        %v2470 = vpack.c.bf16 %v2087, %v2079
        %v2471 = vpack.c.bf16 %v2089, %v2081
        %v2472 = vpack.c.bf16 %v2091, %v2083
        %v2473 = vpack.c.bf16 %v2093, %v2085
        %v2474 = vpack.c.bf16 %v2103, %v2095
        %v2475 = vpack.c.bf16 %v2105, %v2097
        %v2476 = vpack.c.bf16 %v2107, %v2099
        %v2477 = vpack.c.bf16 %v2109, %v2101
        %v2478 = vpack.c.bf16 %v2119, %v2111
        %v2479 = vpack.c.bf16 %v2121, %v2113
        %v2480 = vpack.c.bf16 %v2123, %v2115
        %v2481 = vpack.c.bf16 %v2125, %v2117
        %v2482 = vpack.c.bf16 %v2135, %v2127
        %v2483 = vpack.c.bf16 %v2137, %v2129
        %v2484 = vpack.c.bf16 %v2139, %v2131
        %v2485 = vpack.c.bf16 %v2141, %v2133
        %v2486 = vpack.c.bf16 %v2151, %v2143
        %v2487 = vpack.c.bf16 %v2153, %v2145
        %v2488 = vpack.c.bf16 %v2155, %v2147
        %v2489 = vpack.c.bf16 %v2157, %v2149
        %v2490 = vpack.c.bf16 %v2167, %v2159
        %v2491 = vpack.c.bf16 %v2169, %v2161
        %v2492 = vpack.c.bf16 %v2171, %v2163
        %v2493 = vpack.c.bf16 %v2173, %v2165
        %v2494 = vpack.c.bf16 %v2183, %v2175
        %v2495 = vpack.c.bf16 %v2185, %v2177
        %v2496 = vpack.c.bf16 %v2187, %v2179
        %v2497 = vpack.c.bf16 %v2189, %v2181
        %v2498 = vpack.c.bf16 %v2199, %v2191
        %v2499 = vpack.c.bf16 %v2201, %v2193
        %v2500 = vpack.c.bf16 %v2203, %v2195
        %v2501 = vpack.c.bf16 %v2205, %v2197
        %v2502 = vpack.c.bf16 %v2215, %v2207
        %v2503 = vpack.c.bf16 %v2217, %v2209
        %v2504 = vpack.c.bf16 %v2219, %v2211
        %v2505 = vpack.c.bf16 %v2221, %v2213
        %v2506 = vpack.c.bf16 %v2231, %v2223
        %v2507 = vpack.c.bf16 %v2233, %v2225
        %v2508 = vpack.c.bf16 %v2235, %v2227
        %v2509 = vpack.c.bf16 %v2237, %v2229
        %v2510 = vpack.c.bf16 %v2247, %v2239
        %v2511 = vpack.c.bf16 %v2249, %v2241
        %v2512 = vpack.c.bf16 %v2251, %v2243
        %v2513 = vpack.c.bf16 %v2253, %v2245
        %v2514 = vpack.c.bf16 %v2263, %v2255
        %v2515 = vpack.c.bf16 %v2265, %v2257
        %v2516 = vpack.c.bf16 %v2267, %v2259
        %v2517 = vpack.c.bf16 %v2269, %v2261
        %v2518 = vpack.c.bf16 %v2279, %v2271
        %v2519 = vpack.c.bf16 %v2281, %v2273
        %v2520 = vpack.c.bf16 %v2283, %v2275
        %v2521 = vpack.c.bf16 %v2285, %v2277
        %v2522 = vpack.c.bf16 %v2295, %v2287
        %v2523 = vpack.c.bf16 %v2297, %v2289
        %v2524 = vpack.c.bf16 %v2299, %v2291
        %v2525 = vpack.c.bf16 %v2301, %v2293
        %v2526 = vpack.c.bf16 %v2311, %v2303
        %v2527 = vpack.c.bf16 %v2313, %v2305
        %v2528 = vpack.c.bf16 %v2315, %v2307
        %v2529 = vpack.c.bf16 %v2317, %v2309
        %v2530 = vpack.c.bf16 %v2327, %v2319
        %v2531 = vpack.c.bf16 %v2329, %v2321
        %v2532 = vpack.c.bf16 %v2331, %v2323
        %v2533 = vpack.c.bf16 %v2333, %v2325
        %v2534 = vpack.c.bf16 %v2343, %v2335
        %v2535 = vpack.c.bf16 %v2345, %v2337
        %v2536 = vpack.c.bf16 %v2347, %v2339
        %v2537 = vpack.c.bf16 %v2349, %v2341
        %v2538 = vpack.c.bf16 %v2359, %v2351
        %v2539 = vpack.c.bf16 %v2361, %v2353
        %v2540 = vpack.c.bf16 %v2363, %v2355
        %v2541 = vpack.c.bf16 %v2365, %v2357
        %v2542 = vpack.c.bf16 %v2375, %v2367
        %v2543 = vpack.c.bf16 %v2377, %v2369
        %v2544 = vpack.c.bf16 %v2379, %v2371
        %v2545 = vpack.c.bf16 %v2381, %v2373
        %v2546 = vpack.c.bf16 %v2391, %v2383
        %v2547 = vpack.c.bf16 %v2393, %v2385
        %v2548 = vpack.c.bf16 %v2395, %v2387
        %v2549 = vpack.c.bf16 %v2397, %v2389
        %v2550 = vpack.c.bf16 %v2407, %v2399
        %v2551 = vpack.c.bf16 %v2409, %v2401
        %v2552 = vpack.c.bf16 %v2411, %v2403
        %v2553 = vpack.c.bf16 %v2413, %v2405
        %v2554 = vpack.c.bf16 %v2423, %v2415
        %v2555 = vpack.c.bf16 %v2425, %v2417
        %v2556 = vpack.c.bf16 %v2427, %v2419
        %v2557 = vpack.c.bf16 %v2429, %v2421
        %v2558 = vld [vmem:[%s406] sm:$0xff]
        %v2559 = vld [vmem:[%s406 + $0x8] sm:$0xff]
        %v2560 = vld [vmem:[%s406 + $0x10] sm:$0xff]
        %v2561 = vld [vmem:[%s406 + $0x18] sm:$0xff]
        %v2562 = vld [vmem:[%s406 + $0x20] sm:$0xff]
        %v2563 = vld [vmem:[%s406 + $0x28] sm:$0xff]
        %v2564 = vld [vmem:[%s406 + $0x30] sm:$0xff]
        %v2565 = vld [vmem:[%s406 + $0x38] sm:$0xff]
        %v2566 = vld [vmem:[%s406 + $0x40] sm:$0xff]
        %v2567 = vld [vmem:[%s406 + $0x48] sm:$0xff]
        %v2568 = vld [vmem:[%s406 + $0x50] sm:$0xff]
        %v2569 = vld [vmem:[%s406 + $0x58] sm:$0xff]
        %v2570 = vld [vmem:[%s406 + $0x60] sm:$0xff]
        %v2571 = vld [vmem:[%s406 + $0x68] sm:$0xff]
        %v2572 = vld [vmem:[%s406 + $0x70] sm:$0xff]
        %v2573 = vld [vmem:[%s406 + $0x78] sm:$0xff]
        %v2574 = vld [vmem:[%s406 + $0x80] sm:$0xff]
        %v2575 = vld [vmem:[%s406 + $0x88] sm:$0xff]
        %v2576 = vld [vmem:[%s406 + $0x90] sm:$0xff]
        %v2577 = vld [vmem:[%s406 + $0x98] sm:$0xff]
        %v2578 = vld [vmem:[%s406 + $0xa0] sm:$0xff]
        %v2579 = vld [vmem:[%s406 + $0xa8] sm:$0xff]
        %v2580 = vld [vmem:[%s406 + $0xb0] sm:$0xff]
        %v2581 = vld [vmem:[%s406 + $0xb8] sm:$0xff]
        %v2582 = vld [vmem:[%s406 + $0xc0] sm:$0xff]
        %v2583 = vld [vmem:[%s406 + $0xc8] sm:$0xff]
        %v2584 = vld [vmem:[%s406 + $0xd0] sm:$0xff]
        %v2585 = vld [vmem:[%s406 + $0xd8] sm:$0xff]
        %v2586 = vld [vmem:[%s406 + $0xe0] sm:$0xff]
        %v2587 = vld [vmem:[%s406 + $0xe8] sm:$0xff]
        %v2588 = vld [vmem:[%s406 + $0xf0] sm:$0xff]
        %v2589 = vld [vmem:[%s406 + $0xf8] sm:$0xff]
        %v2590 = vld [vmem:[%s406 + $0x100] sm:$0xff]
        %v2591 = vld [vmem:[%s406 + $0x108] sm:$0xff]
        %v2592 = vld [vmem:[%s406 + $0x110] sm:$0xff]
        %v2593 = vld [vmem:[%s406 + $0x118] sm:$0xff]
        %v2594 = vld [vmem:[%s406 + $0x120] sm:$0xff]
        %v2595 = vld [vmem:[%s406 + $0x128] sm:$0xff]
        %v2596 = vld [vmem:[%s406 + $0x130] sm:$0xff]
        %v2597 = vld [vmem:[%s406 + $0x138] sm:$0xff]
        %v2598 = vld [vmem:[%s406 + $0x140] sm:$0xff]
        %v2599 = vld [vmem:[%s406 + $0x148] sm:$0xff]
        %v2600 = vld [vmem:[%s406 + $0x150] sm:$0xff]
        %v2601 = vld [vmem:[%s406 + $0x158] sm:$0xff]
        %v2602 = vld [vmem:[%s406 + $0x160] sm:$0xff]
        %v2603 = vld [vmem:[%s406 + $0x168] sm:$0xff]
        %v2604 = vld [vmem:[%s406 + $0x170] sm:$0xff]
        %v2605 = vld [vmem:[%s406 + $0x178] sm:$0xff]
        %v2606 = vld [vmem:[%s406 + $0x180] sm:$0xff]
        %v2607 = vld [vmem:[%s406 + $0x188] sm:$0xff]
        %v2608 = vld [vmem:[%s406 + $0x190] sm:$0xff]
        %v2609 = vld [vmem:[%s406 + $0x198] sm:$0xff]
        %v2610 = vld [vmem:[%s406 + $0x1a0] sm:$0xff]
        %v2611 = vld [vmem:[%s406 + $0x1a8] sm:$0xff]
        %v2612 = vld [vmem:[%s406 + $0x1b0] sm:$0xff]
        %v2613 = vld [vmem:[%s406 + $0x1b8] sm:$0xff]
        %v2614 = vld [vmem:[%s406 + $0x1c0] sm:$0xff]
        %v2615 = vld [vmem:[%s406 + $0x1c8] sm:$0xff]
        %v2616 = vld [vmem:[%s406 + $0x1d0] sm:$0xff]
        %v2617 = vld [vmem:[%s406 + $0x1d8] sm:$0xff]
        %v2618 = vld [vmem:[%s406 + $0x1e0] sm:$0xff]
        %v2619 = vld [vmem:[%s406 + $0x1e8] sm:$0xff]
        %v2620 = vld [vmem:[%s406 + $0x1f0] sm:$0xff]
        %v2621 = vld [vmem:[%s406 + $0x1f8] sm:$0xff]
        %v2622 = vpack.c.bf16 %v2559, %v2558
        %v2623 = vpack.c.bf16 %v2561, %v2560
        %v2624 = vpack.c.bf16 %v2563, %v2562
        %v2625 = vpack.c.bf16 %v2565, %v2564
        %v2626 = vpack.c.bf16 %v2567, %v2566
        %v2627 = vpack.c.bf16 %v2569, %v2568
        %v2628 = vpack.c.bf16 %v2571, %v2570
        %v2629 = vpack.c.bf16 %v2573, %v2572
        %v2630 = vpack.c.bf16 %v2575, %v2574
        %v2631 = vpack.c.bf16 %v2577, %v2576
        %v2632 = vpack.c.bf16 %v2579, %v2578
        %v2633 = vpack.c.bf16 %v2581, %v2580
        %v2634 = vpack.c.bf16 %v2583, %v2582
        %v2635 = vpack.c.bf16 %v2585, %v2584
        %v2636 = vpack.c.bf16 %v2587, %v2586
        %v2637 = vpack.c.bf16 %v2589, %v2588
        %v2638 = vpack.c.bf16 %v2591, %v2590
        %v2639 = vpack.c.bf16 %v2593, %v2592
        %v2640 = vpack.c.bf16 %v2595, %v2594
        %v2641 = vpack.c.bf16 %v2597, %v2596
        %v2642 = vpack.c.bf16 %v2599, %v2598
        %v2643 = vpack.c.bf16 %v2601, %v2600
        %v2644 = vpack.c.bf16 %v2603, %v2602
        %v2645 = vpack.c.bf16 %v2605, %v2604
        %v2646 = vpack.c.bf16 %v2607, %v2606
        %v2647 = vpack.c.bf16 %v2609, %v2608
        %v2648 = vpack.c.bf16 %v2611, %v2610
        %v2649 = vpack.c.bf16 %v2613, %v2612
        %v2650 = vpack.c.bf16 %v2615, %v2614
        %v2651 = vpack.c.bf16 %v2617, %v2616
        %v2652 = vpack.c.bf16 %v2619, %v2618
        %v2653 = vpack.c.bf16 %v2621, %v2620
        %2654 = vmatprep.subr.bf16.mxu0 0
        %2655 = vmatpush1.bf16.msra.mxu0 %v2629
        %2656 = vmatprep.subr.bf16.mxu0 0
        %2657 = vmatpush1.bf16.msra.mxu0 %v2628
        %2658 = vmatprep.subr.bf16.mxu0 0
        %2659 = vmatpush1.bf16.msra.mxu0 %v2627
        %2660 = vmatprep.subr.bf16.mxu0 0
        %2661 = vmatpush1.bf16.msra.mxu0 %v2626
        %2662 = vmatprep.subr.bf16.mxu0 0
        %2663 = vmatpush1.bf16.msra.mxu0 %v2625
        %2664 = vmatprep.subr.bf16.mxu0 0
        %2665 = vmatpush1.bf16.msra.mxu0 %v2624
        %2666 = vmatprep.subr.bf16.mxu0 0
        %2667 = vmatpush1.bf16.msra.mxu0 %v2623
        %2668 = vmatprep.subr.bf16.mxu0 0
        %2669 = vmatpush1.bf16.msra.mxu0 %v2622
        %2670 = vmatprep.subr.bf16.mxu0 0
        %2671 = vmatpush2.bf16.msra.mxu0 %v2637
        %2672 = vmatprep.subr.bf16.mxu0 0
        %2673 = vmatpush2.bf16.msra.mxu0 %v2636
        %2674 = vmatprep.subr.bf16.mxu0 0
        %2675 = vmatpush2.bf16.msra.mxu0 %v2635
        %2676 = vmatprep.subr.bf16.mxu0 0
        %2677 = vmatpush2.bf16.msra.mxu0 %v2634
        %2678 = vmatprep.subr.bf16.mxu0 0
        %2679 = vmatpush2.bf16.msra.mxu0 %v2633
        %2680 = vmatprep.subr.bf16.mxu0 0
        %2681 = vmatpush2.bf16.msra.mxu0 %v2632
        %2682 = vmatprep.subr.bf16.mxu0 0
        %2683 = vmatpush2.bf16.msra.mxu0 %v2631
        %2684 = vmatprep.subr.bf16.mxu0 0
        %2685 = vmatpush2.bf16.msra.mxu0 %v2630
        %2686 = vmatprep.mubr.bf16.mxu0 %v2431
        %2687 = vmatmul.mubr.bf16.gmra.mxu0 %v2430
        %v2688 = vpop.f32.mrf.mxu0
        %v2689 = vadd.f32 0.0, %v2688
        %v2690 = vpop.f32.mrf.mxu0
        %v2691 = vpop.f32.mrf.mxu0
        %v2692 = vadd.f32 0.0, %v2691
        %v2693 = vpop.f32.mrf.mxu0
        %2694 = vmatprep.mubr.bf16.mxu0 %v2435
        %2695 = vmatmul.mubr.bf16.gmra.mxu0 %v2434
        %v2696 = vpop.f32.mrf.mxu0
        %v2697 = vadd.f32 0.0, %v2696
        %v2698 = vpop.f32.mrf.mxu0
        %v2699 = vpop.f32.mrf.mxu0
        %v2700 = vadd.f32 0.0, %v2699
        %v2701 = vpop.f32.mrf.mxu0
        %2702 = vmatprep.mubr.bf16.mxu0 %v2439
        %2703 = vmatmul.mubr.bf16.gmra.mxu0 %v2438
        %v2704 = vpop.f32.mrf.mxu0
        %v2705 = vadd.f32 0.0, %v2704
        %v2706 = vpop.f32.mrf.mxu0
        %v2707 = vpop.f32.mrf.mxu0
        %v2708 = vadd.f32 0.0, %v2707
        %v2709 = vpop.f32.mrf.mxu0
        %2710 = vmatprep.mubr.bf16.mxu0 %v2443
        %2711 = vmatmul.mubr.bf16.gmra.mxu0 %v2442
        %v2712 = vpop.f32.mrf.mxu0
        %v2713 = vadd.f32 0.0, %v2712
        %v2714 = vpop.f32.mrf.mxu0
        %v2715 = vpop.f32.mrf.mxu0
        %v2716 = vadd.f32 0.0, %v2715
        %v2717 = vpop.f32.mrf.mxu0
        %2718 = vmatprep.mubr.bf16.mxu0 %v2447
        %2719 = vmatmul.mubr.bf16.gmra.mxu0 %v2446
        %v2720 = vpop.f32.mrf.mxu0
        %v2721 = vadd.f32 0.0, %v2720
        %v2722 = vpop.f32.mrf.mxu0
        %v2723 = vpop.f32.mrf.mxu0
        %v2724 = vadd.f32 0.0, %v2723
        %v2725 = vpop.f32.mrf.mxu0
        %2726 = vmatprep.mubr.bf16.mxu0 %v2451
        %2727 = vmatmul.mubr.bf16.gmra.mxu0 %v2450
        %v2728 = vpop.f32.mrf.mxu0
        %v2729 = vadd.f32 0.0, %v2728
        %v2730 = vpop.f32.mrf.mxu0
        %v2731 = vpop.f32.mrf.mxu0
        %v2732 = vadd.f32 0.0, %v2731
        %v2733 = vpop.f32.mrf.mxu0
        %2734 = vmatprep.mubr.bf16.mxu0 %v2455
        %2735 = vmatmul.mubr.bf16.gmra.mxu0 %v2454
        %v2736 = vpop.f32.mrf.mxu0
        %v2737 = vadd.f32 0.0, %v2736
        %v2738 = vpop.f32.mrf.mxu0
        %v2739 = vpop.f32.mrf.mxu0
        %v2740 = vadd.f32 0.0, %v2739
        %v2741 = vpop.f32.mrf.mxu0
        %2742 = vmatprep.mubr.bf16.mxu0 %v2459
        %2743 = vmatmul.mubr.bf16.gmra.mxu0 %v2458
        %v2744 = vpop.f32.mrf.mxu0
        %v2745 = vadd.f32 0.0, %v2744
        %v2746 = vpop.f32.mrf.mxu0
        %v2747 = vpop.f32.mrf.mxu0
        %v2748 = vadd.f32 0.0, %v2747
        %v2749 = vpop.f32.mrf.mxu0
        %2750 = vmatprep.mubr.bf16.mxu0 %v2463
        %2751 = vmatmul.mubr.bf16.gmra.mxu0 %v2462
        %v2752 = vpop.f32.mrf.mxu0
        %v2753 = vadd.f32 0.0, %v2752
        %v2754 = vpop.f32.mrf.mxu0
        %v2755 = vpop.f32.mrf.mxu0
        %v2756 = vadd.f32 0.0, %v2755
        %v2757 = vpop.f32.mrf.mxu0
        %2758 = vmatprep.mubr.bf16.mxu0 %v2467
        %2759 = vmatmul.mubr.bf16.gmra.mxu0 %v2466
        %v2760 = vpop.f32.mrf.mxu0
        %v2761 = vadd.f32 0.0, %v2760
        %v2762 = vpop.f32.mrf.mxu0
        %v2763 = vpop.f32.mrf.mxu0
        %v2764 = vadd.f32 0.0, %v2763
        %v2765 = vpop.f32.mrf.mxu0
        %2766 = vmatprep.mubr.bf16.mxu0 %v2471
        %2767 = vmatmul.mubr.bf16.gmra.mxu0 %v2470
        %v2768 = vpop.f32.mrf.mxu0
        %v2769 = vadd.f32 0.0, %v2768
        %v2770 = vpop.f32.mrf.mxu0
        %v2771 = vpop.f32.mrf.mxu0
        %v2772 = vadd.f32 0.0, %v2771
        %v2773 = vpop.f32.mrf.mxu0
        %2774 = vmatprep.mubr.bf16.mxu0 %v2475
        %2775 = vmatmul.mubr.bf16.gmra.mxu0 %v2474
        %v2776 = vpop.f32.mrf.mxu0
        %v2777 = vadd.f32 0.0, %v2776
        %v2778 = vpop.f32.mrf.mxu0
        %v2779 = vpop.f32.mrf.mxu0
        %v2780 = vadd.f32 0.0, %v2779
        %v2781 = vpop.f32.mrf.mxu0
        %2782 = vmatprep.mubr.bf16.mxu0 %v2479
        %2783 = vmatmul.mubr.bf16.gmra.mxu0 %v2478
        %v2784 = vpop.f32.mrf.mxu0
        %v2785 = vadd.f32 0.0, %v2784
        %v2786 = vpop.f32.mrf.mxu0
        %v2787 = vpop.f32.mrf.mxu0
        %v2788 = vadd.f32 0.0, %v2787
        %v2789 = vpop.f32.mrf.mxu0
        %2790 = vmatprep.mubr.bf16.mxu0 %v2483
        %2791 = vmatmul.mubr.bf16.gmra.mxu0 %v2482
        %v2792 = vpop.f32.mrf.mxu0
        %v2793 = vadd.f32 0.0, %v2792
        %v2794 = vpop.f32.mrf.mxu0
        %v2795 = vpop.f32.mrf.mxu0
        %v2796 = vadd.f32 0.0, %v2795
        %v2797 = vpop.f32.mrf.mxu0
        %2798 = vmatprep.mubr.bf16.mxu0 %v2487
        %2799 = vmatmul.mubr.bf16.gmra.mxu0 %v2486
        %v2800 = vpop.f32.mrf.mxu0
        %v2801 = vadd.f32 0.0, %v2800
        %v2802 = vpop.f32.mrf.mxu0
        %v2803 = vpop.f32.mrf.mxu0
        %v2804 = vadd.f32 0.0, %v2803
        %v2805 = vpop.f32.mrf.mxu0
        %2806 = vmatprep.mubr.bf16.mxu0 %v2491
        %2807 = vmatmul.mubr.bf16.gmra.mxu0 %v2490
        %v2808 = vpop.f32.mrf.mxu0
        %v2809 = vadd.f32 0.0, %v2808
        %v2810 = vpop.f32.mrf.mxu0
        %v2811 = vpop.f32.mrf.mxu0
        %v2812 = vadd.f32 0.0, %v2811
        %v2813 = vpop.f32.mrf.mxu0
        %2814 = vmatprep.mubr.bf16.mxu0 %v2495
        %2815 = vmatmul.mubr.bf16.gmra.mxu0 %v2494
        %v2816 = vpop.f32.mrf.mxu0
        %v2817 = vadd.f32 0.0, %v2816
        %v2818 = vpop.f32.mrf.mxu0
        %v2819 = vpop.f32.mrf.mxu0
        %v2820 = vadd.f32 0.0, %v2819
        %v2821 = vpop.f32.mrf.mxu0
        %2822 = vmatprep.mubr.bf16.mxu0 %v2499
        %2823 = vmatmul.mubr.bf16.gmra.mxu0 %v2498
        %v2824 = vpop.f32.mrf.mxu0
        %v2825 = vadd.f32 0.0, %v2824
        %v2826 = vpop.f32.mrf.mxu0
        %v2827 = vpop.f32.mrf.mxu0
        %v2828 = vadd.f32 0.0, %v2827
        %v2829 = vpop.f32.mrf.mxu0
        %2830 = vmatprep.mubr.bf16.mxu0 %v2503
        %2831 = vmatmul.mubr.bf16.gmra.mxu0 %v2502
        %v2832 = vpop.f32.mrf.mxu0
        %v2833 = vadd.f32 0.0, %v2832
        %v2834 = vpop.f32.mrf.mxu0
        %v2835 = vpop.f32.mrf.mxu0
        %v2836 = vadd.f32 0.0, %v2835
        %v2837 = vpop.f32.mrf.mxu0
        %2838 = vmatprep.mubr.bf16.mxu0 %v2507
        %2839 = vmatmul.mubr.bf16.gmra.mxu0 %v2506
        %v2840 = vpop.f32.mrf.mxu0
        %v2841 = vadd.f32 0.0, %v2840
        %v2842 = vpop.f32.mrf.mxu0
        %v2843 = vpop.f32.mrf.mxu0
        %v2844 = vadd.f32 0.0, %v2843
        %v2845 = vpop.f32.mrf.mxu0
        %2846 = vmatprep.mubr.bf16.mxu0 %v2511
        %2847 = vmatmul.mubr.bf16.gmra.mxu0 %v2510
        %v2848 = vpop.f32.mrf.mxu0
        %v2849 = vadd.f32 0.0, %v2848
        %v2850 = vpop.f32.mrf.mxu0
        %v2851 = vpop.f32.mrf.mxu0
        %v2852 = vadd.f32 0.0, %v2851
        %v2853 = vpop.f32.mrf.mxu0
        %2854 = vmatprep.mubr.bf16.mxu0 %v2515
        %2855 = vmatmul.mubr.bf16.gmra.mxu0 %v2514
        %v2856 = vpop.f32.mrf.mxu0
        %v2857 = vadd.f32 0.0, %v2856
        %v2858 = vpop.f32.mrf.mxu0
        %v2859 = vpop.f32.mrf.mxu0
        %v2860 = vadd.f32 0.0, %v2859
        %v2861 = vpop.f32.mrf.mxu0
        %2862 = vmatprep.mubr.bf16.mxu0 %v2519
        %2863 = vmatmul.mubr.bf16.gmra.mxu0 %v2518
        %v2864 = vpop.f32.mrf.mxu0
        %v2865 = vadd.f32 0.0, %v2864
        %v2866 = vpop.f32.mrf.mxu0
        %v2867 = vpop.f32.mrf.mxu0
        %v2868 = vadd.f32 0.0, %v2867
        %v2869 = vpop.f32.mrf.mxu0
        %2870 = vmatprep.mubr.bf16.mxu0 %v2523
        %2871 = vmatmul.mubr.bf16.gmra.mxu0 %v2522
        %v2872 = vpop.f32.mrf.mxu0
        %v2873 = vadd.f32 0.0, %v2872
        %v2874 = vpop.f32.mrf.mxu0
        %v2875 = vpop.f32.mrf.mxu0
        %v2876 = vadd.f32 0.0, %v2875
        %v2877 = vpop.f32.mrf.mxu0
        %2878 = vmatprep.mubr.bf16.mxu0 %v2527
        %2879 = vmatmul.mubr.bf16.gmra.mxu0 %v2526
        %v2880 = vpop.f32.mrf.mxu0
        %v2881 = vadd.f32 0.0, %v2880
        %v2882 = vpop.f32.mrf.mxu0
        %v2883 = vpop.f32.mrf.mxu0
        %v2884 = vadd.f32 0.0, %v2883
        %v2885 = vpop.f32.mrf.mxu0
        %2886 = vmatprep.mubr.bf16.mxu0 %v2531
        %2887 = vmatmul.mubr.bf16.gmra.mxu0 %v2530
        %v2888 = vpop.f32.mrf.mxu0
        %v2889 = vadd.f32 0.0, %v2888
        %v2890 = vpop.f32.mrf.mxu0
        %v2891 = vpop.f32.mrf.mxu0
        %v2892 = vadd.f32 0.0, %v2891
        %v2893 = vpop.f32.mrf.mxu0
        %2894 = vmatprep.mubr.bf16.mxu0 %v2535
        %2895 = vmatmul.mubr.bf16.gmra.mxu0 %v2534
        %v2896 = vpop.f32.mrf.mxu0
        %v2897 = vadd.f32 0.0, %v2896
        %v2898 = vpop.f32.mrf.mxu0
        %v2899 = vpop.f32.mrf.mxu0
        %v2900 = vadd.f32 0.0, %v2899
        %v2901 = vpop.f32.mrf.mxu0
        %2902 = vmatprep.mubr.bf16.mxu0 %v2539
        %2903 = vmatmul.mubr.bf16.gmra.mxu0 %v2538
        %v2904 = vpop.f32.mrf.mxu0
        %v2905 = vadd.f32 0.0, %v2904
        %v2906 = vpop.f32.mrf.mxu0
        %v2907 = vpop.f32.mrf.mxu0
        %v2908 = vadd.f32 0.0, %v2907
        %v2909 = vpop.f32.mrf.mxu0
        %2910 = vmatprep.mubr.bf16.mxu0 %v2543
        %2911 = vmatmul.mubr.bf16.gmra.mxu0 %v2542
        %v2912 = vpop.f32.mrf.mxu0
        %v2913 = vadd.f32 0.0, %v2912
        %v2914 = vpop.f32.mrf.mxu0
        %v2915 = vpop.f32.mrf.mxu0
        %v2916 = vadd.f32 0.0, %v2915
        %v2917 = vpop.f32.mrf.mxu0
        %2918 = vmatprep.mubr.bf16.mxu0 %v2547
        %2919 = vmatmul.mubr.bf16.gmra.mxu0 %v2546
        %v2920 = vpop.f32.mrf.mxu0
        %v2921 = vadd.f32 0.0, %v2920
        %v2922 = vpop.f32.mrf.mxu0
        %v2923 = vpop.f32.mrf.mxu0
        %v2924 = vadd.f32 0.0, %v2923
        %v2925 = vpop.f32.mrf.mxu0
        %2926 = vmatprep.mubr.bf16.mxu0 %v2551
        %2927 = vmatmul.mubr.bf16.gmra.mxu0 %v2550
        %v2928 = vpop.f32.mrf.mxu0
        %v2929 = vadd.f32 0.0, %v2928
        %v2930 = vpop.f32.mrf.mxu0
        %v2931 = vpop.f32.mrf.mxu0
        %v2932 = vadd.f32 0.0, %v2931
        %v2933 = vpop.f32.mrf.mxu0
        %2934 = vmatprep.mubr.bf16.mxu0 %v2555
        %2935 = vmatmul.mubr.bf16.gmra.mxu0 %v2554
        %v2936 = vpop.f32.mrf.mxu0
        %v2937 = vadd.f32 0.0, %v2936
        %v2938 = vpop.f32.mrf.mxu0
        %v2939 = vpop.f32.mrf.mxu0
        %v2940 = vadd.f32 0.0, %v2939
        %v2941 = vpop.f32.mrf.mxu0
        %2942 = vdwg.mxu0
        %2943 = vmatprep.subr.bf16.mxu0 0
        %2944 = vmatpush1.bf16.msra.mxu0 %v2645
        %2945 = vmatprep.subr.bf16.mxu0 0
        %2946 = vmatpush1.bf16.msra.mxu0 %v2644
        %2947 = vmatprep.subr.bf16.mxu0 0
        %2948 = vmatpush1.bf16.msra.mxu0 %v2643
        %2949 = vmatprep.subr.bf16.mxu0 0
        %2950 = vmatpush1.bf16.msra.mxu0 %v2642
        %2951 = vmatprep.subr.bf16.mxu0 0
        %2952 = vmatpush1.bf16.msra.mxu0 %v2641
        %2953 = vmatprep.subr.bf16.mxu0 0
        %2954 = vmatpush1.bf16.msra.mxu0 %v2640
        %2955 = vmatprep.subr.bf16.mxu0 0
        %2956 = vmatpush1.bf16.msra.mxu0 %v2639
        %2957 = vmatprep.subr.bf16.mxu0 0
        %2958 = vmatpush1.bf16.msra.mxu0 %v2638
        %2959 = vmatprep.subr.bf16.mxu0 0
        %2960 = vmatpush2.bf16.msra.mxu0 %v2653
        %2961 = vmatprep.subr.bf16.mxu0 0
        %2962 = vmatpush2.bf16.msra.mxu0 %v2652
        %2963 = vmatprep.subr.bf16.mxu0 0
        %2964 = vmatpush2.bf16.msra.mxu0 %v2651
        %2965 = vmatprep.subr.bf16.mxu0 0
        %2966 = vmatpush2.bf16.msra.mxu0 %v2650
        %2967 = vmatprep.subr.bf16.mxu0 0
        %2968 = vmatpush2.bf16.msra.mxu0 %v2649
        %2969 = vmatprep.subr.bf16.mxu0 0
        %2970 = vmatpush2.bf16.msra.mxu0 %v2648
        %2971 = vmatprep.subr.bf16.mxu0 0
        %2972 = vmatpush2.bf16.msra.mxu0 %v2647
        %2973 = vmatprep.subr.bf16.mxu0 0
        %2974 = vmatpush2.bf16.msra.mxu0 %v2646
        %2975 = vmatprep.mubr.bf16.mxu0 %v2433
        %2976 = vmatmul.mubr.bf16.gmra.mxu0 %v2432
        %v2977 = vpop.f32.mrf.mxu0
        %v2978 = vadd.f32 %v2689, %v2977
        %v2979 = vpop.f32.mrf.mxu0
        %v2980 = vpop.f32.mrf.mxu0
        %v2981 = vadd.f32 %v2692, %v2980
        %v2982 = vpop.f32.mrf.mxu0
        %2983 = vmatprep.mubr.bf16.mxu0 %v2437
        %2984 = vmatmul.mubr.bf16.gmra.mxu0 %v2436
        %v2985 = vpop.f32.mrf.mxu0
        %v2986 = vadd.f32 %v2697, %v2985
        %v2987 = vpop.f32.mrf.mxu0
        %v2988 = vpop.f32.mrf.mxu0
        %v2989 = vadd.f32 %v2700, %v2988
        %v2990 = vpop.f32.mrf.mxu0
        %2991 = vmatprep.mubr.bf16.mxu0 %v2441
        %2992 = vmatmul.mubr.bf16.gmra.mxu0 %v2440
        %v2993 = vpop.f32.mrf.mxu0
        %v2994 = vadd.f32 %v2705, %v2993
        %v2995 = vpop.f32.mrf.mxu0
        %v2996 = vpop.f32.mrf.mxu0
        %v2997 = vadd.f32 %v2708, %v2996
        %v2998 = vpop.f32.mrf.mxu0
        %2999 = vmatprep.mubr.bf16.mxu0 %v2445
        %3000 = vmatmul.mubr.bf16.gmra.mxu0 %v2444
        %v3001 = vpop.f32.mrf.mxu0
        %v3002 = vadd.f32 %v2713, %v3001
        %v3003 = vpop.f32.mrf.mxu0
        %v3004 = vpop.f32.mrf.mxu0
        %v3005 = vadd.f32 %v2716, %v3004
        %v3006 = vpop.f32.mrf.mxu0
        %3007 = vmatprep.mubr.bf16.mxu0 %v2449
        %3008 = vmatmul.mubr.bf16.gmra.mxu0 %v2448
        %v3009 = vpop.f32.mrf.mxu0
        %v3010 = vadd.f32 %v2721, %v3009
        %v3011 = vpop.f32.mrf.mxu0
        %v3012 = vpop.f32.mrf.mxu0
        %v3013 = vadd.f32 %v2724, %v3012
        %v3014 = vpop.f32.mrf.mxu0
        %3015 = vmatprep.mubr.bf16.mxu0 %v2453
        %3016 = vmatmul.mubr.bf16.gmra.mxu0 %v2452
        %v3017 = vpop.f32.mrf.mxu0
        %v3018 = vadd.f32 %v2729, %v3017
        %v3019 = vpop.f32.mrf.mxu0
        %v3020 = vpop.f32.mrf.mxu0
        %v3021 = vadd.f32 %v2732, %v3020
        %v3022 = vpop.f32.mrf.mxu0
        %3023 = vmatprep.mubr.bf16.mxu0 %v2457
        %3024 = vmatmul.mubr.bf16.gmra.mxu0 %v2456
        %v3025 = vpop.f32.mrf.mxu0
        %v3026 = vadd.f32 %v2737, %v3025
        %v3027 = vpop.f32.mrf.mxu0
        %v3028 = vpop.f32.mrf.mxu0
        %v3029 = vadd.f32 %v2740, %v3028
        %v3030 = vpop.f32.mrf.mxu0
        %3031 = vmatprep.mubr.bf16.mxu0 %v2461
        %3032 = vmatmul.mubr.bf16.gmra.mxu0 %v2460
        %v3033 = vpop.f32.mrf.mxu0
        %v3034 = vadd.f32 %v2745, %v3033
        %v3035 = vpop.f32.mrf.mxu0
        %v3036 = vpop.f32.mrf.mxu0
        %v3037 = vadd.f32 %v2748, %v3036
        %v3038 = vpop.f32.mrf.mxu0
        %3039 = vmatprep.mubr.bf16.mxu0 %v2465
        %3040 = vmatmul.mubr.bf16.gmra.mxu0 %v2464
        %v3041 = vpop.f32.mrf.mxu0
        %v3042 = vadd.f32 %v2753, %v3041
        %v3043 = vpop.f32.mrf.mxu0
        %v3044 = vpop.f32.mrf.mxu0
        %v3045 = vadd.f32 %v2756, %v3044
        %v3046 = vpop.f32.mrf.mxu0
        %3047 = vmatprep.mubr.bf16.mxu0 %v2469
        %3048 = vmatmul.mubr.bf16.gmra.mxu0 %v2468
        %v3049 = vpop.f32.mrf.mxu0
        %v3050 = vadd.f32 %v2761, %v3049
        %v3051 = vpop.f32.mrf.mxu0
        %v3052 = vpop.f32.mrf.mxu0
        %v3053 = vadd.f32 %v2764, %v3052
        %v3054 = vpop.f32.mrf.mxu0
        %3055 = vmatprep.mubr.bf16.mxu0 %v2473
        %3056 = vmatmul.mubr.bf16.gmra.mxu0 %v2472
        %v3057 = vpop.f32.mrf.mxu0
        %v3058 = vadd.f32 %v2769, %v3057
        %v3059 = vpop.f32.mrf.mxu0
        %v3060 = vpop.f32.mrf.mxu0
        %v3061 = vadd.f32 %v2772, %v3060
        %v3062 = vpop.f32.mrf.mxu0
        %3063 = vmatprep.mubr.bf16.mxu0 %v2477
        %3064 = vmatmul.mubr.bf16.gmra.mxu0 %v2476
        %v3065 = vpop.f32.mrf.mxu0
        %v3066 = vadd.f32 %v2777, %v3065
        %v3067 = vpop.f32.mrf.mxu0
        %v3068 = vpop.f32.mrf.mxu0
        %v3069 = vadd.f32 %v2780, %v3068
        %v3070 = vpop.f32.mrf.mxu0
        %3071 = vmatprep.mubr.bf16.mxu0 %v2481
        %3072 = vmatmul.mubr.bf16.gmra.mxu0 %v2480
        %v3073 = vpop.f32.mrf.mxu0
        %v3074 = vadd.f32 %v2785, %v3073
        %v3075 = vpop.f32.mrf.mxu0
        %v3076 = vpop.f32.mrf.mxu0
        %v3077 = vadd.f32 %v2788, %v3076
        %v3078 = vpop.f32.mrf.mxu0
        %3079 = vmatprep.mubr.bf16.mxu0 %v2485
        %3080 = vmatmul.mubr.bf16.gmra.mxu0 %v2484
        %v3081 = vpop.f32.mrf.mxu0
        %v3082 = vadd.f32 %v2793, %v3081
        %v3083 = vpop.f32.mrf.mxu0
        %v3084 = vpop.f32.mrf.mxu0
        %v3085 = vadd.f32 %v2796, %v3084
        %v3086 = vpop.f32.mrf.mxu0
        %3087 = vmatprep.mubr.bf16.mxu0 %v2489
        %3088 = vmatmul.mubr.bf16.gmra.mxu0 %v2488
        %v3089 = vpop.f32.mrf.mxu0
        %v3090 = vadd.f32 %v2801, %v3089
        %v3091 = vpop.f32.mrf.mxu0
        %v3092 = vpop.f32.mrf.mxu0
        %v3093 = vadd.f32 %v2804, %v3092
        %v3094 = vpop.f32.mrf.mxu0
        %3095 = vmatprep.mubr.bf16.mxu0 %v2493
        %3096 = vmatmul.mubr.bf16.gmra.mxu0 %v2492
        %v3097 = vpop.f32.mrf.mxu0
        %v3098 = vadd.f32 %v2809, %v3097
        %v3099 = vpop.f32.mrf.mxu0
        %v3100 = vpop.f32.mrf.mxu0
        %v3101 = vadd.f32 %v2812, %v3100
        %v3102 = vpop.f32.mrf.mxu0
        %3103 = vmatprep.mubr.bf16.mxu0 %v2497
        %3104 = vmatmul.mubr.bf16.gmra.mxu0 %v2496
        %v3105 = vpop.f32.mrf.mxu0
        %v3106 = vadd.f32 %v2817, %v3105
        %v3107 = vpop.f32.mrf.mxu0
        %v3108 = vpop.f32.mrf.mxu0
        %v3109 = vadd.f32 %v2820, %v3108
        %v3110 = vpop.f32.mrf.mxu0
        %3111 = vmatprep.mubr.bf16.mxu0 %v2501
        %3112 = vmatmul.mubr.bf16.gmra.mxu0 %v2500
        %v3113 = vpop.f32.mrf.mxu0
        %v3114 = vadd.f32 %v2825, %v3113
        %v3115 = vpop.f32.mrf.mxu0
        %v3116 = vpop.f32.mrf.mxu0
        %v3117 = vadd.f32 %v2828, %v3116
        %v3118 = vpop.f32.mrf.mxu0
        %3119 = vmatprep.mubr.bf16.mxu0 %v2505
        %3120 = vmatmul.mubr.bf16.gmra.mxu0 %v2504
        %v3121 = vpop.f32.mrf.mxu0
        %v3122 = vadd.f32 %v2833, %v3121
        %v3123 = vpop.f32.mrf.mxu0
        %v3124 = vpop.f32.mrf.mxu0
        %v3125 = vadd.f32 %v2836, %v3124
        %v3126 = vpop.f32.mrf.mxu0
        %3127 = vmatprep.mubr.bf16.mxu0 %v2509
        %3128 = vmatmul.mubr.bf16.gmra.mxu0 %v2508
        %v3129 = vpop.f32.mrf.mxu0
        %v3130 = vadd.f32 %v2841, %v3129
        %v3131 = vpop.f32.mrf.mxu0
        %v3132 = vpop.f32.mrf.mxu0
        %v3133 = vadd.f32 %v2844, %v3132
        %v3134 = vpop.f32.mrf.mxu0
        %3135 = vmatprep.mubr.bf16.mxu0 %v2513
        %3136 = vmatmul.mubr.bf16.gmra.mxu0 %v2512
        %v3137 = vpop.f32.mrf.mxu0
        %v3138 = vadd.f32 %v2849, %v3137
        %v3139 = vpop.f32.mrf.mxu0
        %v3140 = vpop.f32.mrf.mxu0
        %v3141 = vadd.f32 %v2852, %v3140
        %v3142 = vpop.f32.mrf.mxu0
        %3143 = vmatprep.mubr.bf16.mxu0 %v2517
        %3144 = vmatmul.mubr.bf16.gmra.mxu0 %v2516
        %v3145 = vpop.f32.mrf.mxu0
        %v3146 = vadd.f32 %v2857, %v3145
        %v3147 = vpop.f32.mrf.mxu0
        %v3148 = vpop.f32.mrf.mxu0
        %v3149 = vadd.f32 %v2860, %v3148
        %v3150 = vpop.f32.mrf.mxu0
        %3151 = vmatprep.mubr.bf16.mxu0 %v2521
        %3152 = vmatmul.mubr.bf16.gmra.mxu0 %v2520
        %v3153 = vpop.f32.mrf.mxu0
        %v3154 = vadd.f32 %v2865, %v3153
        %v3155 = vpop.f32.mrf.mxu0
        %v3156 = vpop.f32.mrf.mxu0
        %v3157 = vadd.f32 %v2868, %v3156
        %v3158 = vpop.f32.mrf.mxu0
        %3159 = vmatprep.mubr.bf16.mxu0 %v2525
        %3160 = vmatmul.mubr.bf16.gmra.mxu0 %v2524
        %v3161 = vpop.f32.mrf.mxu0
        %v3162 = vadd.f32 %v2873, %v3161
        %v3163 = vpop.f32.mrf.mxu0
        %v3164 = vpop.f32.mrf.mxu0
        %v3165 = vadd.f32 %v2876, %v3164
        %v3166 = vpop.f32.mrf.mxu0
        %3167 = vmatprep.mubr.bf16.mxu0 %v2529
        %3168 = vmatmul.mubr.bf16.gmra.mxu0 %v2528
        %v3169 = vpop.f32.mrf.mxu0
        %v3170 = vadd.f32 %v2881, %v3169
        %v3171 = vpop.f32.mrf.mxu0
        %v3172 = vpop.f32.mrf.mxu0
        %v3173 = vadd.f32 %v2884, %v3172
        %v3174 = vpop.f32.mrf.mxu0
        %3175 = vmatprep.mubr.bf16.mxu0 %v2533
        %3176 = vmatmul.mubr.bf16.gmra.mxu0 %v2532
        %v3177 = vpop.f32.mrf.mxu0
        %v3178 = vadd.f32 %v2889, %v3177
        %v3179 = vpop.f32.mrf.mxu0
        %v3180 = vpop.f32.mrf.mxu0
        %v3181 = vadd.f32 %v2892, %v3180
        %v3182 = vpop.f32.mrf.mxu0
        %3183 = vmatprep.mubr.bf16.mxu0 %v2537
        %3184 = vmatmul.mubr.bf16.gmra.mxu0 %v2536
        %v3185 = vpop.f32.mrf.mxu0
        %v3186 = vadd.f32 %v2897, %v3185
        %v3187 = vpop.f32.mrf.mxu0
        %v3188 = vpop.f32.mrf.mxu0
        %v3189 = vadd.f32 %v2900, %v3188
        %v3190 = vpop.f32.mrf.mxu0
        %3191 = vmatprep.mubr.bf16.mxu0 %v2541
        %3192 = vmatmul.mubr.bf16.gmra.mxu0 %v2540
        %v3193 = vpop.f32.mrf.mxu0
        %v3194 = vadd.f32 %v2905, %v3193
        %v3195 = vpop.f32.mrf.mxu0
        %v3196 = vpop.f32.mrf.mxu0
        %v3197 = vadd.f32 %v2908, %v3196
        %v3198 = vpop.f32.mrf.mxu0
        %3199 = vmatprep.mubr.bf16.mxu0 %v2545
        %3200 = vmatmul.mubr.bf16.gmra.mxu0 %v2544
        %v3201 = vpop.f32.mrf.mxu0
        %v3202 = vadd.f32 %v2913, %v3201
        %v3203 = vpop.f32.mrf.mxu0
        %v3204 = vpop.f32.mrf.mxu0
        %v3205 = vadd.f32 %v2916, %v3204
        %v3206 = vpop.f32.mrf.mxu0
        %3207 = vmatprep.mubr.bf16.mxu0 %v2549
        %3208 = vmatmul.mubr.bf16.gmra.mxu0 %v2548
        %v3209 = vpop.f32.mrf.mxu0
        %v3210 = vadd.f32 %v2921, %v3209
        %v3211 = vpop.f32.mrf.mxu0
        %v3212 = vpop.f32.mrf.mxu0
        %v3213 = vadd.f32 %v2924, %v3212
        %v3214 = vpop.f32.mrf.mxu0
        %3215 = vmatprep.mubr.bf16.mxu0 %v2553
        %3216 = vmatmul.mubr.bf16.gmra.mxu0 %v2552
        %v3217 = vpop.f32.mrf.mxu0
        %v3218 = vadd.f32 %v2929, %v3217
        %v3219 = vpop.f32.mrf.mxu0
        %v3220 = vpop.f32.mrf.mxu0
        %v3221 = vadd.f32 %v2932, %v3220
        %v3222 = vpop.f32.mrf.mxu0
        %3223 = vmatprep.mubr.bf16.mxu0 %v2557
        %3224 = vmatmul.mubr.bf16.gmra.mxu0 %v2556
        %v3225 = vpop.f32.mrf.mxu0
        %v3226 = vadd.f32 %v2937, %v3225
        %v3227 = vpop.f32.mrf.mxu0
        %v3228 = vpop.f32.mrf.mxu0
        %v3229 = vadd.f32 %v2940, %v3228
        %v3230 = vpop.f32.mrf.mxu0
        %3231 = vdwg.mxu0
        %v3232 = vld [vmem:[%s392] sm:$0xff]
        %v3233 = vld [vmem:[%s392 + $0x8] sm:$0xff]
        %v3234 = vld [vmem:[%s392 + $0x10] sm:$0xff]
        %v3235 = vld [vmem:[%s392 + $0x18] sm:$0xff]
        %v3236 = vld [vmem:[%s392 + $0x20] sm:$0xff]
        %v3237 = vld [vmem:[%s392 + $0x28] sm:$0xff]
        %v3238 = vld [vmem:[%s392 + $0x30] sm:$0xff]
        %v3239 = vld [vmem:[%s392 + $0x38] sm:$0xff]
        %v3240 = vld [vmem:[%s392 + $0x40] sm:$0xff]
        %v3241 = vld [vmem:[%s392 + $0x48] sm:$0xff]
        %v3242 = vld [vmem:[%s392 + $0x50] sm:$0xff]
        %v3243 = vld [vmem:[%s392 + $0x58] sm:$0xff]
        %v3244 = vld [vmem:[%s392 + $0x60] sm:$0xff]
        %v3245 = vld [vmem:[%s392 + $0x68] sm:$0xff]
        %v3246 = vld [vmem:[%s392 + $0x70] sm:$0xff]
        %v3247 = vld [vmem:[%s392 + $0x78] sm:$0xff]
        %v3248 = vld [vmem:[%s392 + $0x80] sm:$0xff]
        %v3249 = vld [vmem:[%s392 + $0x88] sm:$0xff]
        %v3250 = vld [vmem:[%s392 + $0x90] sm:$0xff]
        %v3251 = vld [vmem:[%s392 + $0x98] sm:$0xff]
        %v3252 = vld [vmem:[%s392 + $0xa0] sm:$0xff]
        %v3253 = vld [vmem:[%s392 + $0xa8] sm:$0xff]
        %v3254 = vld [vmem:[%s392 + $0xb0] sm:$0xff]
        %v3255 = vld [vmem:[%s392 + $0xb8] sm:$0xff]
        %v3256 = vld [vmem:[%s392 + $0xc0] sm:$0xff]
        %v3257 = vld [vmem:[%s392 + $0xc8] sm:$0xff]
        %v3258 = vld [vmem:[%s392 + $0xd0] sm:$0xff]
        %v3259 = vld [vmem:[%s392 + $0xd8] sm:$0xff]
        %v3260 = vld [vmem:[%s392 + $0xe0] sm:$0xff]
        %v3261 = vld [vmem:[%s392 + $0xe8] sm:$0xff]
        %v3262 = vld [vmem:[%s392 + $0xf0] sm:$0xff]
        %v3263 = vld [vmem:[%s392 + $0xf8] sm:$0xff]
        %v3264 = vld [vmem:[%s392 + $0x100] sm:$0xff]
        %v3265 = vld [vmem:[%s392 + $0x108] sm:$0xff]
        %v3266 = vld [vmem:[%s392 + $0x110] sm:$0xff]
        %v3267 = vld [vmem:[%s392 + $0x118] sm:$0xff]
        %v3268 = vld [vmem:[%s392 + $0x120] sm:$0xff]
        %v3269 = vld [vmem:[%s392 + $0x128] sm:$0xff]
        %v3270 = vld [vmem:[%s392 + $0x130] sm:$0xff]
        %v3271 = vld [vmem:[%s392 + $0x138] sm:$0xff]
        %v3272 = vld [vmem:[%s392 + $0x140] sm:$0xff]
        %v3273 = vld [vmem:[%s392 + $0x148] sm:$0xff]
        %v3274 = vld [vmem:[%s392 + $0x150] sm:$0xff]
        %v3275 = vld [vmem:[%s392 + $0x158] sm:$0xff]
        %v3276 = vld [vmem:[%s392 + $0x160] sm:$0xff]
        %v3277 = vld [vmem:[%s392 + $0x168] sm:$0xff]
        %v3278 = vld [vmem:[%s392 + $0x170] sm:$0xff]
        %v3279 = vld [vmem:[%s392 + $0x178] sm:$0xff]
        %v3280 = vld [vmem:[%s392 + $0x180] sm:$0xff]
        %v3281 = vld [vmem:[%s392 + $0x188] sm:$0xff]
        %v3282 = vld [vmem:[%s392 + $0x190] sm:$0xff]
        %v3283 = vld [vmem:[%s392 + $0x198] sm:$0xff]
        %v3284 = vld [vmem:[%s392 + $0x1a0] sm:$0xff]
        %v3285 = vld [vmem:[%s392 + $0x1a8] sm:$0xff]
        %v3286 = vld [vmem:[%s392 + $0x1b0] sm:$0xff]
        %v3287 = vld [vmem:[%s392 + $0x1b8] sm:$0xff]
        %v3288 = vld [vmem:[%s392 + $0x1c0] sm:$0xff]
        %v3289 = vld [vmem:[%s392 + $0x1c8] sm:$0xff]
        %v3290 = vld [vmem:[%s392 + $0x1d0] sm:$0xff]
        %v3291 = vld [vmem:[%s392 + $0x1d8] sm:$0xff]
        %v3292 = vld [vmem:[%s392 + $0x1e0] sm:$0xff]
        %v3293 = vld [vmem:[%s392 + $0x1e8] sm:$0xff]
        %v3294 = vld [vmem:[%s392 + $0x1f0] sm:$0xff]
        %v3295 = vld [vmem:[%s392 + $0x1f8] sm:$0xff]
        %p3296 = scmp.ne.s32.totalorder %s426, %s427
        %s3297 = scalar_select %p3296, 1, 0
        %s3298 = scvt.s32.f32 %s3297
        %v3299 = vld [vmem:[%s420] sm:$0xff]
        %v3300 = vld [vmem:[%s420 + $0x8] sm:$0xff]
        %v3301 = vld [vmem:[%s420 + $0x10] sm:$0xff]
        %v3302 = vld [vmem:[%s420 + $0x18] sm:$0xff]
        %v3303 = vld [vmem:[%s420 + $0x20] sm:$0xff]
        %v3304 = vld [vmem:[%s420 + $0x28] sm:$0xff]
        %v3305 = vld [vmem:[%s420 + $0x30] sm:$0xff]
        %v3306 = vld [vmem:[%s420 + $0x38] sm:$0xff]
        %v3307 = vld [vmem:[%s420 + $0x40] sm:$0xff]
        %v3308 = vld [vmem:[%s420 + $0x48] sm:$0xff]
        %v3309 = vld [vmem:[%s420 + $0x50] sm:$0xff]
        %v3310 = vld [vmem:[%s420 + $0x58] sm:$0xff]
        %v3311 = vld [vmem:[%s420 + $0x60] sm:$0xff]
        %v3312 = vld [vmem:[%s420 + $0x68] sm:$0xff]
        %v3313 = vld [vmem:[%s420 + $0x70] sm:$0xff]
        %v3314 = vld [vmem:[%s420 + $0x78] sm:$0xff]
        %v3315 = vld [vmem:[%s420 + $0x80] sm:$0xff]
        %v3316 = vld [vmem:[%s420 + $0x88] sm:$0xff]
        %v3317 = vld [vmem:[%s420 + $0x90] sm:$0xff]
        %v3318 = vld [vmem:[%s420 + $0x98] sm:$0xff]
        %v3319 = vld [vmem:[%s420 + $0xa0] sm:$0xff]
        %v3320 = vld [vmem:[%s420 + $0xa8] sm:$0xff]
        %v3321 = vld [vmem:[%s420 + $0xb0] sm:$0xff]
        %v3322 = vld [vmem:[%s420 + $0xb8] sm:$0xff]
        %v3323 = vld [vmem:[%s420 + $0xc0] sm:$0xff]
        %v3324 = vld [vmem:[%s420 + $0xc8] sm:$0xff]
        %v3325 = vld [vmem:[%s420 + $0xd0] sm:$0xff]
        %v3326 = vld [vmem:[%s420 + $0xd8] sm:$0xff]
        %v3327 = vld [vmem:[%s420 + $0xe0] sm:$0xff]
        %v3328 = vld [vmem:[%s420 + $0xe8] sm:$0xff]
        %v3329 = vld [vmem:[%s420 + $0xf0] sm:$0xff]
        %v3330 = vld [vmem:[%s420 + $0xf8] sm:$0xff]
        %v3331 = vld [vmem:[%s420 + $0x100] sm:$0xff]
        %v3332 = vld [vmem:[%s420 + $0x108] sm:$0xff]
        %v3333 = vld [vmem:[%s420 + $0x110] sm:$0xff]
        %v3334 = vld [vmem:[%s420 + $0x118] sm:$0xff]
        %v3335 = vld [vmem:[%s420 + $0x120] sm:$0xff]
        %v3336 = vld [vmem:[%s420 + $0x128] sm:$0xff]
        %v3337 = vld [vmem:[%s420 + $0x130] sm:$0xff]
        %v3338 = vld [vmem:[%s420 + $0x138] sm:$0xff]
        %v3339 = vld [vmem:[%s420 + $0x140] sm:$0xff]
        %v3340 = vld [vmem:[%s420 + $0x148] sm:$0xff]
        %v3341 = vld [vmem:[%s420 + $0x150] sm:$0xff]
        %v3342 = vld [vmem:[%s420 + $0x158] sm:$0xff]
        %v3343 = vld [vmem:[%s420 + $0x160] sm:$0xff]
        %v3344 = vld [vmem:[%s420 + $0x168] sm:$0xff]
        %v3345 = vld [vmem:[%s420 + $0x170] sm:$0xff]
        %v3346 = vld [vmem:[%s420 + $0x178] sm:$0xff]
        %v3347 = vld [vmem:[%s420 + $0x180] sm:$0xff]
        %v3348 = vld [vmem:[%s420 + $0x188] sm:$0xff]
        %v3349 = vld [vmem:[%s420 + $0x190] sm:$0xff]
        %v3350 = vld [vmem:[%s420 + $0x198] sm:$0xff]
        %v3351 = vld [vmem:[%s420 + $0x1a0] sm:$0xff]
        %v3352 = vld [vmem:[%s420 + $0x1a8] sm:$0xff]
        %v3353 = vld [vmem:[%s420 + $0x1b0] sm:$0xff]
        %v3354 = vld [vmem:[%s420 + $0x1b8] sm:$0xff]
        %v3355 = vld [vmem:[%s420 + $0x1c0] sm:$0xff]
        %v3356 = vld [vmem:[%s420 + $0x1c8] sm:$0xff]
        %v3357 = vld [vmem:[%s420 + $0x1d0] sm:$0xff]
        %v3358 = vld [vmem:[%s420 + $0x1d8] sm:$0xff]
        %v3359 = vld [vmem:[%s420 + $0x1e0] sm:$0xff]
        %v3360 = vld [vmem:[%s420 + $0x1e8] sm:$0xff]
        %v3361 = vld [vmem:[%s420 + $0x1f0] sm:$0xff]
        %v3362 = vld [vmem:[%s420 + $0x1f8] sm:$0xff]
        %3427 = vrot.lane.b32.xlu0 %v2978, 4
        %v3428 = vpop.permute.xlu0 %3427
        %3429 = vrot.lane.b32.xlu0 %v2981, 4
        %v3430 = vpop.permute.xlu0 %3429
        %3431 = vrot.lane.b32.xlu0 %v2986, 4
        %v3432 = vpop.permute.xlu0 %3431
        %3433 = vrot.lane.b32.xlu0 %v2989, 4
        %v3434 = vpop.permute.xlu0 %3433
        %3435 = vrot.lane.b32.xlu0 %v2994, 4
        %v3436 = vpop.permute.xlu0 %3435
        %3437 = vrot.lane.b32.xlu0 %v2997, 4
        %v3438 = vpop.permute.xlu0 %3437
        %3439 = vrot.lane.b32.xlu0 %v3002, 4
        %v3440 = vpop.permute.xlu0 %3439
        %3441 = vrot.lane.b32.xlu0 %v3005, 4
        %v3442 = vpop.permute.xlu0 %3441
        %3443 = vrot.lane.b32.xlu0 %v3010, 4
        %v3444 = vpop.permute.xlu0 %3443
        %3445 = vrot.lane.b32.xlu0 %v3013, 4
        %v3446 = vpop.permute.xlu0 %3445
        %3447 = vrot.lane.b32.xlu0 %v3018, 4
        %v3448 = vpop.permute.xlu0 %3447
        %3449 = vrot.lane.b32.xlu0 %v3021, 4
        %v3450 = vpop.permute.xlu0 %3449
        %3451 = vrot.lane.b32.xlu0 %v3026, 4
        %v3452 = vpop.permute.xlu0 %3451
        %3453 = vrot.lane.b32.xlu0 %v3029, 4
        %v3454 = vpop.permute.xlu0 %3453
        %3455 = vrot.lane.b32.xlu0 %v3034, 4
        %v3456 = vpop.permute.xlu0 %3455
        %3457 = vrot.lane.b32.xlu0 %v3037, 4
        %v3458 = vpop.permute.xlu0 %3457
        %3459 = vrot.lane.b32.xlu0 %v3042, 4
        %v3460 = vpop.permute.xlu0 %3459
        %3461 = vrot.lane.b32.xlu0 %v3045, 4
        %v3462 = vpop.permute.xlu0 %3461
        %3463 = vrot.lane.b32.xlu0 %v3050, 4
        %v3464 = vpop.permute.xlu0 %3463
        %3465 = vrot.lane.b32.xlu0 %v3053, 4
        %v3466 = vpop.permute.xlu0 %3465
        %3467 = vrot.lane.b32.xlu0 %v3058, 4
        %v3468 = vpop.permute.xlu0 %3467
        %3469 = vrot.lane.b32.xlu0 %v3061, 4
        %v3470 = vpop.permute.xlu0 %3469
        %3471 = vrot.lane.b32.xlu0 %v3066, 4
        %v3472 = vpop.permute.xlu0 %3471
        %3473 = vrot.lane.b32.xlu0 %v3069, 4
        %v3474 = vpop.permute.xlu0 %3473
        %3475 = vrot.lane.b32.xlu0 %v3074, 4
        %v3476 = vpop.permute.xlu0 %3475
        %3477 = vrot.lane.b32.xlu0 %v3077, 4
        %v3478 = vpop.permute.xlu0 %3477
        %3479 = vrot.lane.b32.xlu0 %v3082, 4
        %v3480 = vpop.permute.xlu0 %3479
        %3481 = vrot.lane.b32.xlu0 %v3085, 4
        %v3482 = vpop.permute.xlu0 %3481
        %3483 = vrot.lane.b32.xlu0 %v3090, 4
        %v3484 = vpop.permute.xlu0 %3483
        %3485 = vrot.lane.b32.xlu0 %v3093, 4
        %v3486 = vpop.permute.xlu0 %3485
        %3487 = vrot.lane.b32.xlu0 %v3098, 4
        %v3488 = vpop.permute.xlu0 %3487
        %3489 = vrot.lane.b32.xlu0 %v3101, 4
        %v3490 = vpop.permute.xlu0 %3489
        %3491 = vrot.lane.b32.xlu0 %v3106, 4
        %v3492 = vpop.permute.xlu0 %3491
        %3493 = vrot.lane.b32.xlu0 %v3109, 4
        %v3494 = vpop.permute.xlu0 %3493
        %3495 = vrot.lane.b32.xlu0 %v3114, 4
        %v3496 = vpop.permute.xlu0 %3495
        %3497 = vrot.lane.b32.xlu0 %v3117, 4
        %v3498 = vpop.permute.xlu0 %3497
        %3499 = vrot.lane.b32.xlu0 %v3122, 4
        %v3500 = vpop.permute.xlu0 %3499
        %3501 = vrot.lane.b32.xlu0 %v3125, 4
        %v3502 = vpop.permute.xlu0 %3501
        %3503 = vrot.lane.b32.xlu0 %v3130, 4
        %v3504 = vpop.permute.xlu0 %3503
        %3505 = vrot.lane.b32.xlu0 %v3133, 4
        %v3506 = vpop.permute.xlu0 %3505
        %3507 = vrot.lane.b32.xlu0 %v3138, 4
        %v3508 = vpop.permute.xlu0 %3507
        %3509 = vrot.lane.b32.xlu0 %v3141, 4
        %v3510 = vpop.permute.xlu0 %3509
        %3511 = vrot.lane.b32.xlu0 %v3146, 4
        %v3512 = vpop.permute.xlu0 %3511
        %3513 = vrot.lane.b32.xlu0 %v3149, 4
        %v3514 = vpop.permute.xlu0 %3513
        %3515 = vrot.lane.b32.xlu0 %v3154, 4
        %v3516 = vpop.permute.xlu0 %3515
        %3517 = vrot.lane.b32.xlu0 %v3157, 4
        %v3518 = vpop.permute.xlu0 %3517
        %3519 = vrot.lane.b32.xlu0 %v3162, 4
        %v3520 = vpop.permute.xlu0 %3519
        %3521 = vrot.lane.b32.xlu0 %v3165, 4
        %v3522 = vpop.permute.xlu0 %3521
        %3523 = vrot.lane.b32.xlu0 %v3170, 4
        %v3524 = vpop.permute.xlu0 %3523
        %3525 = vrot.lane.b32.xlu0 %v3173, 4
        %v3526 = vpop.permute.xlu0 %3525
        %3527 = vrot.lane.b32.xlu0 %v3178, 4
        %v3528 = vpop.permute.xlu0 %3527
        %3529 = vrot.lane.b32.xlu0 %v3181, 4
        %v3530 = vpop.permute.xlu0 %3529
        %3531 = vrot.lane.b32.xlu0 %v3186, 4
        %v3532 = vpop.permute.xlu0 %3531
        %3533 = vrot.lane.b32.xlu0 %v3189, 4
        %v3534 = vpop.permute.xlu0 %3533
        %3535 = vrot.lane.b32.xlu0 %v3194, 4
        %v3536 = vpop.permute.xlu0 %3535
        %3537 = vrot.lane.b32.xlu0 %v3197, 4
        %v3538 = vpop.permute.xlu0 %3537
        %3539 = vrot.lane.b32.xlu0 %v3202, 4
        %v3540 = vpop.permute.xlu0 %3539
        %3541 = vrot.lane.b32.xlu0 %v3205, 4
        %v3542 = vpop.permute.xlu0 %3541
        %3543 = vrot.lane.b32.xlu0 %v3210, 4
        %v3544 = vpop.permute.xlu0 %3543
        %3545 = vrot.lane.b32.xlu0 %v3213, 4
        %v3546 = vpop.permute.xlu0 %3545
        %3547 = vrot.lane.b32.xlu0 %v3218, 4
        %v3548 = vpop.permute.xlu0 %3547
        %3549 = vrot.lane.b32.xlu0 %v3221, 4
        %v3550 = vpop.permute.xlu0 %3549
        %3551 = vrot.lane.b32.xlu0 %v3226, 4
        %v3552 = vpop.permute.xlu0 %3551
        %3553 = vrot.lane.b32.xlu0 %v3229, 4
        %v3554 = vpop.permute.xlu0 %3553
        %v3619 = vmul.f32 %v3232, %v3428
        %v3620 = vmul.f32 %v3233, %v3430
        %v3621 = vmul.f32 %v3234, %v3432
        %v3622 = vmul.f32 %v3235, %v3434
        %v3623 = vmul.f32 %v3236, %v3436
        %v3624 = vmul.f32 %v3237, %v3438
        %v3625 = vmul.f32 %v3238, %v3440
        %v3626 = vmul.f32 %v3239, %v3442
        %v3627 = vmul.f32 %v3240, %v3444
        %v3628 = vmul.f32 %v3241, %v3446
        %v3629 = vmul.f32 %v3242, %v3448
        %v3630 = vmul.f32 %v3243, %v3450
        %v3631 = vmul.f32 %v3244, %v3452
        %v3632 = vmul.f32 %v3245, %v3454
        %v3633 = vmul.f32 %v3246, %v3456
        %v3634 = vmul.f32 %v3247, %v3458
        %v3635 = vmul.f32 %v3248, %v3460
        %v3636 = vmul.f32 %v3249, %v3462
        %v3637 = vmul.f32 %v3250, %v3464
        %v3638 = vmul.f32 %v3251, %v3466
        %v3639 = vmul.f32 %v3252, %v3468
        %v3640 = vmul.f32 %v3253, %v3470
        %v3641 = vmul.f32 %v3254, %v3472
        %v3642 = vmul.f32 %v3255, %v3474
        %v3643 = vmul.f32 %v3256, %v3476
        %v3644 = vmul.f32 %v3257, %v3478
        %v3645 = vmul.f32 %v3258, %v3480
        %v3646 = vmul.f32 %v3259, %v3482
        %v3647 = vmul.f32 %v3260, %v3484
        %v3648 = vmul.f32 %v3261, %v3486
        %v3649 = vmul.f32 %v3262, %v3488
        %v3650 = vmul.f32 %v3263, %v3490
        %v3651 = vmul.f32 %v3264, %v3492
        %v3652 = vmul.f32 %v3265, %v3494
        %v3653 = vmul.f32 %v3266, %v3496
        %v3654 = vmul.f32 %v3267, %v3498
        %v3655 = vmul.f32 %v3268, %v3500
        %v3656 = vmul.f32 %v3269, %v3502
        %v3657 = vmul.f32 %v3270, %v3504
        %v3658 = vmul.f32 %v3271, %v3506
        %v3659 = vmul.f32 %v3272, %v3508
        %v3660 = vmul.f32 %v3273, %v3510
        %v3661 = vmul.f32 %v3274, %v3512
        %v3662 = vmul.f32 %v3275, %v3514
        %v3663 = vmul.f32 %v3276, %v3516
        %v3664 = vmul.f32 %v3277, %v3518
        %v3665 = vmul.f32 %v3278, %v3520
        %v3666 = vmul.f32 %v3279, %v3522
        %v3667 = vmul.f32 %v3280, %v3524
        %v3668 = vmul.f32 %v3281, %v3526
        %v3669 = vmul.f32 %v3282, %v3528
        %v3670 = vmul.f32 %v3283, %v3530
        %v3671 = vmul.f32 %v3284, %v3532
        %v3672 = vmul.f32 %v3285, %v3534
        %v3673 = vmul.f32 %v3286, %v3536
        %v3674 = vmul.f32 %v3287, %v3538
        %v3675 = vmul.f32 %v3288, %v3540
        %v3676 = vmul.f32 %v3289, %v3542
        %v3677 = vmul.f32 %v3290, %v3544
        %v3678 = vmul.f32 %v3291, %v3546
        %v3679 = vmul.f32 %v3292, %v3548
        %v3680 = vmul.f32 %v3293, %v3550
        %v3681 = vmul.f32 %v3294, %v3552
        %v3682 = vmul.f32 %v3295, %v3554
        %3683 = vrot.lane.b32.xlu0 %v2978, 124
        %v3684 = vpop.permute.xlu0 %3683
        %3685 = vrot.lane.b32.xlu0 %v2981, 124
        %v3686 = vpop.permute.xlu0 %3685
        %3687 = vrot.lane.b32.xlu0 %v2986, 124
        %v3688 = vpop.permute.xlu0 %3687
        %3689 = vrot.lane.b32.xlu0 %v2989, 124
        %v3690 = vpop.permute.xlu0 %3689
        %3691 = vrot.lane.b32.xlu0 %v2994, 124
        %v3692 = vpop.permute.xlu0 %3691
        %3693 = vrot.lane.b32.xlu0 %v2997, 124
        %v3694 = vpop.permute.xlu0 %3693
        %3695 = vrot.lane.b32.xlu0 %v3002, 124
        %v3696 = vpop.permute.xlu0 %3695
        %3697 = vrot.lane.b32.xlu0 %v3005, 124
        %v3698 = vpop.permute.xlu0 %3697
        %3699 = vrot.lane.b32.xlu0 %v3010, 124
        %v3700 = vpop.permute.xlu0 %3699
        %3701 = vrot.lane.b32.xlu0 %v3013, 124
        %v3702 = vpop.permute.xlu0 %3701
        %3703 = vrot.lane.b32.xlu0 %v3018, 124
        %v3704 = vpop.permute.xlu0 %3703
        %3705 = vrot.lane.b32.xlu0 %v3021, 124
        %v3706 = vpop.permute.xlu0 %3705
        %3707 = vrot.lane.b32.xlu0 %v3026, 124
        %v3708 = vpop.permute.xlu0 %3707
        %3709 = vrot.lane.b32.xlu0 %v3029, 124
        %v3710 = vpop.permute.xlu0 %3709
        %3711 = vrot.lane.b32.xlu0 %v3034, 124
        %v3712 = vpop.permute.xlu0 %3711
        %3713 = vrot.lane.b32.xlu0 %v3037, 124
        %v3714 = vpop.permute.xlu0 %3713
        %3715 = vrot.lane.b32.xlu0 %v3042, 124
        %v3716 = vpop.permute.xlu0 %3715
        %3717 = vrot.lane.b32.xlu0 %v3045, 124
        %v3718 = vpop.permute.xlu0 %3717
        %3719 = vrot.lane.b32.xlu0 %v3050, 124
        %v3720 = vpop.permute.xlu0 %3719
        %3721 = vrot.lane.b32.xlu0 %v3053, 124
        %v3722 = vpop.permute.xlu0 %3721
        %3723 = vrot.lane.b32.xlu0 %v3058, 124
        %v3724 = vpop.permute.xlu0 %3723
        %3725 = vrot.lane.b32.xlu0 %v3061, 124
        %v3726 = vpop.permute.xlu0 %3725
        %3727 = vrot.lane.b32.xlu0 %v3066, 124
        %v3728 = vpop.permute.xlu0 %3727
        %3729 = vrot.lane.b32.xlu0 %v3069, 124
        %v3730 = vpop.permute.xlu0 %3729
        %3731 = vrot.lane.b32.xlu0 %v3074, 124
        %v3732 = vpop.permute.xlu0 %3731
        %3733 = vrot.lane.b32.xlu0 %v3077, 124
        %v3734 = vpop.permute.xlu0 %3733
        %3735 = vrot.lane.b32.xlu0 %v3082, 124
        %v3736 = vpop.permute.xlu0 %3735
        %3737 = vrot.lane.b32.xlu0 %v3085, 124
        %v3738 = vpop.permute.xlu0 %3737
        %3739 = vrot.lane.b32.xlu0 %v3090, 124
        %v3740 = vpop.permute.xlu0 %3739
        %3741 = vrot.lane.b32.xlu0 %v3093, 124
        %v3742 = vpop.permute.xlu0 %3741
        %3743 = vrot.lane.b32.xlu0 %v3098, 124
        %v3744 = vpop.permute.xlu0 %3743
        %3745 = vrot.lane.b32.xlu0 %v3101, 124
        %v3746 = vpop.permute.xlu0 %3745
        %3747 = vrot.lane.b32.xlu0 %v3106, 124
        %v3748 = vpop.permute.xlu0 %3747
        %3749 = vrot.lane.b32.xlu0 %v3109, 124
        %v3750 = vpop.permute.xlu0 %3749
        %3751 = vrot.lane.b32.xlu0 %v3114, 124
        %v3752 = vpop.permute.xlu0 %3751
        %3753 = vrot.lane.b32.xlu0 %v3117, 124
        %v3754 = vpop.permute.xlu0 %3753
        %3755 = vrot.lane.b32.xlu0 %v3122, 124
        %v3756 = vpop.permute.xlu0 %3755
        %3757 = vrot.lane.b32.xlu0 %v3125, 124
        %v3758 = vpop.permute.xlu0 %3757
        %3759 = vrot.lane.b32.xlu0 %v3130, 124
        %v3760 = vpop.permute.xlu0 %3759
        %3761 = vrot.lane.b32.xlu0 %v3133, 124
        %v3762 = vpop.permute.xlu0 %3761
        %3763 = vrot.lane.b32.xlu0 %v3138, 124
        %v3764 = vpop.permute.xlu0 %3763
        %3765 = vrot.lane.b32.xlu0 %v3141, 124
        %v3766 = vpop.permute.xlu0 %3765
        %3767 = vrot.lane.b32.xlu0 %v3146, 124
        %v3768 = vpop.permute.xlu0 %3767
        %3769 = vrot.lane.b32.xlu0 %v3149, 124
        %v3770 = vpop.permute.xlu0 %3769
        %3771 = vrot.lane.b32.xlu0 %v3154, 124
        %v3772 = vpop.permute.xlu0 %3771
        %3773 = vrot.lane.b32.xlu0 %v3157, 124
        %v3774 = vpop.permute.xlu0 %3773
        %3775 = vrot.lane.b32.xlu0 %v3162, 124
        %v3776 = vpop.permute.xlu0 %3775
        %3777 = vrot.lane.b32.xlu0 %v3165, 124
        %v3778 = vpop.permute.xlu0 %3777
        %3779 = vrot.lane.b32.xlu0 %v3170, 124
        %v3780 = vpop.permute.xlu0 %3779
        %3781 = vrot.lane.b32.xlu0 %v3173, 124
        %v3782 = vpop.permute.xlu0 %3781
        %3783 = vrot.lane.b32.xlu0 %v3178, 124
        %v3784 = vpop.permute.xlu0 %3783
        %3785 = vrot.lane.b32.xlu0 %v3181, 124
        %v3786 = vpop.permute.xlu0 %3785
        %3787 = vrot.lane.b32.xlu0 %v3186, 124
        %v3788 = vpop.permute.xlu0 %3787
        %3789 = vrot.lane.b32.xlu0 %v3189, 124
        %v3790 = vpop.permute.xlu0 %3789
        %3791 = vrot.lane.b32.xlu0 %v3194, 124
        %v3792 = vpop.permute.xlu0 %3791
        %3793 = vrot.lane.b32.xlu0 %v3197, 124
        %v3794 = vpop.permute.xlu0 %3793
        %3795 = vrot.lane.b32.xlu0 %v3202, 124
        %v3796 = vpop.permute.xlu0 %3795
        %3797 = vrot.lane.b32.xlu0 %v3205, 124
        %v3798 = vpop.permute.xlu0 %3797
        %3799 = vrot.lane.b32.xlu0 %v3210, 124
        %v3800 = vpop.permute.xlu0 %3799
        %3801 = vrot.lane.b32.xlu0 %v3213, 124
        %v3802 = vpop.permute.xlu0 %3801
        %3803 = vrot.lane.b32.xlu0 %v3218, 124
        %v3804 = vpop.permute.xlu0 %3803
        %3805 = vrot.lane.b32.xlu0 %v3221, 124
        %v3806 = vpop.permute.xlu0 %3805
        %3807 = vrot.lane.b32.xlu0 %v3226, 124
        %v3808 = vpop.permute.xlu0 %3807
        %3809 = vrot.lane.b32.xlu0 %v3229, 124
        %v3810 = vpop.permute.xlu0 %3809
        %v3875 = vmul.f32 %v3232, %v3684
        %v3876 = vmul.f32 %v3233, %v3686
        %v3877 = vmul.f32 %v3234, %v3688
        %v3878 = vmul.f32 %v3235, %v3690
        %v3879 = vmul.f32 %v3236, %v3692
        %v3880 = vmul.f32 %v3237, %v3694
        %v3881 = vmul.f32 %v3238, %v3696
        %v3882 = vmul.f32 %v3239, %v3698
        %v3883 = vmul.f32 %v3240, %v3700
        %v3884 = vmul.f32 %v3241, %v3702
        %v3885 = vmul.f32 %v3242, %v3704
        %v3886 = vmul.f32 %v3243, %v3706
        %v3887 = vmul.f32 %v3244, %v3708
        %v3888 = vmul.f32 %v3245, %v3710
        %v3889 = vmul.f32 %v3246, %v3712
        %v3890 = vmul.f32 %v3247, %v3714
        %v3891 = vmul.f32 %v3248, %v3716
        %v3892 = vmul.f32 %v3249, %v3718
        %v3893 = vmul.f32 %v3250, %v3720
        %v3894 = vmul.f32 %v3251, %v3722
        %v3895 = vmul.f32 %v3252, %v3724
        %v3896 = vmul.f32 %v3253, %v3726
        %v3897 = vmul.f32 %v3254, %v3728
        %v3898 = vmul.f32 %v3255, %v3730
        %v3899 = vmul.f32 %v3256, %v3732
        %v3900 = vmul.f32 %v3257, %v3734
        %v3901 = vmul.f32 %v3258, %v3736
        %v3902 = vmul.f32 %v3259, %v3738
        %v3903 = vmul.f32 %v3260, %v3740
        %v3904 = vmul.f32 %v3261, %v3742
        %v3905 = vmul.f32 %v3262, %v3744
        %v3906 = vmul.f32 %v3263, %v3746
        %v3907 = vmul.f32 %v3264, %v3748
        %v3908 = vmul.f32 %v3265, %v3750
        %v3909 = vmul.f32 %v3266, %v3752
        %v3910 = vmul.f32 %v3267, %v3754
        %v3911 = vmul.f32 %v3268, %v3756
        %v3912 = vmul.f32 %v3269, %v3758
        %v3913 = vmul.f32 %v3270, %v3760
        %v3914 = vmul.f32 %v3271, %v3762
        %v3915 = vmul.f32 %v3272, %v3764
        %v3916 = vmul.f32 %v3273, %v3766
        %v3917 = vmul.f32 %v3274, %v3768
        %v3918 = vmul.f32 %v3275, %v3770
        %v3919 = vmul.f32 %v3276, %v3772
        %v3920 = vmul.f32 %v3277, %v3774
        %v3921 = vmul.f32 %v3278, %v3776
        %v3922 = vmul.f32 %v3279, %v3778
        %v3923 = vmul.f32 %v3280, %v3780
        %v3924 = vmul.f32 %v3281, %v3782
        %v3925 = vmul.f32 %v3282, %v3784
        %v3926 = vmul.f32 %v3283, %v3786
        %v3927 = vmul.f32 %v3284, %v3788
        %v3928 = vmul.f32 %v3285, %v3790
        %v3929 = vmul.f32 %v3286, %v3792
        %v3930 = vmul.f32 %v3287, %v3794
        %v3931 = vmul.f32 %v3288, %v3796
        %v3932 = vmul.f32 %v3289, %v3798
        %v3933 = vmul.f32 %v3290, %v3800
        %v3934 = vmul.f32 %v3291, %v3802
        %v3935 = vmul.f32 %v3292, %v3804
        %v3936 = vmul.f32 %v3293, %v3806
        %v3937 = vmul.f32 %v3294, %v3808
        %v3938 = vmul.f32 %v3295, %v3810
        %v3939 = vstv %s3298
        %v3940 = vmul.f32 %v3939, %v3875
        %v3941 = vmul.f32 %v3939, %v3876
        %v3942 = vmul.f32 %v3939, %v3877
        %v3943 = vmul.f32 %v3939, %v3878
        %v3944 = vmul.f32 %v3939, %v3879
        %v3945 = vmul.f32 %v3939, %v3880
        %v3946 = vmul.f32 %v3939, %v3881
        %v3947 = vmul.f32 %v3939, %v3882
        %v3948 = vmul.f32 %v3939, %v3883
        %v3949 = vmul.f32 %v3939, %v3884
        %v3950 = vmul.f32 %v3939, %v3885
        %v3951 = vmul.f32 %v3939, %v3886
        %v3952 = vmul.f32 %v3939, %v3887
        %v3953 = vmul.f32 %v3939, %v3888
        %v3954 = vmul.f32 %v3939, %v3889
        %v3955 = vmul.f32 %v3939, %v3890
        %v3956 = vmul.f32 %v3939, %v3891
        %v3957 = vmul.f32 %v3939, %v3892
        %v3958 = vmul.f32 %v3939, %v3893
        %v3959 = vmul.f32 %v3939, %v3894
        %v3960 = vmul.f32 %v3939, %v3895
        %v3961 = vmul.f32 %v3939, %v3896
        %v3962 = vmul.f32 %v3939, %v3897
        %v3963 = vmul.f32 %v3939, %v3898
        %v3964 = vmul.f32 %v3939, %v3899
        %v3965 = vmul.f32 %v3939, %v3900
        %v3966 = vmul.f32 %v3939, %v3901
        %v3967 = vmul.f32 %v3939, %v3902
        %v3968 = vmul.f32 %v3939, %v3903
        %v3969 = vmul.f32 %v3939, %v3904
        %v3970 = vmul.f32 %v3939, %v3905
        %v3971 = vmul.f32 %v3939, %v3906
        %v3972 = vmul.f32 %v3939, %v3907
        %v3973 = vmul.f32 %v3939, %v3908
        %v3974 = vmul.f32 %v3939, %v3909
        %v3975 = vmul.f32 %v3939, %v3910
        %v3976 = vmul.f32 %v3939, %v3911
        %v3977 = vmul.f32 %v3939, %v3912
        %v3978 = vmul.f32 %v3939, %v3913
        %v3979 = vmul.f32 %v3939, %v3914
        %v3980 = vmul.f32 %v3939, %v3915
        %v3981 = vmul.f32 %v3939, %v3916
        %v3982 = vmul.f32 %v3939, %v3917
        %v3983 = vmul.f32 %v3939, %v3918
        %v3984 = vmul.f32 %v3939, %v3919
        %v3985 = vmul.f32 %v3939, %v3920
        %v3986 = vmul.f32 %v3939, %v3921
        %v3987 = vmul.f32 %v3939, %v3922
        %v3988 = vmul.f32 %v3939, %v3923
        %v3989 = vmul.f32 %v3939, %v3924
        %v3990 = vmul.f32 %v3939, %v3925
        %v3991 = vmul.f32 %v3939, %v3926
        %v3992 = vmul.f32 %v3939, %v3927
        %v3993 = vmul.f32 %v3939, %v3928
        %v3994 = vmul.f32 %v3939, %v3929
        %v3995 = vmul.f32 %v3939, %v3930
        %v3996 = vmul.f32 %v3939, %v3931
        %v3997 = vmul.f32 %v3939, %v3932
        %v3998 = vmul.f32 %v3939, %v3933
        %v3999 = vmul.f32 %v3939, %v3934
        %v4000 = vmul.f32 %v3939, %v3935
        %v4001 = vmul.f32 %v3939, %v3936
        %v4002 = vmul.f32 %v3939, %v3937
        %v4003 = vmul.f32 %v3939, %v3938
        %4068 = vrot.lane.b32.xlu0 %v3940, 4
        %v4069 = vpop.permute.xlu0 %4068
        %4070 = vrot.lane.b32.xlu0 %v3941, 4
        %v4071 = vpop.permute.xlu0 %4070
        %4072 = vrot.lane.b32.xlu0 %v3942, 4
        %v4073 = vpop.permute.xlu0 %4072
        %4074 = vrot.lane.b32.xlu0 %v3943, 4
        %v4075 = vpop.permute.xlu0 %4074
        %4076 = vrot.lane.b32.xlu0 %v3944, 4
        %v4077 = vpop.permute.xlu0 %4076
        %4078 = vrot.lane.b32.xlu0 %v3945, 4
        %v4079 = vpop.permute.xlu0 %4078
        %4080 = vrot.lane.b32.xlu0 %v3946, 4
        %v4081 = vpop.permute.xlu0 %4080
        %4082 = vrot.lane.b32.xlu0 %v3947, 4
        %v4083 = vpop.permute.xlu0 %4082
        %4084 = vrot.lane.b32.xlu0 %v3948, 4
        %v4085 = vpop.permute.xlu0 %4084
        %4086 = vrot.lane.b32.xlu0 %v3949, 4
        %v4087 = vpop.permute.xlu0 %4086
        %4088 = vrot.lane.b32.xlu0 %v3950, 4
        %v4089 = vpop.permute.xlu0 %4088
        %4090 = vrot.lane.b32.xlu0 %v3951, 4
        %v4091 = vpop.permute.xlu0 %4090
        %4092 = vrot.lane.b32.xlu0 %v3952, 4
        %v4093 = vpop.permute.xlu0 %4092
        %4094 = vrot.lane.b32.xlu0 %v3953, 4
        %v4095 = vpop.permute.xlu0 %4094
        %4096 = vrot.lane.b32.xlu0 %v3954, 4
        %v4097 = vpop.permute.xlu0 %4096
        %4098 = vrot.lane.b32.xlu0 %v3955, 4
        %v4099 = vpop.permute.xlu0 %4098
        %4100 = vrot.lane.b32.xlu0 %v3956, 4
        %v4101 = vpop.permute.xlu0 %4100
        %4102 = vrot.lane.b32.xlu0 %v3957, 4
        %v4103 = vpop.permute.xlu0 %4102
        %4104 = vrot.lane.b32.xlu0 %v3958, 4
        %v4105 = vpop.permute.xlu0 %4104
        %4106 = vrot.lane.b32.xlu0 %v3959, 4
        %v4107 = vpop.permute.xlu0 %4106
        %4108 = vrot.lane.b32.xlu0 %v3960, 4
        %v4109 = vpop.permute.xlu0 %4108
        %4110 = vrot.lane.b32.xlu0 %v3961, 4
        %v4111 = vpop.permute.xlu0 %4110
        %4112 = vrot.lane.b32.xlu0 %v3962, 4
        %v4113 = vpop.permute.xlu0 %4112
        %4114 = vrot.lane.b32.xlu0 %v3963, 4
        %v4115 = vpop.permute.xlu0 %4114
        %4116 = vrot.lane.b32.xlu0 %v3964, 4
        %v4117 = vpop.permute.xlu0 %4116
        %4118 = vrot.lane.b32.xlu0 %v3965, 4
        %v4119 = vpop.permute.xlu0 %4118
        %4120 = vrot.lane.b32.xlu0 %v3966, 4
        %v4121 = vpop.permute.xlu0 %4120
        %4122 = vrot.lane.b32.xlu0 %v3967, 4
        %v4123 = vpop.permute.xlu0 %4122
        %4124 = vrot.lane.b32.xlu0 %v3968, 4
        %v4125 = vpop.permute.xlu0 %4124
        %4126 = vrot.lane.b32.xlu0 %v3969, 4
        %v4127 = vpop.permute.xlu0 %4126
        %4128 = vrot.lane.b32.xlu0 %v3970, 4
        %v4129 = vpop.permute.xlu0 %4128
        %4130 = vrot.lane.b32.xlu0 %v3971, 4
        %v4131 = vpop.permute.xlu0 %4130
        %4132 = vrot.lane.b32.xlu0 %v3972, 4
        %v4133 = vpop.permute.xlu0 %4132
        %4134 = vrot.lane.b32.xlu0 %v3973, 4
        %v4135 = vpop.permute.xlu0 %4134
        %4136 = vrot.lane.b32.xlu0 %v3974, 4
        %v4137 = vpop.permute.xlu0 %4136
        %4138 = vrot.lane.b32.xlu0 %v3975, 4
        %v4139 = vpop.permute.xlu0 %4138
        %4140 = vrot.lane.b32.xlu0 %v3976, 4
        %v4141 = vpop.permute.xlu0 %4140
        %4142 = vrot.lane.b32.xlu0 %v3977, 4
        %v4143 = vpop.permute.xlu0 %4142
        %4144 = vrot.lane.b32.xlu0 %v3978, 4
        %v4145 = vpop.permute.xlu0 %4144
        %4146 = vrot.lane.b32.xlu0 %v3979, 4
        %v4147 = vpop.permute.xlu0 %4146
        %4148 = vrot.lane.b32.xlu0 %v3980, 4
        %v4149 = vpop.permute.xlu0 %4148
        %4150 = vrot.lane.b32.xlu0 %v3981, 4
        %v4151 = vpop.permute.xlu0 %4150
        %4152 = vrot.lane.b32.xlu0 %v3982, 4
        %v4153 = vpop.permute.xlu0 %4152
        %4154 = vrot.lane.b32.xlu0 %v3983, 4
        %v4155 = vpop.permute.xlu0 %4154
        %4156 = vrot.lane.b32.xlu0 %v3984, 4
        %v4157 = vpop.permute.xlu0 %4156
        %4158 = vrot.lane.b32.xlu0 %v3985, 4
        %v4159 = vpop.permute.xlu0 %4158
        %4160 = vrot.lane.b32.xlu0 %v3986, 4
        %v4161 = vpop.permute.xlu0 %4160
        %4162 = vrot.lane.b32.xlu0 %v3987, 4
        %v4163 = vpop.permute.xlu0 %4162
        %4164 = vrot.lane.b32.xlu0 %v3988, 4
        %v4165 = vpop.permute.xlu0 %4164
        %4166 = vrot.lane.b32.xlu0 %v3989, 4
        %v4167 = vpop.permute.xlu0 %4166
        %4168 = vrot.lane.b32.xlu0 %v3990, 4
        %v4169 = vpop.permute.xlu0 %4168
        %4170 = vrot.lane.b32.xlu0 %v3991, 4
        %v4171 = vpop.permute.xlu0 %4170
        %4172 = vrot.lane.b32.xlu0 %v3992, 4
        %v4173 = vpop.permute.xlu0 %4172
        %4174 = vrot.lane.b32.xlu0 %v3993, 4
        %v4175 = vpop.permute.xlu0 %4174
        %4176 = vrot.lane.b32.xlu0 %v3994, 4
        %v4177 = vpop.permute.xlu0 %4176
        %4178 = vrot.lane.b32.xlu0 %v3995, 4
        %v4179 = vpop.permute.xlu0 %4178
        %4180 = vrot.lane.b32.xlu0 %v3996, 4
        %v4181 = vpop.permute.xlu0 %4180
        %4182 = vrot.lane.b32.xlu0 %v3997, 4
        %v4183 = vpop.permute.xlu0 %4182
        %4184 = vrot.lane.b32.xlu0 %v3998, 4
        %v4185 = vpop.permute.xlu0 %4184
        %4186 = vrot.lane.b32.xlu0 %v3999, 4
        %v4187 = vpop.permute.xlu0 %4186
        %4188 = vrot.lane.b32.xlu0 %v4000, 4
        %v4189 = vpop.permute.xlu0 %4188
        %4190 = vrot.lane.b32.xlu0 %v4001, 4
        %v4191 = vpop.permute.xlu0 %4190
        %4192 = vrot.lane.b32.xlu0 %v4002, 4
        %v4193 = vpop.permute.xlu0 %4192
        %4194 = vrot.lane.b32.xlu0 %v4003, 4
        %v4195 = vpop.permute.xlu0 %4194
        %v4260 = vadd.f32 %v3619, %v4069
        %v4261 = vadd.f32 %v3620, %v4071
        %v4262 = vadd.f32 %v3621, %v4073
        %v4263 = vadd.f32 %v3622, %v4075
        %v4264 = vadd.f32 %v3623, %v4077
        %v4265 = vadd.f32 %v3624, %v4079
        %v4266 = vadd.f32 %v3625, %v4081
        %v4267 = vadd.f32 %v3626, %v4083
        %v4268 = vadd.f32 %v3627, %v4085
        %v4269 = vadd.f32 %v3628, %v4087
        %v4270 = vadd.f32 %v3629, %v4089
        %v4271 = vadd.f32 %v3630, %v4091
        %v4272 = vadd.f32 %v3631, %v4093
        %v4273 = vadd.f32 %v3632, %v4095
        %v4274 = vadd.f32 %v3633, %v4097
        %v4275 = vadd.f32 %v3634, %v4099
        %v4276 = vadd.f32 %v3635, %v4101
        %v4277 = vadd.f32 %v3636, %v4103
        %v4278 = vadd.f32 %v3637, %v4105
        %v4279 = vadd.f32 %v3638, %v4107
        %v4280 = vadd.f32 %v3639, %v4109
        %v4281 = vadd.f32 %v3640, %v4111
        %v4282 = vadd.f32 %v3641, %v4113
        %v4283 = vadd.f32 %v3642, %v4115
        %v4284 = vadd.f32 %v3643, %v4117
        %v4285 = vadd.f32 %v3644, %v4119
        %v4286 = vadd.f32 %v3645, %v4121
        %v4287 = vadd.f32 %v3646, %v4123
        %v4288 = vadd.f32 %v3647, %v4125
        %v4289 = vadd.f32 %v3648, %v4127
        %v4290 = vadd.f32 %v3649, %v4129
        %v4291 = vadd.f32 %v3650, %v4131
        %v4292 = vadd.f32 %v3651, %v4133
        %v4293 = vadd.f32 %v3652, %v4135
        %v4294 = vadd.f32 %v3653, %v4137
        %v4295 = vadd.f32 %v3654, %v4139
        %v4296 = vadd.f32 %v3655, %v4141
        %v4297 = vadd.f32 %v3656, %v4143
        %v4298 = vadd.f32 %v3657, %v4145
        %v4299 = vadd.f32 %v3658, %v4147
        %v4300 = vadd.f32 %v3659, %v4149
        %v4301 = vadd.f32 %v3660, %v4151
        %v4302 = vadd.f32 %v3661, %v4153
        %v4303 = vadd.f32 %v3662, %v4155
        %v4304 = vadd.f32 %v3663, %v4157
        %v4305 = vadd.f32 %v3664, %v4159
        %v4306 = vadd.f32 %v3665, %v4161
        %v4307 = vadd.f32 %v3666, %v4163
        %v4308 = vadd.f32 %v3667, %v4165
        %v4309 = vadd.f32 %v3668, %v4167
        %v4310 = vadd.f32 %v3669, %v4169
        %v4311 = vadd.f32 %v3670, %v4171
        %v4312 = vadd.f32 %v3671, %v4173
        %v4313 = vadd.f32 %v3672, %v4175
        %v4314 = vadd.f32 %v3673, %v4177
        %v4315 = vadd.f32 %v3674, %v4179
        %v4316 = vadd.f32 %v3675, %v4181
        %v4317 = vadd.f32 %v3676, %v4183
        %v4318 = vadd.f32 %v3677, %v4185
        %v4319 = vadd.f32 %v3678, %v4187
        %v4320 = vadd.f32 %v3679, %v4189
        %v4321 = vadd.f32 %v3680, %v4191
        %v4322 = vadd.f32 %v3681, %v4193
        %v4323 = vadd.f32 %v3682, %v4195
        %4388 = vrot.lane.b32.xlu0 %v4260, 124
        %v4389 = vpop.permute.xlu0 %4388
        %4390 = vrot.lane.b32.xlu0 %v4261, 124
        %v4391 = vpop.permute.xlu0 %4390
        %4392 = vrot.lane.b32.xlu0 %v4262, 124
        %v4393 = vpop.permute.xlu0 %4392
        %4394 = vrot.lane.b32.xlu0 %v4263, 124
        %v4395 = vpop.permute.xlu0 %4394
        %4396 = vrot.lane.b32.xlu0 %v4264, 124
        %v4397 = vpop.permute.xlu0 %4396
        %4398 = vrot.lane.b32.xlu0 %v4265, 124
        %v4399 = vpop.permute.xlu0 %4398
        %4400 = vrot.lane.b32.xlu0 %v4266, 124
        %v4401 = vpop.permute.xlu0 %4400
        %4402 = vrot.lane.b32.xlu0 %v4267, 124
        %v4403 = vpop.permute.xlu0 %4402
        %4404 = vrot.lane.b32.xlu0 %v4268, 124
        %v4405 = vpop.permute.xlu0 %4404
        %4406 = vrot.lane.b32.xlu0 %v4269, 124
        %v4407 = vpop.permute.xlu0 %4406
        %4408 = vrot.lane.b32.xlu0 %v4270, 124
        %v4409 = vpop.permute.xlu0 %4408
        %4410 = vrot.lane.b32.xlu0 %v4271, 124
        %v4411 = vpop.permute.xlu0 %4410
        %4412 = vrot.lane.b32.xlu0 %v4272, 124
        %v4413 = vpop.permute.xlu0 %4412
        %4414 = vrot.lane.b32.xlu0 %v4273, 124
        %v4415 = vpop.permute.xlu0 %4414
        %4416 = vrot.lane.b32.xlu0 %v4274, 124
        %v4417 = vpop.permute.xlu0 %4416
        %4418 = vrot.lane.b32.xlu0 %v4275, 124
        %v4419 = vpop.permute.xlu0 %4418
        %4420 = vrot.lane.b32.xlu0 %v4276, 124
        %v4421 = vpop.permute.xlu0 %4420
        %4422 = vrot.lane.b32.xlu0 %v4277, 124
        %v4423 = vpop.permute.xlu0 %4422
        %4424 = vrot.lane.b32.xlu0 %v4278, 124
        %v4425 = vpop.permute.xlu0 %4424
        %4426 = vrot.lane.b32.xlu0 %v4279, 124
        %v4427 = vpop.permute.xlu0 %4426
        %4428 = vrot.lane.b32.xlu0 %v4280, 124
        %v4429 = vpop.permute.xlu0 %4428
        %4430 = vrot.lane.b32.xlu0 %v4281, 124
        %v4431 = vpop.permute.xlu0 %4430
        %4432 = vrot.lane.b32.xlu0 %v4282, 124
        %v4433 = vpop.permute.xlu0 %4432
        %4434 = vrot.lane.b32.xlu0 %v4283, 124
        %v4435 = vpop.permute.xlu0 %4434
        %4436 = vrot.lane.b32.xlu0 %v4284, 124
        %v4437 = vpop.permute.xlu0 %4436
        %4438 = vrot.lane.b32.xlu0 %v4285, 124
        %v4439 = vpop.permute.xlu0 %4438
        %4440 = vrot.lane.b32.xlu0 %v4286, 124
        %v4441 = vpop.permute.xlu0 %4440
        %4442 = vrot.lane.b32.xlu0 %v4287, 124
        %v4443 = vpop.permute.xlu0 %4442
        %4444 = vrot.lane.b32.xlu0 %v4288, 124
        %v4445 = vpop.permute.xlu0 %4444
        %4446 = vrot.lane.b32.xlu0 %v4289, 124
        %v4447 = vpop.permute.xlu0 %4446
        %4448 = vrot.lane.b32.xlu0 %v4290, 124
        %v4449 = vpop.permute.xlu0 %4448
        %4450 = vrot.lane.b32.xlu0 %v4291, 124
        %v4451 = vpop.permute.xlu0 %4450
        %4452 = vrot.lane.b32.xlu0 %v4292, 124
        %v4453 = vpop.permute.xlu0 %4452
        %4454 = vrot.lane.b32.xlu0 %v4293, 124
        %v4455 = vpop.permute.xlu0 %4454
        %4456 = vrot.lane.b32.xlu0 %v4294, 124
        %v4457 = vpop.permute.xlu0 %4456
        %4458 = vrot.lane.b32.xlu0 %v4295, 124
        %v4459 = vpop.permute.xlu0 %4458
        %4460 = vrot.lane.b32.xlu0 %v4296, 124
        %v4461 = vpop.permute.xlu0 %4460
        %4462 = vrot.lane.b32.xlu0 %v4297, 124
        %v4463 = vpop.permute.xlu0 %4462
        %4464 = vrot.lane.b32.xlu0 %v4298, 124
        %v4465 = vpop.permute.xlu0 %4464
        %4466 = vrot.lane.b32.xlu0 %v4299, 124
        %v4467 = vpop.permute.xlu0 %4466
        %4468 = vrot.lane.b32.xlu0 %v4300, 124
        %v4469 = vpop.permute.xlu0 %4468
        %4470 = vrot.lane.b32.xlu0 %v4301, 124
        %v4471 = vpop.permute.xlu0 %4470
        %4472 = vrot.lane.b32.xlu0 %v4302, 124
        %v4473 = vpop.permute.xlu0 %4472
        %4474 = vrot.lane.b32.xlu0 %v4303, 124
        %v4475 = vpop.permute.xlu0 %4474
        %4476 = vrot.lane.b32.xlu0 %v4304, 124
        %v4477 = vpop.permute.xlu0 %4476
        %4478 = vrot.lane.b32.xlu0 %v4305, 124
        %v4479 = vpop.permute.xlu0 %4478
        %4480 = vrot.lane.b32.xlu0 %v4306, 124
        %v4481 = vpop.permute.xlu0 %4480
        %4482 = vrot.lane.b32.xlu0 %v4307, 124
        %v4483 = vpop.permute.xlu0 %4482
        %4484 = vrot.lane.b32.xlu0 %v4308, 124
        %v4485 = vpop.permute.xlu0 %4484
        %4486 = vrot.lane.b32.xlu0 %v4309, 124
        %v4487 = vpop.permute.xlu0 %4486
        %4488 = vrot.lane.b32.xlu0 %v4310, 124
        %v4489 = vpop.permute.xlu0 %4488
        %4490 = vrot.lane.b32.xlu0 %v4311, 124
        %v4491 = vpop.permute.xlu0 %4490
        %4492 = vrot.lane.b32.xlu0 %v4312, 124
        %v4493 = vpop.permute.xlu0 %4492
        %4494 = vrot.lane.b32.xlu0 %v4313, 124
        %v4495 = vpop.permute.xlu0 %4494
        %4496 = vrot.lane.b32.xlu0 %v4314, 124
        %v4497 = vpop.permute.xlu0 %4496
        %4498 = vrot.lane.b32.xlu0 %v4315, 124
        %v4499 = vpop.permute.xlu0 %4498
        %4500 = vrot.lane.b32.xlu0 %v4316, 124
        %v4501 = vpop.permute.xlu0 %4500
        %4502 = vrot.lane.b32.xlu0 %v4317, 124
        %v4503 = vpop.permute.xlu0 %4502
        %4504 = vrot.lane.b32.xlu0 %v4318, 124
        %v4505 = vpop.permute.xlu0 %4504
        %4506 = vrot.lane.b32.xlu0 %v4319, 124
        %v4507 = vpop.permute.xlu0 %4506
        %4508 = vrot.lane.b32.xlu0 %v4320, 124
        %v4509 = vpop.permute.xlu0 %4508
        %4510 = vrot.lane.b32.xlu0 %v4321, 124
        %v4511 = vpop.permute.xlu0 %4510
        %4512 = vrot.lane.b32.xlu0 %v4322, 124
        %v4513 = vpop.permute.xlu0 %4512
        %4514 = vrot.lane.b32.xlu0 %v4323, 124
        %v4515 = vpop.permute.xlu0 %4514
        %v4580 = vadd.f32 %v3299, %v4389
        %v4581 = vadd.f32 %v3300, %v4391
        %v4582 = vadd.f32 %v3301, %v4393
        %v4583 = vadd.f32 %v3302, %v4395
        %v4584 = vadd.f32 %v3303, %v4397
        %v4585 = vadd.f32 %v3304, %v4399
        %v4586 = vadd.f32 %v3305, %v4401
        %v4587 = vadd.f32 %v3306, %v4403
        %v4588 = vadd.f32 %v3307, %v4405
        %v4589 = vadd.f32 %v3308, %v4407
        %v4590 = vadd.f32 %v3309, %v4409
        %v4591 = vadd.f32 %v3310, %v4411
        %v4592 = vadd.f32 %v3311, %v4413
        %v4593 = vadd.f32 %v3312, %v4415
        %v4594 = vadd.f32 %v3313, %v4417
        %v4595 = vadd.f32 %v3314, %v4419
        %v4596 = vadd.f32 %v3315, %v4421
        %v4597 = vadd.f32 %v3316, %v4423
        %v4598 = vadd.f32 %v3317, %v4425
        %v4599 = vadd.f32 %v3318, %v4427
        %v4600 = vadd.f32 %v3319, %v4429
        %v4601 = vadd.f32 %v3320, %v4431
        %v4602 = vadd.f32 %v3321, %v4433
        %v4603 = vadd.f32 %v3322, %v4435
        %v4604 = vadd.f32 %v3323, %v4437
        %v4605 = vadd.f32 %v3324, %v4439
        %v4606 = vadd.f32 %v3325, %v4441
        %v4607 = vadd.f32 %v3326, %v4443
        %v4608 = vadd.f32 %v3327, %v4445
        %v4609 = vadd.f32 %v3328, %v4447
        %v4610 = vadd.f32 %v3329, %v4449
        %v4611 = vadd.f32 %v3330, %v4451
        %v4612 = vadd.f32 %v3331, %v4453
        %v4613 = vadd.f32 %v3332, %v4455
        %v4614 = vadd.f32 %v3333, %v4457
        %v4615 = vadd.f32 %v3334, %v4459
        %v4616 = vadd.f32 %v3335, %v4461
        %v4617 = vadd.f32 %v3336, %v4463
        %v4618 = vadd.f32 %v3337, %v4465
        %v4619 = vadd.f32 %v3338, %v4467
        %v4620 = vadd.f32 %v3339, %v4469
        %v4621 = vadd.f32 %v3340, %v4471
        %v4622 = vadd.f32 %v3341, %v4473
        %v4623 = vadd.f32 %v3342, %v4475
        %v4624 = vadd.f32 %v3343, %v4477
        %v4625 = vadd.f32 %v3344, %v4479
        %v4626 = vadd.f32 %v3345, %v4481
        %v4627 = vadd.f32 %v3346, %v4483
        %v4628 = vadd.f32 %v3347, %v4485
        %v4629 = vadd.f32 %v3348, %v4487
        %v4630 = vadd.f32 %v3349, %v4489
        %v4631 = vadd.f32 %v3350, %v4491
        %v4632 = vadd.f32 %v3351, %v4493
        %v4633 = vadd.f32 %v3352, %v4495
        %v4634 = vadd.f32 %v3353, %v4497
        %v4635 = vadd.f32 %v3354, %v4499
        %v4636 = vadd.f32 %v3355, %v4501
        %v4637 = vadd.f32 %v3356, %v4503
        %v4638 = vadd.f32 %v3357, %v4505
        %v4639 = vadd.f32 %v3358, %v4507
        %v4640 = vadd.f32 %v3359, %v4509
        %v4641 = vadd.f32 %v3360, %v4511
        %v4642 = vadd.f32 %v3361, %v4513
        %v4643 = vadd.f32 %v3362, %v4515
        %vm4644 = vcmask 31744
        %4645 = vst.msk [vmem:[%s420] sm:$0xff] %vm4644, %v4580
        %4646 = vst.msk [vmem:[%s420 + $0x8] sm:$0xff] %vm4644, %v4581
        %4647 = vst.msk [vmem:[%s420 + $0x10] sm:$0xff] %vm4644, %v4582
        %4648 = vst.msk [vmem:[%s420 + $0x18] sm:$0xff] %vm4644, %v4583
        %4649 = vst.msk [vmem:[%s420 + $0x20] sm:$0xff] %vm4644, %v4584
        %4650 = vst.msk [vmem:[%s420 + $0x28] sm:$0xff] %vm4644, %v4585
        %4651 = vst.msk [vmem:[%s420 + $0x30] sm:$0xff] %vm4644, %v4586
        %4652 = vst.msk [vmem:[%s420 + $0x38] sm:$0xff] %vm4644, %v4587
        %4653 = vst.msk [vmem:[%s420 + $0x40] sm:$0xff] %vm4644, %v4588
        %4654 = vst.msk [vmem:[%s420 + $0x48] sm:$0xff] %vm4644, %v4589
        %4655 = vst.msk [vmem:[%s420 + $0x50] sm:$0xff] %vm4644, %v4590
        %4656 = vst.msk [vmem:[%s420 + $0x58] sm:$0xff] %vm4644, %v4591
        %4657 = vst.msk [vmem:[%s420 + $0x60] sm:$0xff] %vm4644, %v4592
        %4658 = vst.msk [vmem:[%s420 + $0x68] sm:$0xff] %vm4644, %v4593
        %4659 = vst.msk [vmem:[%s420 + $0x70] sm:$0xff] %vm4644, %v4594
        %4660 = vst.msk [vmem:[%s420 + $0x78] sm:$0xff] %vm4644, %v4595
        %4661 = vst.msk [vmem:[%s420 + $0x80] sm:$0xff] %vm4644, %v4596
        %4662 = vst.msk [vmem:[%s420 + $0x88] sm:$0xff] %vm4644, %v4597
        %4663 = vst.msk [vmem:[%s420 + $0x90] sm:$0xff] %vm4644, %v4598
        %4664 = vst.msk [vmem:[%s420 + $0x98] sm:$0xff] %vm4644, %v4599
        %4665 = vst.msk [vmem:[%s420 + $0xa0] sm:$0xff] %vm4644, %v4600
        %4666 = vst.msk [vmem:[%s420 + $0xa8] sm:$0xff] %vm4644, %v4601
        %4667 = vst.msk [vmem:[%s420 + $0xb0] sm:$0xff] %vm4644, %v4602
        %4668 = vst.msk [vmem:[%s420 + $0xb8] sm:$0xff] %vm4644, %v4603
        %4669 = vst.msk [vmem:[%s420 + $0xc0] sm:$0xff] %vm4644, %v4604
        %4670 = vst.msk [vmem:[%s420 + $0xc8] sm:$0xff] %vm4644, %v4605
        %4671 = vst.msk [vmem:[%s420 + $0xd0] sm:$0xff] %vm4644, %v4606
        %4672 = vst.msk [vmem:[%s420 + $0xd8] sm:$0xff] %vm4644, %v4607
        %4673 = vst.msk [vmem:[%s420 + $0xe0] sm:$0xff] %vm4644, %v4608
        %4674 = vst.msk [vmem:[%s420 + $0xe8] sm:$0xff] %vm4644, %v4609
        %4675 = vst.msk [vmem:[%s420 + $0xf0] sm:$0xff] %vm4644, %v4610
        %4676 = vst.msk [vmem:[%s420 + $0xf8] sm:$0xff] %vm4644, %v4611
        %4677 = vst.msk [vmem:[%s420 + $0x100] sm:$0xff] %vm4644, %v4612
        %4678 = vst.msk [vmem:[%s420 + $0x108] sm:$0xff] %vm4644, %v4613
        %4679 = vst.msk [vmem:[%s420 + $0x110] sm:$0xff] %vm4644, %v4614
        %4680 = vst.msk [vmem:[%s420 + $0x118] sm:$0xff] %vm4644, %v4615
        %4681 = vst.msk [vmem:[%s420 + $0x120] sm:$0xff] %vm4644, %v4616
        %4682 = vst.msk [vmem:[%s420 + $0x128] sm:$0xff] %vm4644, %v4617
        %4683 = vst.msk [vmem:[%s420 + $0x130] sm:$0xff] %vm4644, %v4618
        %4684 = vst.msk [vmem:[%s420 + $0x138] sm:$0xff] %vm4644, %v4619
        %4685 = vst.msk [vmem:[%s420 + $0x140] sm:$0xff] %vm4644, %v4620
        %4686 = vst.msk [vmem:[%s420 + $0x148] sm:$0xff] %vm4644, %v4621
        %4687 = vst.msk [vmem:[%s420 + $0x150] sm:$0xff] %vm4644, %v4622
        %4688 = vst.msk [vmem:[%s420 + $0x158] sm:$0xff] %vm4644, %v4623
        %4689 = vst.msk [vmem:[%s420 + $0x160] sm:$0xff] %vm4644, %v4624
        %4690 = vst.msk [vmem:[%s420 + $0x168] sm:$0xff] %vm4644, %v4625
        %4691 = vst.msk [vmem:[%s420 + $0x170] sm:$0xff] %vm4644, %v4626
        %4692 = vst.msk [vmem:[%s420 + $0x178] sm:$0xff] %vm4644, %v4627
        %4693 = vst.msk [vmem:[%s420 + $0x180] sm:$0xff] %vm4644, %v4628
        %4694 = vst.msk [vmem:[%s420 + $0x188] sm:$0xff] %vm4644, %v4629
        %4695 = vst.msk [vmem:[%s420 + $0x190] sm:$0xff] %vm4644, %v4630
        %4696 = vst.msk [vmem:[%s420 + $0x198] sm:$0xff] %vm4644, %v4631
        %4697 = vst.msk [vmem:[%s420 + $0x1a0] sm:$0xff] %vm4644, %v4632
        %4698 = vst.msk [vmem:[%s420 + $0x1a8] sm:$0xff] %vm4644, %v4633
        %4699 = vst.msk [vmem:[%s420 + $0x1b0] sm:$0xff] %vm4644, %v4634
        %4700 = vst.msk [vmem:[%s420 + $0x1b8] sm:$0xff] %vm4644, %v4635
        %4701 = vst.msk [vmem:[%s420 + $0x1c0] sm:$0xff] %vm4644, %v4636
        %4702 = vst.msk [vmem:[%s420 + $0x1c8] sm:$0xff] %vm4644, %v4637
        %4703 = vst.msk [vmem:[%s420 + $0x1d0] sm:$0xff] %vm4644, %v4638
        %4704 = vst.msk [vmem:[%s420 + $0x1d8] sm:$0xff] %vm4644, %v4639
        %4705 = vst.msk [vmem:[%s420 + $0x1e0] sm:$0xff] %vm4644, %v4640
        %4706 = vst.msk [vmem:[%s420 + $0x1e8] sm:$0xff] %vm4644, %v4641
        %4707 = vst.msk [vmem:[%s420 + $0x1f0] sm:$0xff] %vm4644, %v4642
        %4708 = vst.msk [vmem:[%s420 + $0x1f8] sm:$0xff] %vm4644, %v4643
      $region44: #{tpu_custom_call.1} parent=35 // pred_fallthru
        _
      %s4709 = sadd.s32 %s26, %s28
      %s4710 = sld [smem:[#allocation3 + %s4709]]
      %s4711 = smul.u32 64, %s4710
      %p4712 = scmp.lt.s32.totalorder %s27, 1
      %s4713 = scalar_select %p4712, %s27, 1
      %p4714 = scmp.lt.s32.totalorder %s4711, 63
      %s4715 = scalar_select %p4714, %s4711, 63
      %s4716 = smul.addr %s4713, 64
      %s4717 = sadd.s32 %s4715, %s4716
      %s4718 = smul.addr %s4717, 8
      %s4719 = scalar_lea.vmem %s7, %s4718
      // Predicated region
      $region45: #{tpu_custom_call.1} parent=35 // pred_check
        %p4720 = pneg %p192
      $region46: #{tpu_custom_call.1} parent=35 // pred_check_branch
        %4722 = sbr.rel (%p4720) target = $region48
      $region47: #{tpu_custom_call.1} parent=35 // pred_region
        %s4723 = sadd.s32 %s26, %s28
        %s4724 = sld [smem:[#allocation3 + %s4723]]
        %s4725 = smul.u32 64, %s4724
      $region48: #{tpu_custom_call.1} parent=35 // pred_fallthru
        _
    $region36: #{tpu_custom_call.1} parent=5 // pred_fallthru
      _
    %p4726 = scmp.le.s32.totalorder 2, %s16
    // Predicated region
    $region49: #{tpu_custom_call.1} parent=5 // pred_check
      %p4727 = pneg %p4726
    $region50: #{tpu_custom_call.1} parent=5 // pred_check_branch
      %4729 = sbr.rel (%p4727) target = $region52
    $region51: #{tpu_custom_call.1} parent=5 // pred_region
      %s4730 = ssub.s32 %s16, 2
      // Predicated region
      $region53: #{tpu_custom_call.1} parent=51 // pred_check
        %p4731 = pneg %p198
      $region54: #{tpu_custom_call.1} parent=51 // pred_check_branch
        %4733 = sbr.rel (%p4731) target = $region56
      $region55: #{tpu_custom_call.1} parent=51 // pred_region
        %s4734 = sadd.s32 %s29, %s31
        %s4735 = sld [smem:[#allocation3 + %s4734]]
        %s4736 = smul.u32 64, %s4735
        %p4737 = scmp.lt.s32.totalorder %s30, 1
        %s4738 = scalar_select %p4737, %s30, 1
        %p4739 = scmp.lt.s32.totalorder %s4736, 63
        %s4740 = scalar_select %p4739, %s4736, 63
        %s4741 = smul.addr %s4738, 64
        %s4742 = sadd.s32 %s4740, %s4741
        %s4743 = smul.addr %s4742, 8
        %s4744 = scalar_lea.vmem %s7, %s4743
      $region56: #{tpu_custom_call.1} parent=51 // pred_fallthru
        _
    $region52: #{tpu_custom_call.1} parent=5 // pred_fallthru
      _
  $region6: #{tpu_custom_call.1} parent=0 // loop_footer
    %s20 = sadd.s32 1, %s16
  $region7: #{tpu_custom_call.1} parent=0 // loop_footer_branch
    %15 = sbr.rel target = $region3
  $region8: #{tpu_custom_call.1} parent=0 // loop_exit
    _

</llo_original>
